<compile_context>
chip_gen: v7x
topology: tpu7x:2x2x1
jax: 0.10.0
libtpu: 0.0.40
codegen_flags: <defaults>
</compile_context>

<pallas_src>
import functools

import numpy as np

import jax
import jax.numpy as jnp
from jax.experimental import pallas as pl
from jax.experimental.pallas import tpu as pltpu

_VMEM_LIMIT = 32 * 1024 * 1024   # working set is ~3 MiB; safe on v5e/v6e/v7x


# ----------------------------------------------------------------------------
# Fused kernel: conv1 -> conv2 -> conv3 -> conv4 -> classifier, one batch block
# per grid step.  All shapes below follow the 28x28 trace in the header.
# ----------------------------------------------------------------------------
def _mnist_fused_kernel(x_ref,
                        w1a, w1b, b1,
                        w2a, w2b, b2,
                        w3a, w3b, b3,
                        w4a, w4b, b4,
                        l1w, l1b, l2w, l2b, l3w, l3b,
                        o_ref, *, bb):
    f32, bf16 = jnp.float32, jnp.bfloat16

    def sel_mats(ho, hp):
        # Exact 0/1 row-subsampling matrices: R0 picks rows 0,2,4,...  and
        # R1 picks rows 1,3,5,... of a [hp, :] operand (stride-2 in H).
        r = jax.lax.broadcasted_iota(jnp.int32, (ho, hp), 0)
        c = jax.lax.broadcasted_iota(jnp.int32, (ho, hp), 1)
        r0 = jnp.where(c == 2 * r, 1.0, 0.0).astype(bf16)
        r1 = jnp.where(c == 2 * r + 1, 1.0, 0.0).astype(bf16)
        return r0, r1

    r2_even, r2_odd = sel_mats(15, 31)   # conv2 (stride 2)
    r4_even, r4_odd = sel_mats(9, 18)    # conv4 (stride 2)

    def pad_hw(y, c_next):
        # Zero-pad one spatial row top/bottom and one spatial column
        # (= c_next lanes) left/right, in the [H, W*C] layout.  f32 in/out.
        h, wl = y.shape
        zc = jnp.zeros((h, c_next), f32)
        y = jnp.concatenate([zc, y, zc], axis=1)
        zr = jnp.zeros((1, wl + 2 * c_next), f32)
        return jnp.concatenate([zr, y, zr], axis=0)

    def conv_s1(a0, a1, wa, wb, b):
        # a0/a1: bf16 [Ho, Wp*Cin];  wa/wb: bf16 [Wp*Cin, Wo*Cout] refs.
        y = (jnp.dot(a0, wa[...], preferred_element_type=f32)
             + jnp.dot(a1, wb[...], preferred_element_type=f32))
        return jnp.maximum(y + b[...], 0.0)          # f32 epilogue

    def conv_s2(xpad, r_even, r_odd, wa, wb, b):
        # Stride-2: select even / odd padded rows with an exact 0/1 matmul.
        a0 = jnp.dot(r_even, xpad, preferred_element_type=f32).astype(bf16)
        a1 = jnp.dot(r_odd, xpad, preferred_element_type=f32).astype(bf16)
        return conv_s1(a0, a1, wa, wb, b)

    feats = []
    for n in range(bb):                              # static unroll over block
        x0 = x_ref[n]                                # [30, 30*Cin] bf16 (padded)
        # conv1: stride 1                            -> [29, 29*8 = 232]
        y1 = conv_s1(x0[0:29, :], x0[1:30, :], w1a, w1b, b1)
        xp2 = pad_hw(y1, 8).astype(bf16)             # [31, 248]
        # conv2: stride 2                            -> [15, 15*16 = 240]
        y2 = conv_s2(xp2, r2_even, r2_odd, w2a, w2b, b2)
        xp3 = pad_hw(y2, 16).astype(bf16)            # [17, 272]
        # conv3: stride 1                            -> [16, 16*20 = 320]
        y3 = conv_s1(xp3[0:16, :], xp3[1:17, :], w3a, w3b, b3)
        xp4 = pad_hw(y3, 20).astype(bf16)            # [18, 360]
        # conv4: stride 2                            -> [9, 9*24 = 216]
        y4 = conv_s2(xp4, r4_even, r4_odd, w4a, w4b, b4)
        # NHWC flatten (h-major, then w, then c) as a single lane-concat row.
        feats.append(jnp.concatenate([y4[h:h + 1, :] for h in range(9)], axis=1))

    flat = feats[0] if bb == 1 else jnp.concatenate(feats, axis=0)   # [bb, 1944]

    # Classifier (Dropout = identity at inference time).
    h = jnp.dot(flat.astype(bf16), l1w[...], preferred_element_type=f32)
    h = jnp.maximum(h + l1b[...], 0.0)               # [bb, 256]
    h = jnp.dot(h.astype(bf16), l2w[...], preferred_element_type=f32)
    h = jnp.maximum(h + l2b[...], 0.0)               # [bb, 128] (64 real)
    h = jnp.dot(h.astype(bf16), l3w[...], preferred_element_type=f32)
    o_ref[0] = (h + l3b[...]).astype(o_ref.dtype)    # [bb, 128] (10 real)


def _fused_forward(xp, q, bb, nb):
    """xp: [nb*bb, 30, 30*Cin] bf16 (pre-padded NHWC in [H, W*C] layout)."""
    wpc = xp.shape[-1]
    weights = [q["w1a"], q["w1b"], q["b1"],
               q["w2a"], q["w2b"], q["b2"],
               q["w3a"], q["w3b"], q["b3"],
               q["w4a"], q["w4b"], q["b4"],
               q["l1w"], q["l1b"], q["l2w"], q["l2b"], q["l3w"], q["l3b"]]

    def const_spec(a):
        return pl.BlockSpec(a.shape, lambda i: (0,) * a.ndim)

    per_img_flops = 2 * (2 * 29 * wpc * 232 + 2 * 15 * 31 * 248
                         + 2 * 15 * 248 * 240 + 2 * 16 * 272 * 320
                         + 2 * 9 * 18 * 360 + 2 * 9 * 360 * 216
                         + 1944 * 256 + 256 * 128 + 128 * 128)
    cost = pl.CostEstimate(
        flops=per_img_flops * nb * bb,
        transcendentals=0,
        bytes_accessed=(xp.size * xp.dtype.itemsize
                        + sum(w.size * w.dtype.itemsize for w in weights)
                        + nb * bb * 128 * 4))

    out = pl.pallas_call(
        functools.partial(_mnist_fused_kernel, bb=bb),
        out_shape=jax.ShapeDtypeStruct((nb, bb, 128), jnp.float32),
        grid=(nb,),
        in_specs=[pl.BlockSpec((bb,) + xp.shape[1:], lambda i: (i, 0, 0))]
                 + [const_spec(w) for w in weights],
        out_specs=pl.BlockSpec((1, bb, 128), lambda i: (i, 0, 0)),
        compiler_params=pltpu.CompilerParams(
            dimension_semantics=("parallel",),
            vmem_limit_bytes=_VMEM_LIMIT),
        cost_estimate=cost,
    )(xp, *weights)
    return out.reshape(nb * bb, 128)


@functools.partial(jax.jit, static_argnames=("block_batch",))
def mnist_net_forward(x_nchw, q, block_batch=8):
    B, C, H, W = x_nchw.shape
    assert H == 28 and W == 28, "MnistNet requires 28x28 inputs (Linear(24*9*9,...))"
    # One-time XLA preprocessing: NCHW -> NHWC, zero-pad spatial by 1, flatten
    # to the kernel's [H, W*C] per-image layout, cast to bf16.
    x = jnp.transpose(x_nchw, (0, 2, 3, 1))
    x = jnp.pad(x, ((0, 0), (1, 1), (1, 1), (0, 0)))
    x = x.reshape(B, H + 2, (W + 2) * C).astype(jnp.bfloat16)

    # Batch blocking: keep grid length >= 2 (both v7x TensorCores busy).
    bb = max(1, min(block_batch, B // 2)) if B >= 2 else 1
    nb = pl.cdiv(B, bb)
    bp = nb * bb
    if bp != B:
        x = jnp.pad(x, ((0, bp - B), (0, 0), (0, 0)))

    out = _fused_forward(x, q, bb, nb)
    return out[:B, :10]                               # strip batch/lane padding


# ----------------------------------------------------------------------------
# Parameters: init in torch layouts, then one-time repack into kernel layouts.
# ----------------------------------------------------------------------------
def init_params(key, in_channels=3):
    """Torch layouts: conv w [Cout,Cin,kh,kw]; linear w stored as [in,out]
    (transposed torch weight), l1w rows in torch NCHW-flatten order."""
    def uni(k, shape, fan_in):
        bound = 1.0 / jnp.sqrt(float(fan_in))
        return jax.random.uniform(k, shape, jnp.float32, -bound, bound)

    ks = jax.random.split(key, 14)
    p = {}
    p["c1w"] = uni(ks[0], (8, in_channels, 2, 2), in_channels * 4)
    p["c1b"] = uni(ks[1], (8,), in_channels * 4)
    p["c2w"] = uni(ks[2], (16, 8, 2, 2), 8 * 4)
    p["c2b"] = uni(ks[3], (16,), 8 * 4)
    p["c3w"] = uni(ks[4], (20, 16, 2, 2), 16 * 4)
    p["c3b"] = uni(ks[5], (20,), 16 * 4)
    p["c4w"] = uni(ks[6], (24, 20, 2, 2), 20 * 4)
    p["c4b"] = uni(ks[7], (24,), 20 * 4)
    p["l1w"] = uni(ks[8], (24 * 9 * 9, 256), 24 * 9 * 9)
    p["l1b"] = uni(ks[9], (256,), 24 * 9 * 9)
    p["l2w"] = uni(ks[10], (256, 64), 256)
    p["l2b"] = uni(ks[11], (64,), 256)
    p["l3w"] = uni(ks[12], (64, 10), 64)
    p["l3b"] = uni(ks[13], (10,), 64)
    return p


def prepare_params(p):
    """One-time repack: each conv -> two block-structured row matrices W_0/W_1
    (strides + kernel columns folded in), tiled biases, bf16 weights, small
    classifier dims padded to 128 lanes, l1 rows permuted to NHWC order."""
    f32, bf16 = jnp.float32, jnp.bfloat16

    def conv_rowmm(w, bvec, win, stride):
        w = np.asarray(w, np.float32)              # [Cout, Cin, 2, 2]
        bvec = np.asarray(bvec, np.float32)
        cout, cin = w.shape[0], w.shape[1]
        wp = win + 2                               # padding=1 on both sides
        wo = (wp - 2) // stride + 1
        mats = []
        for i in range(2):                         # kernel row
            wi = np.zeros((wp * cin, wo * cout), np.float32)
            for ow in range(wo):
                for j in range(2):                 # kernel col
                    r0 = (ow * stride + j) * cin
                    wi[r0:r0 + cin, ow * cout:(ow + 1) * cout] = w[:, :, i, j].T
            mats.append(jnp.asarray(wi, dtype=bf16))
        bt = jnp.asarray(np.tile(bvec, wo).reshape(1, wo * cout), dtype=f32)
        return mats[0], mats[1], bt

    q = {}
    q["w1a"], q["w1b"], q["b1"] = conv_rowmm(p["c1w"], p["c1b"], 28, 1)
    q["w2a"], q["w2b"], q["b2"] = conv_rowmm(p["c2w"], p["c2b"], 29, 2)
    q["w3a"], q["w3b"], q["b3"] = conv_rowmm(p["c3w"], p["c3b"], 15, 1)
    q["w4a"], q["w4b"], q["b4"] = conv_rowmm(p["c4w"], p["c4b"], 16, 2)

    # l1: permute rows from torch NCHW flatten (c*81+h*9+w) to NHWC (h*216+w*24+c)
    l1 = jnp.transpose(p["l1w"].reshape(24, 9, 9, 256), (1, 2, 0, 3))
    q["l1w"] = l1.reshape(24 * 9 * 9, 256).astype(bf16)
    q["l1b"] = p["l1b"].astype(f32).reshape(1, 256)
    q["l2w"] = jnp.pad(p["l2w"], ((0, 0), (0, 64))).astype(bf16)      # [256,128]
    q["l2b"] = jnp.pad(p["l2b"], (0, 64)).astype(f32).reshape(1, 128)
    q["l3w"] = jnp.pad(p["l3w"], ((0, 64), (0, 118))).astype(bf16)    # [128,128]
    q["l3b"] = jnp.pad(p["l3b"], (0, 118)).astype(f32).reshape(1, 128)
    return q


# ----------------------------------------------------------------------------
# Pure-JAX f32 reference (inference mode) for self-validation.
# ----------------------------------------------------------------------------
def reference_forward(x_nchw, p):
    x = jnp.transpose(x_nchw, (0, 2, 3, 1)).astype(jnp.float32)      # NHWC

    def conv(x, w, b, stride):
        w_hwio = jnp.transpose(w, (2, 3, 1, 0)).astype(jnp.float32)
        y = jax.lax.conv_general_dilated(
            x, w_hwio, window_strides=(stride, stride),
            padding=((1, 1), (1, 1)),
            dimension_numbers=("NHWC", "HWIO", "NHWC"))
        return jnp.maximum(y + b, 0.0)

    x = conv(x, p["c1w"], p["c1b"], 1)
    x = conv(x, p["c2w"], p["c2b"], 2)
    x = conv(x, p["c3w"], p["c3b"], 1)
    x = conv(x, p["c4w"], p["c4b"], 2)
    x = jnp.transpose(x, (0, 3, 1, 2)).reshape(x.shape[0], -1)       # NCHW flatten
    h = jnp.maximum(x @ p["l1w"] + p["l1b"], 0.0)
    h = jnp.maximum(h @ p["l2w"] + p["l2b"], 0.0)
    return h @ p["l3w"] + p["l3b"]


if __name__ == "__main__":
    key = jax.random.PRNGKey(0)
    kx, kp = jax.random.split(key)
    # batch=2, in_channels=3, spatial 28x28 (required by Linear(24*9*9, 256))
    x = jax.random.normal(kx, (2, 3, 28, 28), dtype=jnp.float32)
    params = init_params(kp, in_channels=3)
    prepared = prepare_params(params)

    out = mnist_net_forward(x, prepared)
    out = jax.block_until_ready(out)
    assert out.shape == (2, 10), out.shape
    assert out.dtype == jnp.float32, out.dtype

    ref = jax.block_until_ready(reference_forward(x, params))
    assert jnp.allclose(out, ref, atol=3e-2, rtol=3e-2), (
        "max abs err", float(jnp.max(jnp.abs(out - ref))))

    print("KERNEL_OK")
</pallas_src>

<mosaic_0001>
module attributes {stable_mosaic.version = 11 : i64} {
  func.func @_mnist_fused_kernel(%arg0: i32, %arg1: memref<1x30x90xbf16, #tpu.memory_space<vmem>>, %arg2: memref<90x232xbf16, #tpu.memory_space<vmem>>, %arg3: memref<90x232xbf16, #tpu.memory_space<vmem>>, %arg4: memref<1x232xf32, #tpu.memory_space<vmem>>, %arg5: memref<248x240xbf16, #tpu.memory_space<vmem>>, %arg6: memref<248x240xbf16, #tpu.memory_space<vmem>>, %arg7: memref<1x240xf32, #tpu.memory_space<vmem>>, %arg8: memref<272x320xbf16, #tpu.memory_space<vmem>>, %arg9: memref<272x320xbf16, #tpu.memory_space<vmem>>, %arg10: memref<1x320xf32, #tpu.memory_space<vmem>>, %arg11: memref<360x216xbf16, #tpu.memory_space<vmem>>, %arg12: memref<360x216xbf16, #tpu.memory_space<vmem>>, %arg13: memref<1x216xf32, #tpu.memory_space<vmem>>, %arg14: memref<1944x256xbf16, #tpu.memory_space<vmem>>, %arg15: memref<1x256xf32, #tpu.memory_space<vmem>>, %arg16: memref<256x128xbf16, #tpu.memory_space<vmem>>, %arg17: memref<1x128xf32, #tpu.memory_space<vmem>>, %arg18: memref<128x128xbf16, #tpu.memory_space<vmem>>, %arg19: memref<1x128xf32, #tpu.memory_space<vmem>>, %arg20: memref<1x1x128xf32, #tpu.memory_space<vmem>>) attributes {dimension_semantics = [#tpu.dimension_semantics<parallel>], iteration_bounds = array<i64: 2>, scalar_prefetch = 0 : i64, scratch_operands = 0 : i64, tpu.core_type = #tpu.core_type<tc>, window_params = [{transform_indices = @transform_0, window_bounds = array<i64: 1, 30, 90>}, {pipeline_mode = #tpu.pipeline_mode<synchronous>, transform_indices = @transform_1, window_bounds = array<i64: 90, 232>}, {pipeline_mode = #tpu.pipeline_mode<synchronous>, transform_indices = @transform_2, window_bounds = array<i64: 90, 232>}, {pipeline_mode = #tpu.pipeline_mode<synchronous>, transform_indices = @transform_3, window_bounds = array<i64: 1, 232>}, {pipeline_mode = #tpu.pipeline_mode<synchronous>, transform_indices = @transform_4, window_bounds = array<i64: 248, 240>}, {pipeline_mode = #tpu.pipeline_mode<synchronous>, transform_indices = @transform_5, window_bounds = array<i64: 248, 240>}, {pipeline_mode = #tpu.pipeline_mode<synchronous>, transform_indices = @transform_6, window_bounds = array<i64: 1, 240>}, {pipeline_mode = #tpu.pipeline_mode<synchronous>, transform_indices = @transform_7, window_bounds = array<i64: 272, 320>}, {pipeline_mode = #tpu.pipeline_mode<synchronous>, transform_indices = @transform_8, window_bounds = array<i64: 272, 320>}, {pipeline_mode = #tpu.pipeline_mode<synchronous>, transform_indices = @transform_9, window_bounds = array<i64: 1, 320>}, {pipeline_mode = #tpu.pipeline_mode<synchronous>, transform_indices = @transform_10, window_bounds = array<i64: 360, 216>}, {pipeline_mode = #tpu.pipeline_mode<synchronous>, transform_indices = @transform_11, window_bounds = array<i64: 360, 216>}, {pipeline_mode = #tpu.pipeline_mode<synchronous>, transform_indices = @transform_12, window_bounds = array<i64: 1, 216>}, {pipeline_mode = #tpu.pipeline_mode<synchronous>, transform_indices = @transform_13, window_bounds = array<i64: 1944, 256>}, {pipeline_mode = #tpu.pipeline_mode<synchronous>, transform_indices = @transform_14, window_bounds = array<i64: 1, 256>}, {pipeline_mode = #tpu.pipeline_mode<synchronous>, transform_indices = @transform_15, window_bounds = array<i64: 256, 128>}, {pipeline_mode = #tpu.pipeline_mode<synchronous>, transform_indices = @transform_16, window_bounds = array<i64: 1, 128>}, {pipeline_mode = #tpu.pipeline_mode<synchronous>, transform_indices = @transform_17, window_bounds = array<i64: 128, 128>}, {pipeline_mode = #tpu.pipeline_mode<synchronous>, transform_indices = @transform_18, window_bounds = array<i64: 1, 128>}, {transform_indices = @transform_19, window_bounds = array<i64: 1, 1, 128>}]} {
    %0 = tpu.iota {dimensions = array<i32: 0>} : vector<15x31xi32>
    %1 = tpu.iota {dimensions = array<i32: 1>} : vector<15x31xi32>
    %c2_i32 = arith.constant 2 : i32
    %2 = vector.broadcast %c2_i32 : i32 to vector<15x31xi32>
    %3 = arith.muli %2, %0 : vector<15x31xi32>
    %4 = arith.cmpi eq, %1, %3 : vector<15x31xi32>
    %cst = arith.constant 1.000000e+00 : f32
    %cst_0 = arith.constant 0.000000e+00 : f32
    %5 = vector.broadcast %cst : f32 to vector<15x31xf32>
    %6 = vector.broadcast %cst_0 : f32 to vector<15x31xf32>
    %7 = arith.select %4, %5, %6 : vector<15x31xi1>, vector<15x31xf32>
    %8 = arith.truncf %7 : vector<15x31xf32> to vector<15x31xbf16>
    %c2_i32_1 = arith.constant 2 : i32
    %9 = vector.broadcast %c2_i32_1 : i32 to vector<15x31xi32>
    %10 = arith.muli %9, %0 : vector<15x31xi32>
    %c1_i32 = arith.constant 1 : i32
    %11 = vector.broadcast %c1_i32 : i32 to vector<15x31xi32>
    %12 = arith.addi %10, %11 : vector<15x31xi32>
    %13 = arith.cmpi eq, %1, %12 : vector<15x31xi32>
    %cst_2 = arith.constant 1.000000e+00 : f32
    %cst_3 = arith.constant 0.000000e+00 : f32
    %14 = vector.broadcast %cst_2 : f32 to vector<15x31xf32>
    %15 = vector.broadcast %cst_3 : f32 to vector<15x31xf32>
    %16 = arith.select %13, %14, %15 : vector<15x31xi1>, vector<15x31xf32>
    %17 = arith.truncf %16 : vector<15x31xf32> to vector<15x31xbf16>
    %18 = tpu.iota {dimensions = array<i32: 0>} : vector<9x18xi32>
    %19 = tpu.iota {dimensions = array<i32: 1>} : vector<9x18xi32>
    %c2_i32_4 = arith.constant 2 : i32
    %20 = vector.broadcast %c2_i32_4 : i32 to vector<9x18xi32>
    %21 = arith.muli %20, %18 : vector<9x18xi32>
    %22 = arith.cmpi eq, %19, %21 : vector<9x18xi32>
    %cst_5 = arith.constant 1.000000e+00 : f32
    %cst_6 = arith.constant 0.000000e+00 : f32
    %23 = vector.broadcast %cst_5 : f32 to vector<9x18xf32>
    %24 = vector.broadcast %cst_6 : f32 to vector<9x18xf32>
    %25 = arith.select %22, %23, %24 : vector<9x18xi1>, vector<9x18xf32>
    %26 = arith.truncf %25 : vector<9x18xf32> to vector<9x18xbf16>
    %c2_i32_7 = arith.constant 2 : i32
    %27 = vector.broadcast %c2_i32_7 : i32 to vector<9x18xi32>
    %28 = arith.muli %27, %18 : vector<9x18xi32>
    %c1_i32_8 = arith.constant 1 : i32
    %29 = vector.broadcast %c1_i32_8 : i32 to vector<9x18xi32>
    %30 = arith.addi %28, %29 : vector<9x18xi32>
    %31 = arith.cmpi eq, %19, %30 : vector<9x18xi32>
    %cst_9 = arith.constant 1.000000e+00 : f32
    %cst_10 = arith.constant 0.000000e+00 : f32
    %32 = vector.broadcast %cst_9 : f32 to vector<9x18xf32>
    %33 = vector.broadcast %cst_10 : f32 to vector<9x18xf32>
    %34 = arith.select %31, %32, %33 : vector<9x18xi1>, vector<9x18xf32>
    %35 = arith.truncf %34 : vector<9x18xf32> to vector<9x18xbf16>
    %c0 = arith.constant 0 : index
    %c0_11 = arith.constant 0 : index
    %c0_12 = arith.constant 0 : index
    %36 = vector.load %arg1[%c0, %c0_11, %c0_12] : memref<1x30x90xbf16, #tpu.memory_space<vmem>>, vector<1x30x90xbf16>
    %37 = vector.shape_cast %36 : vector<1x30x90xbf16> to vector<30x90xbf16>
    %38 = vector.extract_strided_slice %37 {offsets = [0, 0], sizes = [29, 90], strides = [1, 1]} : vector<30x90xbf16> to vector<29x90xbf16>
    %39 = vector.extract_strided_slice %37 {offsets = [1, 0], sizes = [29, 90], strides = [1, 1]} : vector<30x90xbf16> to vector<29x90xbf16>
    %c0_13 = arith.constant 0 : index
    %c0_14 = arith.constant 0 : index
    %40 = vector.load %arg2[%c0_13, %c0_14] : memref<90x232xbf16, #tpu.memory_space<vmem>>, vector<90x232xbf16>
    %cst_15 = arith.constant dense<0.000000e+00> : vector<29x232xf32>
    %41 = tpu.matmul %38, %40, %cst_15 {dimension_numbers = #tpu.dot_dimension_numbers<[1], [0], [0], [1], [0, 0, 1, 1], [], []>} : vector<29x90xbf16>, vector<90x232xbf16>, vector<29x232xf32> -> vector<29x232xf32>
    %c0_16 = arith.constant 0 : index
    %c0_17 = arith.constant 0 : index
    %42 = vector.load %arg3[%c0_16, %c0_17] : memref<90x232xbf16, #tpu.memory_space<vmem>>, vector<90x232xbf16>
    %cst_18 = arith.constant dense<0.000000e+00> : vector<29x232xf32>
    %43 = tpu.matmul %39, %42, %cst_18 {dimension_numbers = #tpu.dot_dimension_numbers<[1], [0], [0], [1], [0, 0, 1, 1], [], []>} : vector<29x90xbf16>, vector<90x232xbf16>, vector<29x232xf32> -> vector<29x232xf32>
    %44 = arith.addf %41, %43 : vector<29x232xf32>
    %c0_19 = arith.constant 0 : index
    %c0_20 = arith.constant 0 : index
    %45 = vector.load %arg4[%c0_19, %c0_20] : memref<1x232xf32, #tpu.memory_space<vmem>>, vector<1x232xf32>
    %46 = vector.broadcast %45 : vector<1x232xf32> to vector<29x232xf32>
    %47 = arith.addf %44, %46 : vector<29x232xf32>
    %cst_21 = arith.constant 0.000000e+00 : f32
    %48 = vector.broadcast %cst_21 : f32 to vector<29x232xf32>
    %49 = arith.maximumf %47, %48 : vector<29x232xf32>
    %cst_22 = arith.constant 0.000000e+00 : f32
    %50 = vector.broadcast %cst_22 : f32 to vector<29x8xf32>
    %51 = tpu.concatenate %50, %49, %50 in 1 : vector<29x8xf32>, vector<29x232xf32>, vector<29x8xf32> -> vector<29x248xf32>
    %cst_23 = arith.constant 0.000000e+00 : f32
    %52 = vector.broadcast %cst_23 : f32 to vector<1x248xf32>
    %53 = tpu.concatenate %52, %51, %52 in 0 : vector<1x248xf32>, vector<29x248xf32>, vector<1x248xf32> -> vector<31x248xf32>
    %54 = arith.truncf %53 : vector<31x248xf32> to vector<31x248xbf16>
    %cst_24 = arith.constant dense<0.000000e+00> : vector<15x248xf32>
    %55 = tpu.matmul %8, %54, %cst_24 {dimension_numbers = #tpu.dot_dimension_numbers<[1], [0], [0], [1], [0, 0, 1, 1], [], []>} : vector<15x31xbf16>, vector<31x248xbf16>, vector<15x248xf32> -> vector<15x248xf32>
    %56 = arith.truncf %55 : vector<15x248xf32> to vector<15x248xbf16>
    %cst_25 = arith.constant dense<0.000000e+00> : vector<15x248xf32>
    %57 = tpu.matmul %17, %54, %cst_25 {dimension_numbers = #tpu.dot_dimension_numbers<[1], [0], [0], [1], [0, 0, 1, 1], [], []>} : vector<15x31xbf16>, vector<31x248xbf16>, vector<15x248xf32> -> vector<15x248xf32>
    %58 = arith.truncf %57 : vector<15x248xf32> to vector<15x248xbf16>
    %c0_26 = arith.constant 0 : index
    %c0_27 = arith.constant 0 : index
    %59 = vector.load %arg5[%c0_26, %c0_27] : memref<248x240xbf16, #tpu.memory_space<vmem>>, vector<248x240xbf16>
    %cst_28 = arith.constant dense<0.000000e+00> : vector<15x240xf32>
    %60 = tpu.matmul %56, %59, %cst_28 {dimension_numbers = #tpu.dot_dimension_numbers<[1], [0], [0], [1], [0, 0, 1, 1], [], []>} : vector<15x248xbf16>, vector<248x240xbf16>, vector<15x240xf32> -> vector<15x240xf32>
    %c0_29 = arith.constant 0 : index
    %c0_30 = arith.constant 0 : index
    %61 = vector.load %arg6[%c0_29, %c0_30] : memref<248x240xbf16, #tpu.memory_space<vmem>>, vector<248x240xbf16>
    %cst_31 = arith.constant dense<0.000000e+00> : vector<15x240xf32>
    %62 = tpu.matmul %58, %61, %cst_31 {dimension_numbers = #tpu.dot_dimension_numbers<[1], [0], [0], [1], [0, 0, 1, 1], [], []>} : vector<15x248xbf16>, vector<248x240xbf16>, vector<15x240xf32> -> vector<15x240xf32>
    %63 = arith.addf %60, %62 : vector<15x240xf32>
    %c0_32 = arith.constant 0 : index
    %c0_33 = arith.constant 0 : index
    %64 = vector.load %arg7[%c0_32, %c0_33] : memref<1x240xf32, #tpu.memory_space<vmem>>, vector<1x240xf32>
    %65 = vector.broadcast %64 : vector<1x240xf32> to vector<15x240xf32>
    %66 = arith.addf %63, %65 : vector<15x240xf32>
    %cst_34 = arith.constant 0.000000e+00 : f32
    %67 = vector.broadcast %cst_34 : f32 to vector<15x240xf32>
    %68 = arith.maximumf %66, %67 : vector<15x240xf32>
    %cst_35 = arith.constant 0.000000e+00 : f32
    %69 = vector.broadcast %cst_35 : f32 to vector<15x16xf32>
    %70 = tpu.concatenate %69, %68, %69 in 1 : vector<15x16xf32>, vector<15x240xf32>, vector<15x16xf32> -> vector<15x272xf32>
    %cst_36 = arith.constant 0.000000e+00 : f32
    %71 = vector.broadcast %cst_36 : f32 to vector<1x272xf32>
    %72 = tpu.concatenate %71, %70, %71 in 0 : vector<1x272xf32>, vector<15x272xf32>, vector<1x272xf32> -> vector<17x272xf32>
    %73 = arith.truncf %72 : vector<17x272xf32> to vector<17x272xbf16>
    %74 = vector.extract_strided_slice %73 {offsets = [0, 0], sizes = [16, 272], strides = [1, 1]} : vector<17x272xbf16> to vector<16x272xbf16>
    %75 = vector.extract_strided_slice %73 {offsets = [1, 0], sizes = [16, 272], strides = [1, 1]} : vector<17x272xbf16> to vector<16x272xbf16>
    %c0_37 = arith.constant 0 : index
    %c0_38 = arith.constant 0 : index
    %76 = vector.load %arg8[%c0_37, %c0_38] : memref<272x320xbf16, #tpu.memory_space<vmem>>, vector<272x320xbf16>
    %cst_39 = arith.constant dense<0.000000e+00> : vector<16x320xf32>
    %77 = tpu.matmul %74, %76, %cst_39 {dimension_numbers = #tpu.dot_dimension_numbers<[1], [0], [0], [1], [0, 0, 1, 1], [], []>} : vector<16x272xbf16>, vector<272x320xbf16>, vector<16x320xf32> -> vector<16x320xf32>
    %c0_40 = arith.constant 0 : index
    %c0_41 = arith.constant 0 : index
    %78 = vector.load %arg9[%c0_40, %c0_41] : memref<272x320xbf16, #tpu.memory_space<vmem>>, vector<272x320xbf16>
    %cst_42 = arith.constant dense<0.000000e+00> : vector<16x320xf32>
    %79 = tpu.matmul %75, %78, %cst_42 {dimension_numbers = #tpu.dot_dimension_numbers<[1], [0], [0], [1], [0, 0, 1, 1], [], []>} : vector<16x272xbf16>, vector<272x320xbf16>, vector<16x320xf32> -> vector<16x320xf32>
    %80 = arith.addf %77, %79 : vector<16x320xf32>
    %c0_43 = arith.constant 0 : index
    %c0_44 = arith.constant 0 : index
    %81 = vector.load %arg10[%c0_43, %c0_44] : memref<1x320xf32, #tpu.memory_space<vmem>>, vector<1x320xf32>
    %82 = vector.broadcast %81 : vector<1x320xf32> to vector<16x320xf32>
    %83 = arith.addf %80, %82 : vector<16x320xf32>
    %cst_45 = arith.constant 0.000000e+00 : f32
    %84 = vector.broadcast %cst_45 : f32 to vector<16x320xf32>
    %85 = arith.maximumf %83, %84 : vector<16x320xf32>
    %cst_46 = arith.constant 0.000000e+00 : f32
    %86 = vector.broadcast %cst_46 : f32 to vector<16x20xf32>
    %87 = tpu.concatenate %86, %85, %86 in 1 : vector<16x20xf32>, vector<16x320xf32>, vector<16x20xf32> -> vector<16x360xf32>
    %cst_47 = arith.constant 0.000000e+00 : f32
    %88 = vector.broadcast %cst_47 : f32 to vector<1x360xf32>
    %89 = tpu.concatenate %88, %87, %88 in 0 : vector<1x360xf32>, vector<16x360xf32>, vector<1x360xf32> -> vector<18x360xf32>
    %90 = arith.truncf %89 : vector<18x360xf32> to vector<18x360xbf16>
    %cst_48 = arith.constant dense<0.000000e+00> : vector<9x360xf32>
    %91 = tpu.matmul %26, %90, %cst_48 {dimension_numbers = #tpu.dot_dimension_numbers<[1], [0], [0], [1], [0, 0, 1, 1], [], []>} : vector<9x18xbf16>, vector<18x360xbf16>, vector<9x360xf32> -> vector<9x360xf32>
    %92 = arith.truncf %91 : vector<9x360xf32> to vector<9x360xbf16>
    %cst_49 = arith.constant dense<0.000000e+00> : vector<9x360xf32>
    %93 = tpu.matmul %35, %90, %cst_49 {dimension_numbers = #tpu.dot_dimension_numbers<[1], [0], [0], [1], [0, 0, 1, 1], [], []>} : vector<9x18xbf16>, vector<18x360xbf16>, vector<9x360xf32> -> vector<9x360xf32>
    %94 = arith.truncf %93 : vector<9x360xf32> to vector<9x360xbf16>
    %c0_50 = arith.constant 0 : index
    %c0_51 = arith.constant 0 : index
    %95 = vector.load %arg11[%c0_50, %c0_51] : memref<360x216xbf16, #tpu.memory_space<vmem>>, vector<360x216xbf16>
    %cst_52 = arith.constant dense<0.000000e+00> : vector<9x216xf32>
    %96 = tpu.matmul %92, %95, %cst_52 {dimension_numbers = #tpu.dot_dimension_numbers<[1], [0], [0], [1], [0, 0, 1, 1], [], []>} : vector<9x360xbf16>, vector<360x216xbf16>, vector<9x216xf32> -> vector<9x216xf32>
    %c0_53 = arith.constant 0 : index
    %c0_54 = arith.constant 0 : index
    %97 = vector.load %arg12[%c0_53, %c0_54] : memref<360x216xbf16, #tpu.memory_space<vmem>>, vector<360x216xbf16>
    %cst_55 = arith.constant dense<0.000000e+00> : vector<9x216xf32>
    %98 = tpu.matmul %94, %97, %cst_55 {dimension_numbers = #tpu.dot_dimension_numbers<[1], [0], [0], [1], [0, 0, 1, 1], [], []>} : vector<9x360xbf16>, vector<360x216xbf16>, vector<9x216xf32> -> vector<9x216xf32>
    %99 = arith.addf %96, %98 : vector<9x216xf32>
    %c0_56 = arith.constant 0 : index
    %c0_57 = arith.constant 0 : index
    %100 = vector.load %arg13[%c0_56, %c0_57] : memref<1x216xf32, #tpu.memory_space<vmem>>, vector<1x216xf32>
    %101 = vector.broadcast %100 : vector<1x216xf32> to vector<9x216xf32>
    %102 = arith.addf %99, %101 : vector<9x216xf32>
    %cst_58 = arith.constant 0.000000e+00 : f32
    %103 = vector.broadcast %cst_58 : f32 to vector<9x216xf32>
    %104 = arith.maximumf %102, %103 : vector<9x216xf32>
    %105 = vector.extract_strided_slice %104 {offsets = [0, 0], sizes = [1, 216], strides = [1, 1]} : vector<9x216xf32> to vector<1x216xf32>
    %106 = vector.extract_strided_slice %104 {offsets = [1, 0], sizes = [1, 216], strides = [1, 1]} : vector<9x216xf32> to vector<1x216xf32>
    %107 = vector.extract_strided_slice %104 {offsets = [2, 0], sizes = [1, 216], strides = [1, 1]} : vector<9x216xf32> to vector<1x216xf32>
    %108 = vector.extract_strided_slice %104 {offsets = [3, 0], sizes = [1, 216], strides = [1, 1]} : vector<9x216xf32> to vector<1x216xf32>
    %109 = vector.extract_strided_slice %104 {offsets = [4, 0], sizes = [1, 216], strides = [1, 1]} : vector<9x216xf32> to vector<1x216xf32>
    %110 = vector.extract_strided_slice %104 {offsets = [5, 0], sizes = [1, 216], strides = [1, 1]} : vector<9x216xf32> to vector<1x216xf32>
    %111 = vector.extract_strided_slice %104 {offsets = [6, 0], sizes = [1, 216], strides = [1, 1]} : vector<9x216xf32> to vector<1x216xf32>
    %112 = vector.extract_strided_slice %104 {offsets = [7, 0], sizes = [1, 216], strides = [1, 1]} : vector<9x216xf32> to vector<1x216xf32>
    %113 = vector.extract_strided_slice %104 {offsets = [8, 0], sizes = [1, 216], strides = [1, 1]} : vector<9x216xf32> to vector<1x216xf32>
    %114 = tpu.concatenate %105, %106, %107, %108, %109, %110, %111, %112, %113 in 1 : vector<1x216xf32>, vector<1x216xf32>, vector<1x216xf32>, vector<1x216xf32>, vector<1x216xf32>, vector<1x216xf32>, vector<1x216xf32>, vector<1x216xf32>, vector<1x216xf32> -> vector<1x1944xf32>
    %115 = arith.truncf %114 : vector<1x1944xf32> to vector<1x1944xbf16>
    %c0_59 = arith.constant 0 : index
    %c0_60 = arith.constant 0 : index
    %116 = vector.load %arg14[%c0_59, %c0_60] : memref<1944x256xbf16, #tpu.memory_space<vmem>>, vector<1944x256xbf16>
    %cst_61 = arith.constant dense<0.000000e+00> : vector<1x256xf32>
    %117 = tpu.matmul %115, %116, %cst_61 {dimension_numbers = #tpu.dot_dimension_numbers<[1], [0], [0], [1], [0, 0, 1, 1], [], []>} : vector<1x1944xbf16>, vector<1944x256xbf16>, vector<1x256xf32> -> vector<1x256xf32>
    %c0_62 = arith.constant 0 : index
    %c0_63 = arith.constant 0 : index
    %118 = vector.load %arg15[%c0_62, %c0_63] : memref<1x256xf32, #tpu.memory_space<vmem>>, vector<1x256xf32>
    %119 = arith.addf %117, %118 : vector<1x256xf32>
    %cst_64 = arith.constant 0.000000e+00 : f32
    %120 = vector.broadcast %cst_64 : f32 to vector<1x256xf32>
    %121 = arith.maximumf %119, %120 : vector<1x256xf32>
    %122 = arith.truncf %121 : vector<1x256xf32> to vector<1x256xbf16>
    %c0_65 = arith.constant 0 : index
    %c0_66 = arith.constant 0 : index
    %123 = vector.load %arg16[%c0_65, %c0_66] : memref<256x128xbf16, #tpu.memory_space<vmem>>, vector<256x128xbf16>
    %cst_67 = arith.constant dense<0.000000e+00> : vector<1x128xf32>
    %124 = tpu.matmul %122, %123, %cst_67 {dimension_numbers = #tpu.dot_dimension_numbers<[1], [0], [0], [1], [0, 0, 1, 1], [], []>} : vector<1x256xbf16>, vector<256x128xbf16>, vector<1x128xf32> -> vector<1x128xf32>
    %c0_68 = arith.constant 0 : index
    %c0_69 = arith.constant 0 : index
    %125 = vector.load %arg17[%c0_68, %c0_69] : memref<1x128xf32, #tpu.memory_space<vmem>>, vector<1x128xf32>
    %126 = arith.addf %124, %125 : vector<1x128xf32>
    %cst_70 = arith.constant 0.000000e+00 : f32
    %127 = vector.broadcast %cst_70 : f32 to vector<1x128xf32>
    %128 = arith.maximumf %126, %127 : vector<1x128xf32>
    %129 = arith.truncf %128 : vector<1x128xf32> to vector<1x128xbf16>
    %c0_71 = arith.constant 0 : index
    %c0_72 = arith.constant 0 : index
    %130 = vector.load %arg18[%c0_71, %c0_72] : memref<128x128xbf16, #tpu.memory_space<vmem>>, vector<128x128xbf16>
    %cst_73 = arith.constant dense<0.000000e+00> : vector<1x128xf32>
    %131 = tpu.matmul %129, %130, %cst_73 {dimension_numbers = #tpu.dot_dimension_numbers<[1], [0], [0], [1], [0, 0, 1, 1], [], []>} : vector<1x128xbf16>, vector<128x128xbf16>, vector<1x128xf32> -> vector<1x128xf32>
    %c0_74 = arith.constant 0 : index
    %c0_75 = arith.constant 0 : index
    %132 = vector.load %arg19[%c0_74, %c0_75] : memref<1x128xf32, #tpu.memory_space<vmem>>, vector<1x128xf32>
    %133 = arith.addf %131, %132 : vector<1x128xf32>
    %c0_76 = arith.constant 0 : index
    %c0_77 = arith.constant 0 : index
    %c0_78 = arith.constant 0 : index
    %134 = vector.load %arg20[%c0_76, %c0_77, %c0_78] : memref<1x1x128xf32, #tpu.memory_space<vmem>>, vector<1x1x128xf32>
    %135 = vector.shape_cast %134 : vector<1x1x128xf32> to vector<1x128xf32>
    %136 = vector.shape_cast %133 : vector<1x128xf32> to vector<1x1x128xf32>
    tpu.vector_store %arg20[%c0_76, %c0_77, %c0_78], %136 {strides = array<i32>} : memref<1x1x128xf32, #tpu.memory_space<vmem>>, vector<1x1x128xf32>,
    return
  }
  func.func @transform_0(%arg0: i32) -> (i32, i32, i32) {
    %c0_i32 = arith.constant 0 : i32
    %c0_i32_0 = arith.constant 0 : i32
    %c0_i32_1 = arith.constant 0 : i32
    return %arg0, %c0_i32, %c0_i32_0 : i32, i32, i32
  }
  func.func @transform_1(%arg0: i32) -> (i32, i32) {
    %c0_i32 = arith.constant 0 : i32
    %c0_i32_0 = arith.constant 0 : i32
    %c0_i32_1 = arith.constant 0 : i32
    return %c0_i32, %c0_i32_0 : i32, i32
  }
  func.func @transform_2(%arg0: i32) -> (i32, i32) {
    %c0_i32 = arith.constant 0 : i32
    %c0_i32_0 = arith.constant 0 : i32
    %c0_i32_1 = arith.constant 0 : i32
    return %c0_i32, %c0_i32_0 : i32, i32
  }
  func.func @transform_3(%arg0: i32) -> (i32, i32) {
    %c0_i32 = arith.constant 0 : i32
    %c0_i32_0 = arith.constant 0 : i32
    %c0_i32_1 = arith.constant 0 : i32
    return %c0_i32, %c0_i32_0 : i32, i32
  }
  func.func @transform_4(%arg0: i32) -> (i32, i32) {
    %c0_i32 = arith.constant 0 : i32
    %c0_i32_0 = arith.constant 0 : i32
    %c0_i32_1 = arith.constant 0 : i32
    return %c0_i32, %c0_i32_0 : i32, i32
  }
  func.func @transform_5(%arg0: i32) -> (i32, i32) {
    %c0_i32 = arith.constant 0 : i32
    %c0_i32_0 = arith.constant 0 : i32
    %c0_i32_1 = arith.constant 0 : i32
    return %c0_i32, %c0_i32_0 : i32, i32
  }
  func.func @transform_6(%arg0: i32) -> (i32, i32) {
    %c0_i32 = arith.constant 0 : i32
    %c0_i32_0 = arith.constant 0 : i32
    %c0_i32_1 = arith.constant 0 : i32
    return %c0_i32, %c0_i32_0 : i32, i32
  }
  func.func @transform_7(%arg0: i32) -> (i32, i32) {
    %c0_i32 = arith.constant 0 : i32
    %c0_i32_0 = arith.constant 0 : i32
    %c0_i32_1 = arith.constant 0 : i32
    return %c0_i32, %c0_i32_0 : i32, i32
  }
  func.func @transform_8(%arg0: i32) -> (i32, i32) {
    %c0_i32 = arith.constant 0 : i32
    %c0_i32_0 = arith.constant 0 : i32
    %c0_i32_1 = arith.constant 0 : i32
    return %c0_i32, %c0_i32_0 : i32, i32
  }
  func.func @transform_9(%arg0: i32) -> (i32, i32) {
    %c0_i32 = arith.constant 0 : i32
    %c0_i32_0 = arith.constant 0 : i32
    %c0_i32_1 = arith.constant 0 : i32
    return %c0_i32, %c0_i32_0 : i32, i32
  }
  func.func @transform_10(%arg0: i32) -> (i32, i32) {
    %c0_i32 = arith.constant 0 : i32
    %c0_i32_0 = arith.constant 0 : i32
    %c0_i32_1 = arith.constant 0 : i32
    return %c0_i32, %c0_i32_0 : i32, i32
  }
  func.func @transform_11(%arg0: i32) -> (i32, i32) {
    %c0_i32 = arith.constant 0 : i32
    %c0_i32_0 = arith.constant 0 : i32
    %c0_i32_1 = arith.constant 0 : i32
    return %c0_i32, %c0_i32_0 : i32, i32
  }
  func.func @transform_12(%arg0: i32) -> (i32, i32) {
    %c0_i32 = arith.constant 0 : i32
    %c0_i32_0 = arith.constant 0 : i32
    %c0_i32_1 = arith.constant 0 : i32
    return %c0_i32, %c0_i32_0 : i32, i32
  }
  func.func @transform_13(%arg0: i32) -> (i32, i32) {
    %c0_i32 = arith.constant 0 : i32
    %c0_i32_0 = arith.constant 0 : i32
    %c0_i32_1 = arith.constant 0 : i32
    return %c0_i32, %c0_i32_0 : i32, i32
  }
  func.func @transform_14(%arg0: i32) -> (i32, i32) {
    %c0_i32 = arith.constant 0 : i32
    %c0_i32_0 = arith.constant 0 : i32
    %c0_i32_1 = arith.constant 0 : i32
    return %c0_i32, %c0_i32_0 : i32, i32
  }
  func.func @transform_15(%arg0: i32) -> (i32, i32) {
    %c0_i32 = arith.constant 0 : i32
    %c0_i32_0 = arith.constant 0 : i32
    %c0_i32_1 = arith.constant 0 : i32
    return %c0_i32, %c0_i32_0 : i32, i32
  }
  func.func @transform_16(%arg0: i32) -> (i32, i32) {
    %c0_i32 = arith.constant 0 : i32
    %c0_i32_0 = arith.constant 0 : i32
    %c0_i32_1 = arith.constant 0 : i32
    return %c0_i32, %c0_i32_0 : i32, i32
  }
  func.func @transform_17(%arg0: i32) -> (i32, i32) {
    %c0_i32 = arith.constant 0 : i32
    %c0_i32_0 = arith.constant 0 : i32
    %c0_i32_1 = arith.constant 0 : i32
    return %c0_i32, %c0_i32_0 : i32, i32
  }
  func.func @transform_18(%arg0: i32) -> (i32, i32) {
    %c0_i32 = arith.constant 0 : i32
    %c0_i32_0 = arith.constant 0 : i32
    %c0_i32_1 = arith.constant 0 : i32
    return %c0_i32, %c0_i32_0 : i32, i32
  }
  func.func @transform_19(%arg0: i32) -> (i32, i32, i32) {
    %c0_i32 = arith.constant 0 : i32
    %c0_i32_0 = arith.constant 0 : i32
    %c0_i32_1 = arith.constant 0 : i32
    return %arg0, %c0_i32, %c0_i32_0 : i32, i32, i32
  }
}

</mosaic_0001>

<llo_original>
// kernel: mnist_net_forward.1
$region0: #{mnist_net_forward.1}
  #allocation0 [shape = 'u32[]', space=smem, size = 0x4, offset = 0x4, fixed_abs, tag = 'smem constant byte address 0x4 - core index']
  #allocation1 [shape = 'u32[144,128]{1,0:T(1,128)}', space=vmem, size = 0x12000, scoped, tag = 'internal scratch']
  %s0 = inlined_call_operand.vmem [shape: bf16[2,30,90], index: 0, kind: input, shape index: {}]
  %s1 = inlined_call_operand.hbm [shape: bf16[90,232], index: 1, kind: input, shape index: {}]
  %s2 = inlined_call_operand.hbm [shape: bf16[90,232], index: 2, kind: input, shape index: {}]
  %s3 = inlined_call_operand.vmem [shape: f32[1,232], index: 3, kind: input, shape index: {}]
  %s4 = inlined_call_operand.vmem [shape: bf16[248,240], index: 4, kind: input, shape index: {}]
  %s5 = inlined_call_operand.vmem [shape: bf16[248,240], index: 5, kind: input, shape index: {}]
  %s6 = inlined_call_operand.vmem [shape: f32[1,240], index: 6, kind: input, shape index: {}]
  %s7 = inlined_call_operand.vmem [shape: bf16[272,320], index: 7, kind: input, shape index: {}]
  %s8 = inlined_call_operand.vmem [shape: bf16[272,320], index: 8, kind: input, shape index: {}]
  %s9 = inlined_call_operand.vmem [shape: f32[1,320], index: 9, kind: input, shape index: {}]
  %s10 = inlined_call_operand.vmem [shape: bf16[360,216], index: 10, kind: input, shape index: {}]
  %s11 = inlined_call_operand.vmem [shape: bf16[360,216], index: 11, kind: input, shape index: {}]
  %s12 = inlined_call_operand.vmem [shape: f32[1,216], index: 12, kind: input, shape index: {}]
  %s13 = inlined_call_operand.vmem [shape: bf16[1944,256], index: 13, kind: input, shape index: {}]
  %s14 = inlined_call_operand.vmem [shape: f32[1,256], index: 14, kind: input, shape index: {}]
  %s15 = inlined_call_operand.hbm [shape: bf16[256,128], index: 15, kind: input, shape index: {}]
  %s16 = inlined_call_operand.vmem [shape: f32[1,128], index: 16, kind: input, shape index: {}]
  %s17 = inlined_call_operand.hbm [shape: bf16[128,128], index: 17, kind: input, shape index: {}]
  %s18 = inlined_call_operand.vmem [shape: f32[1,128], index: 18, kind: input, shape index: {}]
  %s19 = inlined_call_operand.hbm [shape: f32[2,1,128], index: 19, kind: output, shape index: {}]
  %s20 = sld [smem:[#allocation0]]
  $region125: #{mnist_net_forward.1} parent=0
    _
  %s22 = ssub.s32 1, %s20
  %s23 = scalar_select 0, %s22, %s20
  $region1: #{mnist_net_forward.1} parent=0
    #allocation2 [shape = 'u8[49152]{0}', space=vmem, size = 0xc000, scoped, tag = 'input window, operand 1, single buffered']
    #allocation3 [shape = 's32[2]{0}', space=sflag, size = 0x8, scoped, tag = 'scoped memory for mnist_net_forward.1']
    #allocation4 [shape = 's32[2]{0}', space=sflag, size = 0x8, scoped, tag = 'scoped memory for mnist_net_forward.1']
    #allocation5 [shape = 'u8[49152]{0}', space=vmem, size = 0xc000, scoped, tag = 'input window, operand 2, single buffered']
    #allocation6 [shape = 's32[1]{0}', space=sflag, size = 0x4, scoped, tag = 'scoped memory for mnist_net_forward.1']
    #allocation7 [shape = 'u8[65536]{0}', space=vmem, size = 0x10000, scoped, tag = 'input window, operand 15, single buffered']
    #allocation8 [shape = 'u8[32768]{0}', space=vmem, size = 0x8000, scoped, tag = 'input window, operand 17, single buffered']
    #allocation9 [shape = 's32[1]{0}', space=sflag, size = 0x4, scoped, tag = 'scoped memory for mnist_net_forward.1']
    #allocation10 [shape = 'u8[1024]{0}', space=vmem, size = 0x400, scoped, tag = 'output window, operand 0']
    %24 = vsyncpa [#allocation3], 0
    %25 = vsyncpa [#allocation6], 0
    %26 = vsyncpa [#allocation9], 0
    %27 = vsyncpa [#allocation4], 0
    %s28 = scalar_lea.sflag [#allocation4], 1
    %29 = vsyncpa %s28, 0
    loop: start=0, step=1, limit=4
    $region2: #{mnist_net_forward.1} parent=1 // loop_pre_header
      _
    $region3: #{mnist_net_forward.1} parent=1 // loop_header
      %s31 = sphi 0, %s35
      %p32 = scmp.ge.s32.totalorder %s31, 4
      %s41 = sphi 0, %s43
      %s44 = sphi 0, %s41
      %s45 = sphi 0, %s44
      %s61 = sphi 0, %s45
      %s65 = sphi 0, %s65
      %s67 = sphi 0, %s65
      %s68 = sphi 0, %s67
      %s82 = sphi 0, %s68
      %s86 = sphi 0, %s86
      %s88 = sphi 0, %s86
      %s89 = sphi 0, %s88
      %s103 = sphi 0, %s89
      %s107 = sphi 0, %s107
      %s109 = sphi 0, %s107
      %s110 = sphi 0, %s109
      %s124 = sphi 0, %s110
      %s128 = sphi 0, %s128
      %s130 = sphi 0, %s128
      %s131 = sphi 0, %s130
      %s145 = sphi 0, %s131
      %s149 = sphi 0, %s149
      %s151 = sphi 0, %s149
      %s152 = sphi 0, %s151
      %s166 = sphi 0, %s152
      %s170 = sphi 0, %s170
      %s172 = sphi 0, %s170
      %s173 = sphi 0, %s172
      %s187 = sphi 0, %s173
      %s191 = sphi 0, %s191
      %s193 = sphi 0, %s191
      %s194 = sphi 0, %s193
      %s208 = sphi 0, %s194
      %s212 = sphi 0, %s212
      %s214 = sphi 0, %s212
      %s215 = sphi 0, %s214
      %s229 = sphi 0, %s215
      %s233 = sphi 0, %s233
      %s235 = sphi 0, %s233
      %s236 = sphi 0, %s235
      %s250 = sphi 0, %s236
      %s254 = sphi 0, %s254
      %s256 = sphi 0, %s254
      %s257 = sphi 0, %s256
      %s271 = sphi 0, %s257
      %s275 = sphi 0, %s275
      %s277 = sphi 0, %s275
      %s278 = sphi 0, %s277
      %s292 = sphi 0, %s278
      %s296 = sphi 0, %s296
      %s298 = sphi 0, %s296
      %s299 = sphi 0, %s298
      %s313 = sphi 0, %s299
      %s317 = sphi 0, %s317
      %s319 = sphi 0, %s317
      %s320 = sphi 0, %s319
      %s334 = sphi 0, %s320
      %s338 = sphi 0, %s338
      %s340 = sphi 0, %s338
      %s341 = sphi 0, %s340
      %s355 = sphi 0, %s341
      %s359 = sphi 0, %s359
      %s361 = sphi 0, %s359
      %s362 = sphi 0, %s361
      %s376 = sphi 0, %s362
      %s380 = sphi 0, %s380
      %s382 = sphi 0, %s380
      %s383 = sphi 0, %s382
      %s397 = sphi 0, %s383
      %s401 = sphi 0, %s401
      %s403 = sphi 0, %s401
      %s404 = sphi 0, %s403
      %s418 = sphi 0, %s404
      %s422 = sphi 0, %s422
      %s424 = sphi 0, %s422
      %s425 = sphi 0, %s424
      %s439 = sphi 0, %s425
      %s445 = sphi 0, %s447
      %s448 = sphi 0, %s445
      %s449 = sphi 0, %s448
      %s465 = sphi 0, %s449
    $region4: #{mnist_net_forward.1} parent=1 // loop_header_branch
      %34 = sbr.rel (%p32) target = $region8
    $region5: #{mnist_net_forward.1} parent=1 // loop_body
      %s36 = ssub.s32 %s31, 1
      %s37 = ssub.s32 %s31, 2
      %s38 = sadd.s32 %s31, 1
      %s39 = ssub.s32 %s31, %s38
      %p40 = scmp.eq.s32.totalorder %s39, 0
      %s42 = sadd.s32 %s41, 1
      %s43 = scalar_select %p40, %s41, %s42
      %p46 = pneg %p40
      %p47 = scmp.eq.s32.totalorder %s31, 1
      %p48 = por %p46, %p47
      %p49 = scmp.ne.s32.totalorder %s41, %s44
      %p50 = scmp.eq.s32.totalorder %s31, 0
      %p51 = por %p49, %p50
      %p52 = scmp.ne.s32.totalorder %s41, %s44
      %p53 = scmp.eq.s32.totalorder %s36, 1
      %p54 = por %p52, %p53
      %p55 = scmp.ne.s32.totalorder %s44, %s45
      %p56 = scmp.eq.s32.totalorder %s36, 0
      %p57 = por %p55, %p56
      %p58 = scmp.ne.s32.totalorder %s44, %s45
      %p59 = scmp.eq.s32.totalorder %s37, 1
      %p60 = por %p58, %p59
      %p62 = scmp.ne.s32.totalorder %s45, %s61
      %p63 = scmp.eq.s32.totalorder %s37, 0
      %p64 = por %p62, %p63
      %s66 = sadd.s32 %s65, 1
      %p69 = scmp.eq.s32.totalorder %s31, 1
      %p70 = scmp.ne.s32.totalorder %s65, %s67
      %p71 = scmp.eq.s32.totalorder %s31, 0
      %p72 = por %p70, %p71
      %p73 = scmp.ne.s32.totalorder %s65, %s67
      %p74 = scmp.eq.s32.totalorder %s36, 1
      %p75 = por %p73, %p74
      %p76 = scmp.ne.s32.totalorder %s67, %s68
      %p77 = scmp.eq.s32.totalorder %s36, 0
      %p78 = por %p76, %p77
      %p79 = scmp.ne.s32.totalorder %s67, %s68
      %p80 = scmp.eq.s32.totalorder %s37, 1
      %p81 = por %p79, %p80
      %p83 = scmp.ne.s32.totalorder %s68, %s82
      %p84 = scmp.eq.s32.totalorder %s37, 0
      %p85 = por %p83, %p84
      %s87 = sadd.s32 %s86, 1
      %p90 = scmp.eq.s32.totalorder %s31, 1
      %p91 = scmp.ne.s32.totalorder %s86, %s88
      %p92 = scmp.eq.s32.totalorder %s31, 0
      %p93 = por %p91, %p92
      %p94 = scmp.ne.s32.totalorder %s86, %s88
      %p95 = scmp.eq.s32.totalorder %s36, 1
      %p96 = por %p94, %p95
      %p97 = scmp.ne.s32.totalorder %s88, %s89
      %p98 = scmp.eq.s32.totalorder %s36, 0
      %p99 = por %p97, %p98
      %p100 = scmp.ne.s32.totalorder %s88, %s89
      %p101 = scmp.eq.s32.totalorder %s37, 1
      %p102 = por %p100, %p101
      %p104 = scmp.ne.s32.totalorder %s89, %s103
      %p105 = scmp.eq.s32.totalorder %s37, 0
      %p106 = por %p104, %p105
      %s108 = sadd.s32 %s107, 1
      %p111 = scmp.eq.s32.totalorder %s31, 1
      %p112 = scmp.ne.s32.totalorder %s107, %s109
      %p113 = scmp.eq.s32.totalorder %s31, 0
      %p114 = por %p112, %p113
      %p115 = scmp.ne.s32.totalorder %s107, %s109
      %p116 = scmp.eq.s32.totalorder %s36, 1
      %p117 = por %p115, %p116
      %p118 = scmp.ne.s32.totalorder %s109, %s110
      %p119 = scmp.eq.s32.totalorder %s36, 0
      %p120 = por %p118, %p119
      %p121 = scmp.ne.s32.totalorder %s109, %s110
      %p122 = scmp.eq.s32.totalorder %s37, 1
      %p123 = por %p121, %p122
      %p125 = scmp.ne.s32.totalorder %s110, %s124
      %p126 = scmp.eq.s32.totalorder %s37, 0
      %p127 = por %p125, %p126
      %s129 = sadd.s32 %s128, 1
      %p132 = scmp.eq.s32.totalorder %s31, 1
      %p133 = scmp.ne.s32.totalorder %s128, %s130
      %p134 = scmp.eq.s32.totalorder %s31, 0
      %p135 = por %p133, %p134
      %p136 = scmp.ne.s32.totalorder %s128, %s130
      %p137 = scmp.eq.s32.totalorder %s36, 1
      %p138 = por %p136, %p137
      %p139 = scmp.ne.s32.totalorder %s130, %s131
      %p140 = scmp.eq.s32.totalorder %s36, 0
      %p141 = por %p139, %p140
      %p142 = scmp.ne.s32.totalorder %s130, %s131
      %p143 = scmp.eq.s32.totalorder %s37, 1
      %p144 = por %p142, %p143
      %p146 = scmp.ne.s32.totalorder %s131, %s145
      %p147 = scmp.eq.s32.totalorder %s37, 0
      %p148 = por %p146, %p147
      %s150 = sadd.s32 %s149, 1
      %p153 = scmp.eq.s32.totalorder %s31, 1
      %p154 = scmp.ne.s32.totalorder %s149, %s151
      %p155 = scmp.eq.s32.totalorder %s31, 0
      %p156 = por %p154, %p155
      %p157 = scmp.ne.s32.totalorder %s149, %s151
      %p158 = scmp.eq.s32.totalorder %s36, 1
      %p159 = por %p157, %p158
      %p160 = scmp.ne.s32.totalorder %s151, %s152
      %p161 = scmp.eq.s32.totalorder %s36, 0
      %p162 = por %p160, %p161
      %p163 = scmp.ne.s32.totalorder %s151, %s152
      %p164 = scmp.eq.s32.totalorder %s37, 1
      %p165 = por %p163, %p164
      %p167 = scmp.ne.s32.totalorder %s152, %s166
      %p168 = scmp.eq.s32.totalorder %s37, 0
      %p169 = por %p167, %p168
      %s171 = sadd.s32 %s170, 1
      %p174 = scmp.eq.s32.totalorder %s31, 1
      %p175 = scmp.ne.s32.totalorder %s170, %s172
      %p176 = scmp.eq.s32.totalorder %s31, 0
      %p177 = por %p175, %p176
      %p178 = scmp.ne.s32.totalorder %s170, %s172
      %p179 = scmp.eq.s32.totalorder %s36, 1
      %p180 = por %p178, %p179
      %p181 = scmp.ne.s32.totalorder %s172, %s173
      %p182 = scmp.eq.s32.totalorder %s36, 0
      %p183 = por %p181, %p182
      %p184 = scmp.ne.s32.totalorder %s172, %s173
      %p185 = scmp.eq.s32.totalorder %s37, 1
      %p186 = por %p184, %p185
      %p188 = scmp.ne.s32.totalorder %s173, %s187
      %p189 = scmp.eq.s32.totalorder %s37, 0
      %p190 = por %p188, %p189
      %s192 = sadd.s32 %s191, 1
      %p195 = scmp.eq.s32.totalorder %s31, 1
      %p196 = scmp.ne.s32.totalorder %s191, %s193
      %p197 = scmp.eq.s32.totalorder %s31, 0
      %p198 = por %p196, %p197
      %p199 = scmp.ne.s32.totalorder %s191, %s193
      %p200 = scmp.eq.s32.totalorder %s36, 1
      %p201 = por %p199, %p200
      %p202 = scmp.ne.s32.totalorder %s193, %s194
      %p203 = scmp.eq.s32.totalorder %s36, 0
      %p204 = por %p202, %p203
      %p205 = scmp.ne.s32.totalorder %s193, %s194
      %p206 = scmp.eq.s32.totalorder %s37, 1
      %p207 = por %p205, %p206
      %p209 = scmp.ne.s32.totalorder %s194, %s208
      %p210 = scmp.eq.s32.totalorder %s37, 0
      %p211 = por %p209, %p210
      %s213 = sadd.s32 %s212, 1
      %p216 = scmp.eq.s32.totalorder %s31, 1
      %p217 = scmp.ne.s32.totalorder %s212, %s214
      %p218 = scmp.eq.s32.totalorder %s31, 0
      %p219 = por %p217, %p218
      %p220 = scmp.ne.s32.totalorder %s212, %s214
      %p221 = scmp.eq.s32.totalorder %s36, 1
      %p222 = por %p220, %p221
      %p223 = scmp.ne.s32.totalorder %s214, %s215
      %p224 = scmp.eq.s32.totalorder %s36, 0
      %p225 = por %p223, %p224
      %p226 = scmp.ne.s32.totalorder %s214, %s215
      %p227 = scmp.eq.s32.totalorder %s37, 1
      %p228 = por %p226, %p227
      %p230 = scmp.ne.s32.totalorder %s215, %s229
      %p231 = scmp.eq.s32.totalorder %s37, 0
      %p232 = por %p230, %p231
      %s234 = sadd.s32 %s233, 1
      %p237 = scmp.eq.s32.totalorder %s31, 1
      %p238 = scmp.ne.s32.totalorder %s233, %s235
      %p239 = scmp.eq.s32.totalorder %s31, 0
      %p240 = por %p238, %p239
      %p241 = scmp.ne.s32.totalorder %s233, %s235
      %p242 = scmp.eq.s32.totalorder %s36, 1
      %p243 = por %p241, %p242
      %p244 = scmp.ne.s32.totalorder %s235, %s236
      %p245 = scmp.eq.s32.totalorder %s36, 0
      %p246 = por %p244, %p245
      %p247 = scmp.ne.s32.totalorder %s235, %s236
      %p248 = scmp.eq.s32.totalorder %s37, 1
      %p249 = por %p247, %p248
      %p251 = scmp.ne.s32.totalorder %s236, %s250
      %p252 = scmp.eq.s32.totalorder %s37, 0
      %p253 = por %p251, %p252
      %s255 = sadd.s32 %s254, 1
      %p258 = scmp.eq.s32.totalorder %s31, 1
      %p259 = scmp.ne.s32.totalorder %s254, %s256
      %p260 = scmp.eq.s32.totalorder %s31, 0
      %p261 = por %p259, %p260
      %p262 = scmp.ne.s32.totalorder %s254, %s256
      %p263 = scmp.eq.s32.totalorder %s36, 1
      %p264 = por %p262, %p263
      %p265 = scmp.ne.s32.totalorder %s256, %s257
      %p266 = scmp.eq.s32.totalorder %s36, 0
      %p267 = por %p265, %p266
      %p268 = scmp.ne.s32.totalorder %s256, %s257
      %p269 = scmp.eq.s32.totalorder %s37, 1
      %p270 = por %p268, %p269
      %p272 = scmp.ne.s32.totalorder %s257, %s271
      %p273 = scmp.eq.s32.totalorder %s37, 0
      %p274 = por %p272, %p273
      %s276 = sadd.s32 %s275, 1
      %p279 = scmp.eq.s32.totalorder %s31, 1
      %p280 = scmp.ne.s32.totalorder %s275, %s277
      %p281 = scmp.eq.s32.totalorder %s31, 0
      %p282 = por %p280, %p281
      %p283 = scmp.ne.s32.totalorder %s275, %s277
      %p284 = scmp.eq.s32.totalorder %s36, 1
      %p285 = por %p283, %p284
      %p286 = scmp.ne.s32.totalorder %s277, %s278
      %p287 = scmp.eq.s32.totalorder %s36, 0
      %p288 = por %p286, %p287
      %p289 = scmp.ne.s32.totalorder %s277, %s278
      %p290 = scmp.eq.s32.totalorder %s37, 1
      %p291 = por %p289, %p290
      %p293 = scmp.ne.s32.totalorder %s278, %s292
      %p294 = scmp.eq.s32.totalorder %s37, 0
      %p295 = por %p293, %p294
      %s297 = sadd.s32 %s296, 1
      %p300 = scmp.eq.s32.totalorder %s31, 1
      %p301 = scmp.ne.s32.totalorder %s296, %s298
      %p302 = scmp.eq.s32.totalorder %s31, 0
      %p303 = por %p301, %p302
      %p304 = scmp.ne.s32.totalorder %s296, %s298
      %p305 = scmp.eq.s32.totalorder %s36, 1
      %p306 = por %p304, %p305
      %p307 = scmp.ne.s32.totalorder %s298, %s299
      %p308 = scmp.eq.s32.totalorder %s36, 0
      %p309 = por %p307, %p308
      %p310 = scmp.ne.s32.totalorder %s298, %s299
      %p311 = scmp.eq.s32.totalorder %s37, 1
      %p312 = por %p310, %p311
      %p314 = scmp.ne.s32.totalorder %s299, %s313
      %p315 = scmp.eq.s32.totalorder %s37, 0
      %p316 = por %p314, %p315
      %s318 = sadd.s32 %s317, 1
      %p321 = scmp.eq.s32.totalorder %s31, 1
      %p322 = scmp.ne.s32.totalorder %s317, %s319
      %p323 = scmp.eq.s32.totalorder %s31, 0
      %p324 = por %p322, %p323
      %p325 = scmp.ne.s32.totalorder %s317, %s319
      %p326 = scmp.eq.s32.totalorder %s36, 1
      %p327 = por %p325, %p326
      %p328 = scmp.ne.s32.totalorder %s319, %s320
      %p329 = scmp.eq.s32.totalorder %s36, 0
      %p330 = por %p328, %p329
      %p331 = scmp.ne.s32.totalorder %s319, %s320
      %p332 = scmp.eq.s32.totalorder %s37, 1
      %p333 = por %p331, %p332
      %p335 = scmp.ne.s32.totalorder %s320, %s334
      %p336 = scmp.eq.s32.totalorder %s37, 0
      %p337 = por %p335, %p336
      %s339 = sadd.s32 %s338, 1
      %p342 = scmp.eq.s32.totalorder %s31, 1
      %p343 = scmp.ne.s32.totalorder %s338, %s340
      %p344 = scmp.eq.s32.totalorder %s31, 0
      %p345 = por %p343, %p344
      %p346 = scmp.ne.s32.totalorder %s338, %s340
      %p347 = scmp.eq.s32.totalorder %s36, 1
      %p348 = por %p346, %p347
      %p349 = scmp.ne.s32.totalorder %s340, %s341
      %p350 = scmp.eq.s32.totalorder %s36, 0
      %p351 = por %p349, %p350
      %p352 = scmp.ne.s32.totalorder %s340, %s341
      %p353 = scmp.eq.s32.totalorder %s37, 1
      %p354 = por %p352, %p353
      %p356 = scmp.ne.s32.totalorder %s341, %s355
      %p357 = scmp.eq.s32.totalorder %s37, 0
      %p358 = por %p356, %p357
      %s360 = sadd.s32 %s359, 1
      %p363 = scmp.eq.s32.totalorder %s31, 1
      %p364 = scmp.ne.s32.totalorder %s359, %s361
      %p365 = scmp.eq.s32.totalorder %s31, 0
      %p366 = por %p364, %p365
      %p367 = scmp.ne.s32.totalorder %s359, %s361
      %p368 = scmp.eq.s32.totalorder %s36, 1
      %p369 = por %p367, %p368
      %p370 = scmp.ne.s32.totalorder %s361, %s362
      %p371 = scmp.eq.s32.totalorder %s36, 0
      %p372 = por %p370, %p371
      %p373 = scmp.ne.s32.totalorder %s361, %s362
      %p374 = scmp.eq.s32.totalorder %s37, 1
      %p375 = por %p373, %p374
      %p377 = scmp.ne.s32.totalorder %s362, %s376
      %p378 = scmp.eq.s32.totalorder %s37, 0
      %p379 = por %p377, %p378
      %s381 = sadd.s32 %s380, 1
      %p384 = scmp.eq.s32.totalorder %s31, 1
      %p385 = scmp.ne.s32.totalorder %s380, %s382
      %p386 = scmp.eq.s32.totalorder %s31, 0
      %p387 = por %p385, %p386
      %p388 = scmp.ne.s32.totalorder %s380, %s382
      %p389 = scmp.eq.s32.totalorder %s36, 1
      %p390 = por %p388, %p389
      %p391 = scmp.ne.s32.totalorder %s382, %s383
      %p392 = scmp.eq.s32.totalorder %s36, 0
      %p393 = por %p391, %p392
      %p394 = scmp.ne.s32.totalorder %s382, %s383
      %p395 = scmp.eq.s32.totalorder %s37, 1
      %p396 = por %p394, %p395
      %p398 = scmp.ne.s32.totalorder %s383, %s397
      %p399 = scmp.eq.s32.totalorder %s37, 0
      %p400 = por %p398, %p399
      %s402 = sadd.s32 %s401, 1
      %p405 = scmp.eq.s32.totalorder %s31, 1
      %p406 = scmp.ne.s32.totalorder %s401, %s403
      %p407 = scmp.eq.s32.totalorder %s31, 0
      %p408 = por %p406, %p407
      %p409 = scmp.ne.s32.totalorder %s401, %s403
      %p410 = scmp.eq.s32.totalorder %s36, 1
      %p411 = por %p409, %p410
      %p412 = scmp.ne.s32.totalorder %s403, %s404
      %p413 = scmp.eq.s32.totalorder %s36, 0
      %p414 = por %p412, %p413
      %p415 = scmp.ne.s32.totalorder %s403, %s404
      %p416 = scmp.eq.s32.totalorder %s37, 1
      %p417 = por %p415, %p416
      %p419 = scmp.ne.s32.totalorder %s404, %s418
      %p420 = scmp.eq.s32.totalorder %s37, 0
      %p421 = por %p419, %p420
      %s423 = sadd.s32 %s422, 1
      %p426 = scmp.eq.s32.totalorder %s31, 1
      %p427 = scmp.ne.s32.totalorder %s422, %s424
      %p428 = scmp.eq.s32.totalorder %s31, 0
      %p429 = por %p427, %p428
      %p430 = scmp.ne.s32.totalorder %s422, %s424
      %p431 = scmp.eq.s32.totalorder %s36, 1
      %p432 = por %p430, %p431
      %p433 = scmp.ne.s32.totalorder %s424, %s425
      %p434 = scmp.eq.s32.totalorder %s36, 0
      %p435 = por %p433, %p434
      %p436 = scmp.ne.s32.totalorder %s424, %s425
      %p437 = scmp.eq.s32.totalorder %s37, 1
      %p438 = por %p436, %p437
      %p440 = scmp.ne.s32.totalorder %s425, %s439
      %p441 = scmp.eq.s32.totalorder %s37, 0
      %p442 = por %p440, %p441
      %s443 = ssub.s32 %s31, %s38
      %p444 = scmp.eq.s32.totalorder %s443, 0
      %s446 = sadd.s32 %s445, 1
      %s447 = scalar_select %p444, %s445, %s446
      %p450 = pneg %p444
      %p451 = scmp.eq.s32.totalorder %s31, 1
      %p452 = por %p450, %p451
      %p453 = scmp.ne.s32.totalorder %s445, %s448
      %p454 = scmp.eq.s32.totalorder %s31, 0
      %p455 = por %p453, %p454
      %p456 = scmp.ne.s32.totalorder %s445, %s448
      %p457 = scmp.eq.s32.totalorder %s36, 1
      %p458 = por %p456, %p457
      %p459 = scmp.ne.s32.totalorder %s448, %s449
      %p460 = scmp.eq.s32.totalorder %s36, 0
      %p461 = por %p459, %p460
      %p462 = scmp.ne.s32.totalorder %s448, %s449
      %p463 = scmp.eq.s32.totalorder %s37, 1
      %p464 = por %p462, %p463
      %p466 = scmp.ne.s32.totalorder %s449, %s465
      %p467 = scmp.eq.s32.totalorder %s37, 0
      %p468 = por %p466, %p467
      %p469 = scmp.le.s32.totalorder 1, %s31
      %p470 = scmp.lt.s32.totalorder %s31, 3
      %p471 = pnand %p469, %p470
      %p472 = pneg %p471
      // Predicated region
      $region9: #{mnist_net_forward.1} parent=5 // pred_check
        _
      $region10: #{mnist_net_forward.1} parent=5 // pred_check_branch
        %474 = sbr.rel (%p471) target = $region12
      $region11: #{mnist_net_forward.1} parent=5 // pred_region
        %s475 = ssub.s32 %s31, 1
        // Predicated region
        $region13: #{mnist_net_forward.1} parent=11 // pred_check
          %p476 = pneg %p78
        $region14: #{mnist_net_forward.1} parent=11 // pred_check_branch
          %478 = sbr.rel (%p476) target = $region16
        $region15: #{mnist_net_forward.1} parent=11 // pred_region
          %s480 = ssub.s32 1536, 1536
          %481 = vsyncadd [#allocation3], %s480
          %s482 = sshll.u32 [#allocation2], 4
          %s483 = int_to_ptr.vmem [resolvable:$true] %s482
          %488 = dma.hbm_to_vmem [thread:$0]  %s1, 1536, %s483, [#allocation3], 128, 128, 8
        $region16: #{mnist_net_forward.1} parent=11 // pred_fallthru
          _
        // Predicated region
        $region17: #{mnist_net_forward.1} parent=11 // pred_check
          %p489 = pneg %p99
        $region18: #{mnist_net_forward.1} parent=11 // pred_check_branch
          %491 = sbr.rel (%p489) target = $region20
        $region19: #{mnist_net_forward.1} parent=11 // pred_region
          %s493 = ssub.s32 1536, 1536
          %494 = vsyncadd [#allocation6], %s493
          %s495 = sshll.u32 [#allocation5], 4
          %s496 = int_to_ptr.vmem [resolvable:$true] %s495
          %501 = dma.hbm_to_vmem [thread:$0]  %s2, 1536, %s496, [#allocation6], 128, 128, 8
        $region20: #{mnist_net_forward.1} parent=11 // pred_fallthru
          _
        // Predicated region
        $region21: #{mnist_net_forward.1} parent=11 // pred_check
          %p502 = pneg %p120
        $region22: #{mnist_net_forward.1} parent=11 // pred_check_branch
          %504 = sbr.rel (%p502) target = $region24
        $region23: #{mnist_net_forward.1} parent=11 // pred_region
          _
        $region24: #{mnist_net_forward.1} parent=11 // pred_fallthru
          _
        // Predicated region
        $region25: #{mnist_net_forward.1} parent=11 // pred_check
          %p505 = pneg %p141
        $region26: #{mnist_net_forward.1} parent=11 // pred_check_branch
          %507 = sbr.rel (%p505) target = $region28
        $region27: #{mnist_net_forward.1} parent=11 // pred_region
          _
        $region28: #{mnist_net_forward.1} parent=11 // pred_fallthru
          _
        // Predicated region
        $region29: #{mnist_net_forward.1} parent=11 // pred_check
          %p508 = pneg %p162
        $region30: #{mnist_net_forward.1} parent=11 // pred_check_branch
          %510 = sbr.rel (%p508) target = $region32
        $region31: #{mnist_net_forward.1} parent=11 // pred_region
          _
        $region32: #{mnist_net_forward.1} parent=11 // pred_fallthru
          _
        // Predicated region
        $region33: #{mnist_net_forward.1} parent=11 // pred_check
          %p511 = pneg %p183
        $region34: #{mnist_net_forward.1} parent=11 // pred_check_branch
          %513 = sbr.rel (%p511) target = $region36
        $region35: #{mnist_net_forward.1} parent=11 // pred_region
          _
        $region36: #{mnist_net_forward.1} parent=11 // pred_fallthru
          _
        // Predicated region
        $region37: #{mnist_net_forward.1} parent=11 // pred_check
          %p514 = pneg %p204
        $region38: #{mnist_net_forward.1} parent=11 // pred_check_branch
          %516 = sbr.rel (%p514) target = $region40
        $region39: #{mnist_net_forward.1} parent=11 // pred_region
          _
        $region40: #{mnist_net_forward.1} parent=11 // pred_fallthru
          _
        // Predicated region
        $region41: #{mnist_net_forward.1} parent=11 // pred_check
          %p517 = pneg %p225
        $region42: #{mnist_net_forward.1} parent=11 // pred_check_branch
          %519 = sbr.rel (%p517) target = $region44
        $region43: #{mnist_net_forward.1} parent=11 // pred_region
          _
        $region44: #{mnist_net_forward.1} parent=11 // pred_fallthru
          _
        // Predicated region
        $region45: #{mnist_net_forward.1} parent=11 // pred_check
          %p520 = pneg %p246
        $region46: #{mnist_net_forward.1} parent=11 // pred_check_branch
          %522 = sbr.rel (%p520) target = $region48
        $region47: #{mnist_net_forward.1} parent=11 // pred_region
          _
        $region48: #{mnist_net_forward.1} parent=11 // pred_fallthru
          _
        // Predicated region
        $region49: #{mnist_net_forward.1} parent=11 // pred_check
          %p523 = pneg %p267
        $region50: #{mnist_net_forward.1} parent=11 // pred_check_branch
          %525 = sbr.rel (%p523) target = $region52
        $region51: #{mnist_net_forward.1} parent=11 // pred_region
          _
        $region52: #{mnist_net_forward.1} parent=11 // pred_fallthru
          _
        // Predicated region
        $region53: #{mnist_net_forward.1} parent=11 // pred_check
          %p526 = pneg %p288
        $region54: #{mnist_net_forward.1} parent=11 // pred_check_branch
          %528 = sbr.rel (%p526) target = $region56
        $region55: #{mnist_net_forward.1} parent=11 // pred_region
          _
        $region56: #{mnist_net_forward.1} parent=11 // pred_fallthru
          _
        // Predicated region
        $region57: #{mnist_net_forward.1} parent=11 // pred_check
          %p529 = pneg %p309
        $region58: #{mnist_net_forward.1} parent=11 // pred_check_branch
          %531 = sbr.rel (%p529) target = $region60
        $region59: #{mnist_net_forward.1} parent=11 // pred_region
          _
        $region60: #{mnist_net_forward.1} parent=11 // pred_fallthru
          _
        // Predicated region
        $region61: #{mnist_net_forward.1} parent=11 // pred_check
          %p532 = pneg %p330
        $region62: #{mnist_net_forward.1} parent=11 // pred_check_branch
          %534 = sbr.rel (%p532) target = $region64
        $region63: #{mnist_net_forward.1} parent=11 // pred_region
          _
        $region64: #{mnist_net_forward.1} parent=11 // pred_fallthru
          _
        // Predicated region
        $region65: #{mnist_net_forward.1} parent=11 // pred_check
          %p535 = pneg %p351
        $region66: #{mnist_net_forward.1} parent=11 // pred_check_branch
          %537 = sbr.rel (%p535) target = $region68
        $region67: #{mnist_net_forward.1} parent=11 // pred_region
          _
        $region68: #{mnist_net_forward.1} parent=11 // pred_fallthru
          _
        // Predicated region
        $region69: #{mnist_net_forward.1} parent=11 // pred_check
          %p538 = pneg %p372
        $region70: #{mnist_net_forward.1} parent=11 // pred_check_branch
          %540 = sbr.rel (%p538) target = $region72
        $region71: #{mnist_net_forward.1} parent=11 // pred_region
          %s542 = ssub.s32 2048, 2048
          %543 = vsyncadd [#allocation6], %s542
          %s544 = sshll.u32 [#allocation7], 4
          %s545 = int_to_ptr.vmem [resolvable:$true] %s544
          %550 = dma.hbm_to_vmem [thread:$0]  %s15, 2048, %s545, [#allocation6], 64, 64, 4
        $region72: #{mnist_net_forward.1} parent=11 // pred_fallthru
          _
        // Predicated region
        $region73: #{mnist_net_forward.1} parent=11 // pred_check
          %p551 = pneg %p393
        $region74: #{mnist_net_forward.1} parent=11 // pred_check_branch
          %553 = sbr.rel (%p551) target = $region76
        $region75: #{mnist_net_forward.1} parent=11 // pred_region
          _
        $region76: #{mnist_net_forward.1} parent=11 // pred_fallthru
          _
        // Predicated region
        $region77: #{mnist_net_forward.1} parent=11 // pred_check
          %p554 = pneg %p414
        $region78: #{mnist_net_forward.1} parent=11 // pred_check_branch
          %556 = sbr.rel (%p554) target = $region80
        $region79: #{mnist_net_forward.1} parent=11 // pred_region
          %s558 = ssub.s32 1024, 1024
          %559 = vsyncadd [#allocation9], %s558
          %s560 = sshll.u32 [#allocation8], 4
          %s561 = int_to_ptr.vmem [resolvable:$true] %s560
          %566 = dma.hbm_to_vmem [thread:$0]  %s17, 1024, %s561, [#allocation9], 64, 64, 4
        $region80: #{mnist_net_forward.1} parent=11 // pred_fallthru
          _
        // Predicated region
        $region81: #{mnist_net_forward.1} parent=11 // pred_check
          %p567 = pneg %p435
        $region82: #{mnist_net_forward.1} parent=11 // pred_check_branch
          %569 = sbr.rel (%p567) target = $region84
        $region83: #{mnist_net_forward.1} parent=11 // pred_region
          _
        $region84: #{mnist_net_forward.1} parent=11 // pred_fallthru
          _
      $region12: #{mnist_net_forward.1} parent=5 // pred_fallthru
        _
      %p570 = scmp.lt.s32.totalorder %s31, 2
      // Predicated region
      $region85: #{mnist_net_forward.1} parent=5 // pred_check
        %p571 = pneg %p570
      $region86: #{mnist_net_forward.1} parent=5 // pred_check_branch
        %573 = sbr.rel (%p571) target = $region88
      $region87: #{mnist_net_forward.1} parent=5 // pred_region
        // Predicated region
        $region89: #{mnist_net_forward.1} parent=87 // pred_check
          %p574 = pneg %p51
        $region90: #{mnist_net_forward.1} parent=87 // pred_check_branch
          %576 = sbr.rel (%p574) target = $region92
        $region91: #{mnist_net_forward.1} parent=87 // pred_region
          %p577 = scmp.lt.s32.totalorder %s31, 1
          %s578 = scalar_select %p577, %s31, 1
          %s579 = smul.addr %s578, 4
          %s580 = smul.addr %s579, 4
          %s581 = scalar_lea.vmem %s0, %s580
        $region92: #{mnist_net_forward.1} parent=87 // pred_fallthru
          _
      $region88: #{mnist_net_forward.1} parent=5 // pred_fallthru
        _
      %p582 = scmp.le.s32.totalorder 1, %s31
      %p583 = scmp.lt.s32.totalorder %s31, 3
      %p584 = pnand %p582, %p583
      %p585 = pneg %p584
      // Predicated region
      $region93: #{mnist_net_forward.1} parent=5 // pred_check
        _
      $region94: #{mnist_net_forward.1} parent=5 // pred_check_branch
        %587 = sbr.rel (%p584) target = $region96
      $region95: #{mnist_net_forward.1} parent=5 // pred_region
        %s588 = ssub.s32 %s31, 1
        // Predicated region
        $region97: #{mnist_net_forward.1} parent=95 // pred_check
          %p589 = pneg %p78
        $region98: #{mnist_net_forward.1} parent=95 // pred_check_branch
          %591 = sbr.rel (%p589) target = $region100
        $region99: #{mnist_net_forward.1} parent=95 // pred_region
          %592 = dma.done [#allocation3], 1536
        $region100: #{mnist_net_forward.1} parent=95 // pred_fallthru
          _
        // Predicated region
        $region101: #{mnist_net_forward.1} parent=95 // pred_check
          %p593 = pneg %p99
        $region102: #{mnist_net_forward.1} parent=95 // pred_check_branch
          %595 = sbr.rel (%p593) target = $region104
        $region103: #{mnist_net_forward.1} parent=95 // pred_region
          %596 = dma.done [#allocation6], 1536
        $region104: #{mnist_net_forward.1} parent=95 // pred_fallthru
          _
        // Predicated region
        $region105: #{mnist_net_forward.1} parent=95 // pred_check
          %p597 = pneg %p372
        $region106: #{mnist_net_forward.1} parent=95 // pred_check_branch
          %599 = sbr.rel (%p597) target = $region108
        $region107: #{mnist_net_forward.1} parent=95 // pred_region
          %600 = dma.done [#allocation6], 2048
        $region108: #{mnist_net_forward.1} parent=95 // pred_fallthru
          _
        // Predicated region
        $region109: #{mnist_net_forward.1} parent=95 // pred_check
          %p601 = pneg %p414
        $region110: #{mnist_net_forward.1} parent=95 // pred_check_branch
          %603 = sbr.rel (%p601) target = $region112
        $region111: #{mnist_net_forward.1} parent=95 // pred_region
          %604 = dma.done [#allocation9], 1024
        $region112: #{mnist_net_forward.1} parent=95 // pred_fallthru
          _
        %p605 = scmp.lt.s32.totalorder %s36, 1
        %s606 = scalar_select %p605, %s36, 1
        %s607 = smul.addr %s606, 4
        %s608 = smul.addr %s607, 4
        %s609 = scalar_lea.vmem %s0, %s608
        %p610 = pneg %p57
        %p611 = pneg %p54
        %p612 = pneg %p78
        %p613 = pneg %p75
        %p614 = pneg %p99
        %p615 = pneg %p96
        %p616 = pneg %p120
        %p617 = pneg %p117
        %p618 = pneg %p141
        %p619 = pneg %p138
        %p620 = pneg %p162
        %p621 = pneg %p159
        %p622 = pneg %p183
        %p623 = pneg %p180
        %p624 = pneg %p204
        %p625 = pneg %p201
        %p626 = pneg %p225
        %p627 = pneg %p222
        %p628 = pneg %p246
        %p629 = pneg %p243
        %p630 = pneg %p267
        %p631 = pneg %p264
        %p632 = pneg %p288
        %p633 = pneg %p285
        %p634 = pneg %p309
        %p635 = pneg %p306
        %p636 = pneg %p330
        %p637 = pneg %p327
        %p638 = pneg %p351
        %p639 = pneg %p348
        %p640 = pneg %p372
        %p641 = pneg %p369
        %p642 = pneg %p393
        %p643 = pneg %p390
        %p644 = pneg %p414
        %p645 = pneg %p411
        %p646 = pneg %p435
        %p647 = pneg %p432
        %p648 = pneg %p461
        %p649 = pneg %p458
        %s650 = sand.u32 %s448, 1
        %s651 = scalar_lea.sflag [#allocation4], %s650
        %s652 = sand.u32 %s448, 1
        %s653 = scalar_lea.vmem [#allocation10], %s652
        %p654 = scmp.lt.s32.totalorder %s36, 1
        %s655 = scalar_select %p654, %s36, 1
        %s656 = smul.addr %s655, 4
        %s657 = smul.addr %s656, 4
        %s658 = scalar_lea.vmem %s0, %s657
        %v660 = vlaneseq
        %v661 = vshrl.u32 %v660, 7
        %v662 = vadd.s32 %v661, 8
        %v663 = vlaneseq
        %v664 = vand.u32 %v663, 127
        %v665 = vmul.u32 %v661, 2
        %v666 = vmul.u32 %v662, 2
        %vm667 = vcmp.eq.s32.totalorder %v664, %v665
        %vm668 = vcmp.eq.s32.totalorder %v664, %v666
        %v669 = vsel %vm667, 1.0, 0.0
        %v670 = vsel %vm668, 1.0, 0.0
        %v671 = vpack.c.bf16 %v670, %v669
        %v672 = vadd.s32 %v665, 1
        %v673 = vadd.s32 %v666, 1
        %vm674 = vcmp.eq.s32.totalorder %v664, %v672
        %vm675 = vcmp.eq.s32.totalorder %v664, %v673
        %v676 = vsel %vm674, 1.0, 0.0
        %v677 = vsel %vm675, 1.0, 0.0
        %v678 = vpack.c.bf16 %v677, %v676
        %v679 = vld [vmem:[%s658] sm:$0xf]
        %v680 = vld [vmem:[%s658 + $0x4] sm:$0xf]
        %v681 = vld [vmem:[%s658 + $0x8] sm:$0xf]
        %v682 = vld [vmem:[%s658 + $0xc] sm:$0x7]
        %v683 = vld [vmem:[#allocation2] sm:$0xff]
        %v684 = vld [vmem:[#allocation2 + $0x8] sm:$0xff]
        %v685 = vld [vmem:[#allocation2 + $0x10] sm:$0xff]
        %v686 = vld [vmem:[#allocation2 + $0x18] sm:$0xff]
        %v687 = vld [vmem:[#allocation2 + $0x20] sm:$0xff]
        %v688 = vld [vmem:[#allocation2 + $0x28] sm:$0xff]
        %v689 = vld [vmem:[#allocation2 + $0x30] sm:$0xff]
        %v690 = vld [vmem:[#allocation2 + $0x38] sm:$0xff]
        %v691 = vld [vmem:[#allocation2 + $0x40] sm:$0xff]
        %v692 = vld [vmem:[#allocation2 + $0x48] sm:$0xff]
        %v693 = vld [vmem:[#allocation2 + $0x50] sm:$0xff]
        %v694 = vld [vmem:[#allocation2 + $0x58] sm:$0x11]
        %v695 = vld [vmem:[#allocation5] sm:$0xff]
        %v696 = vld [vmem:[#allocation5 + $0x8] sm:$0xff]
        %v697 = vld [vmem:[#allocation5 + $0x10] sm:$0xff]
        %v698 = vld [vmem:[#allocation5 + $0x18] sm:$0xff]
        %v699 = vld [vmem:[#allocation5 + $0x20] sm:$0xff]
        %v700 = vld [vmem:[#allocation5 + $0x28] sm:$0xff]
        %v701 = vld [vmem:[#allocation5 + $0x30] sm:$0xff]
        %v702 = vld [vmem:[#allocation5 + $0x38] sm:$0xff]
        %v703 = vld [vmem:[#allocation5 + $0x40] sm:$0xff]
        %v704 = vld [vmem:[#allocation5 + $0x48] sm:$0xff]
        %v705 = vld [vmem:[#allocation5 + $0x50] sm:$0xff]
        %v706 = vld [vmem:[#allocation5 + $0x58] sm:$0x11]
        %v711 = vunpack.c.l.b16 %v679
        %v712 = vunpack.c.l.b16 %v680
        %v713 = vunpack.c.l.b16 %v681
        %v714 = vunpack.c.l.b16 %v682
        %v715 = vpack.c.b16 %v712, %v711
        %v716 = vpack.c.b16 %v714, %v713
        %vm717 = vsmask.f32 7424
        %v719 = vshrl.u32 %v715, 16
        %v721 = vshll.u32 %v715, 16
        %v723 = vrot.slane %v721, 1
        %v724 = vor.u32 %v719, %v723
        %v726 = vshll.u32 %v716, 16
        %v728 = vrot.slane %v726, 1
        %v729 = vsel %vm717, %v724, %v728
        %v730 = vshrl.u32 %v716, 16
        %v732 = vor.u32 %v730, %v728
        %v745 = vunpack.c.l.b16 %v695
        %v746 = vunpack.c.h.b16 %v695
        %v747 = vunpack.c.l.b16 %v696
        %v748 = vunpack.c.h.b16 %v696
        %v749 = vunpack.c.l.b16 %v697
        %v750 = vunpack.c.h.b16 %v697
        %v751 = vunpack.c.l.b16 %v698
        %v752 = vunpack.c.h.b16 %v698
        %v753 = vunpack.c.l.b16 %v699
        %v754 = vunpack.c.h.b16 %v699
        %v755 = vunpack.c.l.b16 %v700
        %v756 = vunpack.c.h.b16 %v700
        %v757 = vunpack.c.l.b16 %v701
        %v758 = vunpack.c.h.b16 %v701
        %v759 = vunpack.c.l.b16 %v702
        %v760 = vunpack.c.h.b16 %v702
        %v761 = vunpack.c.l.b16 %v703
        %v762 = vunpack.c.h.b16 %v703
        %v763 = vunpack.c.l.b16 %v704
        %v764 = vunpack.c.h.b16 %v704
        %v765 = vunpack.c.l.b16 %v705
        %v766 = vunpack.c.h.b16 %v705
        %v767 = vunpack.c.l.b16 %v706
        %v768 = vunpack.c.h.b16 %v706
        %v769 = vpack.c.b16 %v747, %v745
        %v770 = vpack.c.b16 %v748, %v746
        %v771 = vpack.c.b16 %v751, %v749
        %v772 = vpack.c.b16 %v752, %v750
        %v773 = vpack.c.b16 %v755, %v753
        %v774 = vpack.c.b16 %v756, %v754
        %v775 = vpack.c.b16 %v759, %v757
        %v776 = vpack.c.b16 %v760, %v758
        %v777 = vpack.c.b16 %v763, %v761
        %v778 = vpack.c.b16 %v764, %v762
        %v779 = vpack.c.b16 %v767, %v765
        %v780 = vpack.c.b16 %v768, %v766
        %vm791 = vcmask 736256
        %v793 = vsel %vm791, %v729, 0
        %v796 = vsel %vm791, %v732, 0
        %vm798 = vcmask 1044480
        %v800 = vsel %vm798, %v779, 0
        %v803 = vsel %vm798, %v780, 0
        %805 = vmatprep.subr.bf16.mxu0 %v770
        %806 = vmatpush1.bf16.msra.mxu0 %v769
        %807 = vmatprep.subr.bf16.mxu0 %v772
        %808 = vmatpush1.bf16.msra.mxu0 %v771
        %809 = vmatprep.subr.bf16.mxu0 %v774
        %810 = vmatpush1.bf16.msra.mxu0 %v773
        %811 = vmatprep.subr.bf16.mxu0 %v776
        %812 = vmatpush1.bf16.msra.mxu0 %v775
        %813 = vmatprep.subr.bf16.mxu0 %v778
        %814 = vmatpush1.bf16.msra.mxu0 %v777
        %815 = vmatprep.subr.bf16.mxu0 %v803
        %816 = vmatpush1.bf16.msra.mxu0 %v800
        %817 = vmatprep.subr.bf16.mxu0 0
        %818 = vmatpush1.bf16.msra.mxu0 0
        %819 = vmatprep.subr.bf16.mxu0 0
        %820 = vmatpush1.bf16.msra.mxu0 0
        %821 = vmatprep.subr.bf16.mxu0 0
        %822 = vmatpush1.bf16.msra.mxu0 0
        %823 = vmatprep.subr.bf16.mxu0 0
        %824 = vmatpush1.bf16.msra.mxu0 0
        %825 = vmatprep.subr.bf16.mxu0 0
        %826 = vmatpush1.bf16.msra.mxu0 0
        %827 = vmatprep.subr.bf16.mxu0 0
        %828 = vmatpush1.bf16.msra.mxu0 0
        %829 = vmatprep.subr.bf16.mxu0 0
        %830 = vmatpush1.bf16.msra.mxu0 0
        %831 = vmatprep.subr.bf16.mxu0 0
        %832 = vmatpush1.bf16.msra.mxu0 0
        %833 = vmatprep.subr.bf16.mxu0 0
        %834 = vmatpush1.bf16.msra.mxu0 0
        %835 = vmatprep.subr.bf16.mxu0 0
        %836 = vmatpush1.bf16.msra.mxu0 0
        %837 = vmatprep.mubr.bf16.mxu0 0
        %838 = vmatmul.mubr.bf16.gmra.mrb[0].mxu0 %v793
        %v839 = vpop.f32.mrb[0].mxu0
        %v840 = vadd.f32 0.0, %v839
        %v841 = vpop.f32.mrb[0].mxu0
        %v842 = vadd.f32 0.0, %v841
        %v843 = vpop.f32.mrb[0].mxu0
        %v844 = vadd.f32 0.0, %v843
        %v845 = vpop.f32.mrb[0].mxu0
        %v846 = vadd.f32 0.0, %v845
        %847 = vmatprep.mubr.bf16.mxu0 0
        %848 = vmatmul.mubr.bf16.gmra.mrb[0].mxu0 %v796
        %v849 = vpop.f32.mrb[0].mxu0
        %v850 = vadd.f32 0.0, %v849
        %v851 = vpop.f32.mrb[0].mxu0
        %v852 = vadd.f32 0.0, %v851
        %v853 = vpop.f32.mrb[0].mxu0
        %v854 = vadd.f32 0.0, %v853
        %v855 = vpop.f32.mrb[0].mxu0
        %v856 = vadd.f32 0.0, %v855
        %857 = vdwg.mxu0
        %v870 = vunpack.c.l.b16 %v683
        %v871 = vunpack.c.h.b16 %v683
        %v872 = vunpack.c.l.b16 %v684
        %v873 = vunpack.c.h.b16 %v684
        %v874 = vunpack.c.l.b16 %v685
        %v875 = vunpack.c.h.b16 %v685
        %v876 = vunpack.c.l.b16 %v686
        %v877 = vunpack.c.h.b16 %v686
        %v878 = vunpack.c.l.b16 %v687
        %v879 = vunpack.c.h.b16 %v687
        %v880 = vunpack.c.l.b16 %v688
        %v881 = vunpack.c.h.b16 %v688
        %v882 = vunpack.c.l.b16 %v689
        %v883 = vunpack.c.h.b16 %v689
        %v884 = vunpack.c.l.b16 %v690
        %v885 = vunpack.c.h.b16 %v690
        %v886 = vunpack.c.l.b16 %v691
        %v887 = vunpack.c.h.b16 %v691
        %v888 = vunpack.c.l.b16 %v692
        %v889 = vunpack.c.h.b16 %v692
        %v890 = vunpack.c.l.b16 %v693
        %v891 = vunpack.c.h.b16 %v693
        %v892 = vunpack.c.l.b16 %v694
        %v893 = vunpack.c.h.b16 %v694
        %v894 = vpack.c.b16 %v872, %v870
        %v895 = vpack.c.b16 %v873, %v871
        %v896 = vpack.c.b16 %v876, %v874
        %v897 = vpack.c.b16 %v877, %v875
        %v898 = vpack.c.b16 %v880, %v878
        %v899 = vpack.c.b16 %v881, %v879
        %v900 = vpack.c.b16 %v884, %v882
        %v901 = vpack.c.b16 %v885, %v883
        %v902 = vpack.c.b16 %v888, %v886
        %v903 = vpack.c.b16 %v889, %v887
        %v904 = vpack.c.b16 %v892, %v890
        %v905 = vpack.c.b16 %v893, %v891
        %v916 = vsel %vm791, %v715, 0
        %v918 = vsel %vm791, %v716, 0
        %v921 = vsel %vm798, %v904, 0
        %v924 = vsel %vm798, %v905, 0
        %926 = vmatprep.subr.bf16.mxu0 %v895
        %927 = vmatpush1.bf16.msra.mxu0 %v894
        %928 = vmatprep.subr.bf16.mxu0 %v897
        %929 = vmatpush1.bf16.msra.mxu0 %v896
        %930 = vmatprep.subr.bf16.mxu0 %v899
        %931 = vmatpush1.bf16.msra.mxu0 %v898
        %932 = vmatprep.subr.bf16.mxu0 %v901
        %933 = vmatpush1.bf16.msra.mxu0 %v900
        %934 = vmatprep.subr.bf16.mxu0 %v903
        %935 = vmatpush1.bf16.msra.mxu0 %v902
        %936 = vmatprep.subr.bf16.mxu0 %v924
        %937 = vmatpush1.bf16.msra.mxu0 %v921
        %938 = vmatprep.subr.bf16.mxu0 0
        %939 = vmatpush1.bf16.msra.mxu0 0
        %940 = vmatprep.subr.bf16.mxu0 0
        %941 = vmatpush1.bf16.msra.mxu0 0
        %942 = vmatprep.subr.bf16.mxu0 0
        %943 = vmatpush1.bf16.msra.mxu0 0
        %944 = vmatprep.subr.bf16.mxu0 0
        %945 = vmatpush1.bf16.msra.mxu0 0
        %946 = vmatprep.subr.bf16.mxu0 0
        %947 = vmatpush1.bf16.msra.mxu0 0
        %948 = vmatprep.subr.bf16.mxu0 0
        %949 = vmatpush1.bf16.msra.mxu0 0
        %950 = vmatprep.subr.bf16.mxu0 0
        %951 = vmatpush1.bf16.msra.mxu0 0
        %952 = vmatprep.subr.bf16.mxu0 0
        %953 = vmatpush1.bf16.msra.mxu0 0
        %954 = vmatprep.subr.bf16.mxu0 0
        %955 = vmatpush1.bf16.msra.mxu0 0
        %956 = vmatprep.subr.bf16.mxu0 0
        %957 = vmatpush1.bf16.msra.mxu0 0
        %958 = vmatprep.mubr.bf16.mxu0 0
        %959 = vmatmul.mubr.bf16.gmra.mrb[0].mxu0 %v916
        %v960 = vpop.f32.mrb[0].mxu0
        %v961 = vadd.f32 %v840, %v960
        %v962 = vpop.f32.mrb[0].mxu0
        %v963 = vadd.f32 %v842, %v962
        %v964 = vpop.f32.mrb[0].mxu0
        %v965 = vadd.f32 %v844, %v964
        %v966 = vpop.f32.mrb[0].mxu0
        %v967 = vadd.f32 %v846, %v966
        %968 = vmatprep.mubr.bf16.mxu0 0
        %969 = vmatmul.mubr.bf16.gmra.mrb[0].mxu0 %v918
        %v970 = vpop.f32.mrb[0].mxu0
        %v971 = vadd.f32 %v850, %v970
        %v972 = vpop.f32.mrb[0].mxu0
        %v973 = vadd.f32 %v852, %v972
        %v974 = vpop.f32.mrb[0].mxu0
        %v975 = vadd.f32 %v854, %v974
        %v976 = vpop.f32.mrb[0].mxu0
        %v977 = vadd.f32 %v856, %v976
        %978 = vdwg.mxu0
        %v979 = vld [vmem:[%s3] sm:$0x3]
        %v981 = vlaneseq
        %v982 = vshrl.u32 %v981, 7
        %v983 = vsub.s32 0, %v982
        %v984 = vrot.slane %v979, %v983
        %v985 = vlaneseq
        %v986 = vshrl.u32 %v985, 7
        %v987 = vsub.s32 1, %v986
        %v988 = vrot.slane %v979, %v987
        %v991 = vadd.f32 %v961, %v984
        %v992 = vadd.f32 %v963, %v988
        %v993 = vadd.f32 %v965, %v984
        %v994 = vadd.f32 %v967, %v988
        %v995 = vadd.f32 %v971, %v984
        %v996 = vadd.f32 %v973, %v988
        %v997 = vadd.f32 %v975, %v984
        %v998 = vadd.f32 %v977, %v988
        %v999 = vmax.f32 %v991, 0.0
        %v1000 = vmax.f32 %v992, 0.0
        %v1001 = vmax.f32 %v993, 0.0
        %v1002 = vmax.f32 %v994, 0.0
        %v1003 = vmax.f32 %v995, 0.0
        %v1004 = vmax.f32 %v996, 0.0
        %v1005 = vmax.f32 %v997, 0.0
        %v1006 = vmax.f32 %v998, 0.0
        %1015 = vrot.lane.b32.xlu0 %v999, 8
        %v1016 = vpop.permute.xlu0 %1015
        %1017 = vrot.lane.b32.xlu0 %v1000, 8
        %v1018 = vpop.permute.xlu0 %1017
        %1019 = vrot.lane.b32.xlu0 %v1001, 8
        %v1020 = vpop.permute.xlu0 %1019
        %1021 = vrot.lane.b32.xlu0 %v1002, 8
        %v1022 = vpop.permute.xlu0 %1021
        %1023 = vrot.lane.b32.xlu0 %v1003, 8
        %v1024 = vpop.permute.xlu0 %1023
        %1025 = vrot.lane.b32.xlu0 %v1004, 8
        %v1026 = vpop.permute.xlu0 %1025
        %1027 = vrot.lane.b32.xlu0 %v1005, 8
        %v1028 = vpop.permute.xlu0 %1027
        %1029 = vrot.lane.b32.xlu0 %v1006, 8
        %v1030 = vpop.permute.xlu0 %1029
        %vm1031 = vcmask 64512
        %v1032 = vsel %vm1031, %v1016, %v1018
        %v1033 = vsel %vm1031, %v1020, %v1022
        %v1034 = vsel %vm1031, %v1024, %v1026
        %v1035 = vsel %vm1031, %v1028, %v1030
        %v1044 = vsel %vm1031, 0.0, %v1016
        %v1045 = vsel %vm1031, 0.0, %v1020
        %v1046 = vsel %vm1031, 0.0, %v1024
        %v1047 = vsel %vm1031, 0.0, %v1028
        %vm1048 = vcmask 916480
        %v1049 = vsel %vm1048, %v1032, 0.0
        %v1050 = vsel %vm1048, %v1033, 0.0
        %v1051 = vsel %vm1048, %v1034, 0.0
        %v1052 = vsel %vm1048, %v1035, 0.0
        %vm1061 = vcmask 1040384
        %v1062 = vrot.slane %v1044, 7
        %v1063 = vrot.slane %v1049, 7
        %v1064 = vrot.slane %v1045, 7
        %v1065 = vsel %vm1061, %v1062, %v1064
        %v1066 = vrot.slane %v1050, 7
        %v1067 = vsel %vm1061, %v1063, %v1066
        %v1068 = vrot.slane %v1046, 7
        %v1069 = vsel %vm1061, %v1064, %v1068
        %v1070 = vrot.slane %v1051, 7
        %v1071 = vsel %vm1061, %v1066, %v1070
        %v1072 = vrot.slane %v1047, 7
        %v1073 = vsel %vm1061, %v1068, %v1072
        %v1074 = vrot.slane %v1052, 7
        %v1075 = vsel %vm1061, %v1070, %v1074
        %v1084 = vsel %vm1061, 0.0, %v1062
        %v1085 = vsel %vm1061, 0.0, %v1063
        %vm1086 = vcmask 1045504
        %v1087 = vsel %vm1086, %v1073, 0.0
        %v1088 = vsel %vm1086, %v1075, 0.0
        %v1089 = vpack.c.bf16 %v1065, %v1084
        %v1090 = vpack.c.bf16 %v1067, %v1085
        %v1091 = vpack.c.bf16 %v1087, %v1069
        %v1092 = vpack.c.bf16 %v1088, %v1071
        %vm1093 = vcmask 252928
        %v1095 = vsel %vm1093, %v671, 0
        %vm1097 = vcmask 1046528
        %vm1098 = vcmask 1047552
        %v1099 = vsel %vm1097, 4294967295, 65535
        %v1100 = vsel %vm1098, %v1099, 0
        %v1102 = vand.u32 %v1091, %v1100
        %v1105 = vand.u32 %v1092, %v1100
        %1107 = vmatprep.subr.bf16.mxu0 %v1090
        %1108 = vmatpush1.bf16.msra.mxu0 %v1089
        %1109 = vmatprep.subr.bf16.mxu0 %v1105
        %1110 = vmatpush1.bf16.msra.mxu0 %v1102
        %1111 = vmatprep.subr.bf16.mxu0 0
        %1112 = vmatpush1.bf16.msra.mxu0 0
        %1113 = vmatprep.subr.bf16.mxu0 0
        %1114 = vmatpush1.bf16.msra.mxu0 0
        %1115 = vmatprep.subr.bf16.mxu0 0
        %1116 = vmatpush1.bf16.msra.mxu0 0
        %1117 = vmatprep.subr.bf16.mxu0 0
        %1118 = vmatpush1.bf16.msra.mxu0 0
        %1119 = vmatprep.subr.bf16.mxu0 0
        %1120 = vmatpush1.bf16.msra.mxu0 0
        %1121 = vmatprep.subr.bf16.mxu0 0
        %1122 = vmatpush1.bf16.msra.mxu0 0
        %1123 = vmatprep.subr.bf16.mxu0 0
        %1124 = vmatpush1.bf16.msra.mxu0 0
        %1125 = vmatprep.subr.bf16.mxu0 0
        %1126 = vmatpush1.bf16.msra.mxu0 0
        %1127 = vmatprep.subr.bf16.mxu0 0
        %1128 = vmatpush1.bf16.msra.mxu0 0
        %1129 = vmatprep.subr.bf16.mxu0 0
        %1130 = vmatpush1.bf16.msra.mxu0 0
        %1131 = vmatprep.subr.bf16.mxu0 0
        %1132 = vmatpush1.bf16.msra.mxu0 0
        %1133 = vmatprep.subr.bf16.mxu0 0
        %1134 = vmatpush1.bf16.msra.mxu0 0
        %1135 = vmatprep.subr.bf16.mxu0 0
        %1136 = vmatpush1.bf16.msra.mxu0 0
        %1137 = vmatprep.subr.bf16.mxu0 0
        %1138 = vmatpush1.bf16.msra.mxu0 0
        %1139 = vmatprep.mubr.bf16.mxu0 0
        %1140 = vmatmul.mubr.bf16.gmra.mrb[0].mxu0 %v1095
        %v1141 = vpop.f32.mrb[0].mxu0
        %v1142 = vadd.f32 0.0, %v1141
        %v1143 = vpop.f32.mrb[0].mxu0
        %v1144 = vadd.f32 0.0, %v1143
        %v1145 = vpop.f32.mrb[0].mxu0
        %v1146 = vadd.f32 0.0, %v1145
        %v1147 = vpop.f32.mrb[0].mxu0
        %v1148 = vadd.f32 0.0, %v1147
        %1149 = vdwg.mxu0
        %v1150 = vpack.c.bf16 %v1146, %v1142
        %v1151 = vpack.c.bf16 %v1148, %v1144
        %v1153 = vsel %vm1093, %v678, 0
        %1155 = vmatprep.subr.bf16.mxu0 %v1090
        %1156 = vmatpush1.bf16.msra.mxu0 %v1089
        %1157 = vmatprep.subr.bf16.mxu0 %v1105
        %1158 = vmatpush1.bf16.msra.mxu0 %v1102
        %1159 = vmatprep.subr.bf16.mxu0 0
        %1160 = vmatpush1.bf16.msra.mxu0 0
        %1161 = vmatprep.subr.bf16.mxu0 0
        %1162 = vmatpush1.bf16.msra.mxu0 0
        %1163 = vmatprep.subr.bf16.mxu0 0
        %1164 = vmatpush1.bf16.msra.mxu0 0
        %1165 = vmatprep.subr.bf16.mxu0 0
        %1166 = vmatpush1.bf16.msra.mxu0 0
        %1167 = vmatprep.subr.bf16.mxu0 0
        %1168 = vmatpush1.bf16.msra.mxu0 0
        %1169 = vmatprep.subr.bf16.mxu0 0
        %1170 = vmatpush1.bf16.msra.mxu0 0
        %1171 = vmatprep.subr.bf16.mxu0 0
        %1172 = vmatpush1.bf16.msra.mxu0 0
        %1173 = vmatprep.subr.bf16.mxu0 0
        %1174 = vmatpush1.bf16.msra.mxu0 0
        %1175 = vmatprep.subr.bf16.mxu0 0
        %1176 = vmatpush1.bf16.msra.mxu0 0
        %1177 = vmatprep.subr.bf16.mxu0 0
        %1178 = vmatpush1.bf16.msra.mxu0 0
        %1179 = vmatprep.subr.bf16.mxu0 0
        %1180 = vmatpush1.bf16.msra.mxu0 0
        %1181 = vmatprep.subr.bf16.mxu0 0
        %1182 = vmatpush1.bf16.msra.mxu0 0
        %1183 = vmatprep.subr.bf16.mxu0 0
        %1184 = vmatpush1.bf16.msra.mxu0 0
        %1185 = vmatprep.subr.bf16.mxu0 0
        %1186 = vmatpush1.bf16.msra.mxu0 0
        %1187 = vmatprep.mubr.bf16.mxu0 0
        %1188 = vmatmul.mubr.bf16.gmra.mrb[0].mxu0 %v1153
        %v1189 = vpop.f32.mrb[0].mxu0
        %v1190 = vadd.f32 0.0, %v1189
        %v1191 = vpop.f32.mrb[0].mxu0
        %v1192 = vadd.f32 0.0, %v1191
        %v1193 = vpop.f32.mrb[0].mxu0
        %v1194 = vadd.f32 0.0, %v1193
        %v1195 = vpop.f32.mrb[0].mxu0
        %v1196 = vadd.f32 0.0, %v1195
        %1197 = vdwg.mxu0
        %v1198 = vpack.c.bf16 %v1194, %v1190
        %v1199 = vpack.c.bf16 %v1196, %v1192
        %v1200 = vld [vmem:[%s4] sm:$0xff]
        %v1201 = vld [vmem:[%s4 + $0x8] sm:$0xff]
        %v1202 = vld [vmem:[%s4 + $0x10] sm:$0xff]
        %v1203 = vld [vmem:[%s4 + $0x18] sm:$0xff]
        %v1204 = vld [vmem:[%s4 + $0x20] sm:$0xff]
        %v1205 = vld [vmem:[%s4 + $0x28] sm:$0xff]
        %v1206 = vld [vmem:[%s4 + $0x30] sm:$0xff]
        %v1207 = vld [vmem:[%s4 + $0x38] sm:$0xff]
        %v1208 = vld [vmem:[%s4 + $0x40] sm:$0xff]
        %v1209 = vld [vmem:[%s4 + $0x48] sm:$0xff]
        %v1210 = vld [vmem:[%s4 + $0x50] sm:$0xff]
        %v1211 = vld [vmem:[%s4 + $0x58] sm:$0xff]
        %v1212 = vld [vmem:[%s4 + $0x60] sm:$0xff]
        %v1213 = vld [vmem:[%s4 + $0x68] sm:$0xff]
        %v1214 = vld [vmem:[%s4 + $0x70] sm:$0xff]
        %v1215 = vld [vmem:[%s4 + $0x78] sm:$0xff]
        %v1216 = vld [vmem:[%s4 + $0x80] sm:$0xff]
        %v1217 = vld [vmem:[%s4 + $0x88] sm:$0xff]
        %v1218 = vld [vmem:[%s4 + $0x90] sm:$0xff]
        %v1219 = vld [vmem:[%s4 + $0x98] sm:$0xff]
        %v1220 = vld [vmem:[%s4 + $0xa0] sm:$0xff]
        %v1221 = vld [vmem:[%s4 + $0xa8] sm:$0xff]
        %v1222 = vld [vmem:[%s4 + $0xb0] sm:$0xff]
        %v1223 = vld [vmem:[%s4 + $0xb8] sm:$0xff]
        %v1224 = vld [vmem:[%s4 + $0xc0] sm:$0xff]
        %v1225 = vld [vmem:[%s4 + $0xc8] sm:$0xff]
        %v1226 = vld [vmem:[%s4 + $0xd0] sm:$0xff]
        %v1227 = vld [vmem:[%s4 + $0xd8] sm:$0xff]
        %v1228 = vld [vmem:[%s4 + $0xe0] sm:$0xff]
        %v1229 = vld [vmem:[%s4 + $0xe8] sm:$0xff]
        %v1230 = vld [vmem:[%s4 + $0xf0] sm:$0xff]
        %v1231 = vld [vmem:[%s5] sm:$0xff]
        %v1232 = vld [vmem:[%s5 + $0x8] sm:$0xff]
        %v1233 = vld [vmem:[%s5 + $0x10] sm:$0xff]
        %v1234 = vld [vmem:[%s5 + $0x18] sm:$0xff]
        %v1235 = vld [vmem:[%s5 + $0x20] sm:$0xff]
        %v1236 = vld [vmem:[%s5 + $0x28] sm:$0xff]
        %v1237 = vld [vmem:[%s5 + $0x30] sm:$0xff]
        %v1238 = vld [vmem:[%s5 + $0x38] sm:$0xff]
        %v1239 = vld [vmem:[%s5 + $0x40] sm:$0xff]
        %v1240 = vld [vmem:[%s5 + $0x48] sm:$0xff]
        %v1241 = vld [vmem:[%s5 + $0x50] sm:$0xff]
        %v1242 = vld [vmem:[%s5 + $0x58] sm:$0xff]
        %v1243 = vld [vmem:[%s5 + $0x60] sm:$0xff]
        %v1244 = vld [vmem:[%s5 + $0x68] sm:$0xff]
        %v1245 = vld [vmem:[%s5 + $0x70] sm:$0xff]
        %v1246 = vld [vmem:[%s5 + $0x78] sm:$0xff]
        %v1247 = vld [vmem:[%s5 + $0x80] sm:$0xff]
        %v1248 = vld [vmem:[%s5 + $0x88] sm:$0xff]
        %v1249 = vld [vmem:[%s5 + $0x90] sm:$0xff]
        %v1250 = vld [vmem:[%s5 + $0x98] sm:$0xff]
        %v1251 = vld [vmem:[%s5 + $0xa0] sm:$0xff]
        %v1252 = vld [vmem:[%s5 + $0xa8] sm:$0xff]
        %v1253 = vld [vmem:[%s5 + $0xb0] sm:$0xff]
        %v1254 = vld [vmem:[%s5 + $0xb8] sm:$0xff]
        %v1255 = vld [vmem:[%s5 + $0xc0] sm:$0xff]
        %v1256 = vld [vmem:[%s5 + $0xc8] sm:$0xff]
        %v1257 = vld [vmem:[%s5 + $0xd0] sm:$0xff]
        %v1258 = vld [vmem:[%s5 + $0xd8] sm:$0xff]
        %v1259 = vld [vmem:[%s5 + $0xe0] sm:$0xff]
        %v1260 = vld [vmem:[%s5 + $0xe8] sm:$0xff]
        %v1261 = vld [vmem:[%s5 + $0xf0] sm:$0xff]
        %v1293 = vunpack.c.l.b16 %v1231
        %v1294 = vunpack.c.h.b16 %v1231
        %v1295 = vunpack.c.l.b16 %v1232
        %v1296 = vunpack.c.h.b16 %v1232
        %v1297 = vunpack.c.l.b16 %v1233
        %v1298 = vunpack.c.h.b16 %v1233
        %v1299 = vunpack.c.l.b16 %v1234
        %v1300 = vunpack.c.h.b16 %v1234
        %v1301 = vunpack.c.l.b16 %v1235
        %v1302 = vunpack.c.h.b16 %v1235
        %v1303 = vunpack.c.l.b16 %v1236
        %v1304 = vunpack.c.h.b16 %v1236
        %v1305 = vunpack.c.l.b16 %v1237
        %v1306 = vunpack.c.h.b16 %v1237
        %v1307 = vunpack.c.l.b16 %v1238
        %v1308 = vunpack.c.h.b16 %v1238
        %v1309 = vunpack.c.l.b16 %v1239
        %v1310 = vunpack.c.h.b16 %v1239
        %v1311 = vunpack.c.l.b16 %v1240
        %v1312 = vunpack.c.h.b16 %v1240
        %v1313 = vunpack.c.l.b16 %v1241
        %v1314 = vunpack.c.h.b16 %v1241
        %v1315 = vunpack.c.l.b16 %v1242
        %v1316 = vunpack.c.h.b16 %v1242
        %v1317 = vunpack.c.l.b16 %v1243
        %v1318 = vunpack.c.h.b16 %v1243
        %v1319 = vunpack.c.l.b16 %v1244
        %v1320 = vunpack.c.h.b16 %v1244
        %v1321 = vunpack.c.l.b16 %v1245
        %v1322 = vunpack.c.h.b16 %v1245
        %v1323 = vunpack.c.l.b16 %v1246
        %v1324 = vunpack.c.h.b16 %v1246
        %v1325 = vunpack.c.l.b16 %v1247
        %v1326 = vunpack.c.h.b16 %v1247
        %v1327 = vunpack.c.l.b16 %v1248
        %v1328 = vunpack.c.h.b16 %v1248
        %v1329 = vunpack.c.l.b16 %v1249
        %v1330 = vunpack.c.h.b16 %v1249
        %v1331 = vunpack.c.l.b16 %v1250
        %v1332 = vunpack.c.h.b16 %v1250
        %v1333 = vunpack.c.l.b16 %v1251
        %v1334 = vunpack.c.h.b16 %v1251
        %v1335 = vunpack.c.l.b16 %v1252
        %v1336 = vunpack.c.h.b16 %v1252
        %v1337 = vunpack.c.l.b16 %v1253
        %v1338 = vunpack.c.h.b16 %v1253
        %v1339 = vunpack.c.l.b16 %v1254
        %v1340 = vunpack.c.h.b16 %v1254
        %v1341 = vunpack.c.l.b16 %v1255
        %v1342 = vunpack.c.h.b16 %v1255
        %v1343 = vunpack.c.l.b16 %v1256
        %v1344 = vunpack.c.h.b16 %v1256
        %v1345 = vunpack.c.l.b16 %v1257
        %v1346 = vunpack.c.h.b16 %v1257
        %v1347 = vunpack.c.l.b16 %v1258
        %v1348 = vunpack.c.h.b16 %v1258
        %v1349 = vunpack.c.l.b16 %v1259
        %v1350 = vunpack.c.h.b16 %v1259
        %v1351 = vunpack.c.l.b16 %v1260
        %v1352 = vunpack.c.h.b16 %v1260
        %v1353 = vunpack.c.l.b16 %v1261
        %v1354 = vunpack.c.h.b16 %v1261
        %v1355 = vpack.c.b16 %v1295, %v1293
        %v1356 = vpack.c.b16 %v1296, %v1294
        %v1357 = vpack.c.b16 %v1299, %v1297
        %v1358 = vpack.c.b16 %v1300, %v1298
        %v1359 = vpack.c.b16 %v1303, %v1301
        %v1360 = vpack.c.b16 %v1304, %v1302
        %v1361 = vpack.c.b16 %v1307, %v1305
        %v1362 = vpack.c.b16 %v1308, %v1306
        %v1363 = vpack.c.b16 %v1311, %v1309
        %v1364 = vpack.c.b16 %v1312, %v1310
        %v1365 = vpack.c.b16 %v1315, %v1313
        %v1366 = vpack.c.b16 %v1316, %v1314
        %v1367 = vpack.c.b16 %v1319, %v1317
        %v1368 = vpack.c.b16 %v1320, %v1318
        %v1369 = vpack.c.b16 %v1323, %v1321
        %v1370 = vpack.c.b16 %v1324, %v1322
        %v1371 = vpack.c.b16 %v1327, %v1325
        %v1372 = vpack.c.b16 %v1328, %v1326
        %v1373 = vpack.c.b16 %v1331, %v1329
        %v1374 = vpack.c.b16 %v1332, %v1330
        %v1375 = vpack.c.b16 %v1335, %v1333
        %v1376 = vpack.c.b16 %v1336, %v1334
        %v1377 = vpack.c.b16 %v1339, %v1337
        %v1378 = vpack.c.b16 %v1340, %v1338
        %v1379 = vpack.c.b16 %v1343, %v1341
        %v1380 = vpack.c.b16 %v1344, %v1342
        %v1381 = vpack.c.b16 %v1347, %v1345
        %v1382 = vpack.c.b16 %v1348, %v1346
        %v1383 = vpack.c.b16 %v1351, %v1349
        %v1384 = vpack.c.b16 %v1352, %v1350
        %v1385 = vpack.c.b16 %v1353, %v1353
        %v1386 = vpack.c.b16 %v1354, %v1354
        %vm1417 = vcmask 982016
        %v1419 = vsel %vm1417, %v1199, 0
        %vm1421 = vcmask 1043456
        %v1423 = vsel %vm1421, %v1385, 0
        %v1426 = vsel %vm1421, %v1386, 0
        %1428 = vmatprep.subr.bf16.mxu0 %v1356
        %1429 = vmatpush1.bf16.msra.mxu0 %v1355
        %1430 = vmatprep.subr.bf16.mxu0 %v1358
        %1431 = vmatpush1.bf16.msra.mxu0 %v1357
        %1432 = vmatprep.subr.bf16.mxu0 %v1360
        %1433 = vmatpush1.bf16.msra.mxu0 %v1359
        %1434 = vmatprep.subr.bf16.mxu0 %v1362
        %1435 = vmatpush1.bf16.msra.mxu0 %v1361
        %1436 = vmatprep.subr.bf16.mxu0 %v1364
        %1437 = vmatpush1.bf16.msra.mxu0 %v1363
        %1438 = vmatprep.subr.bf16.mxu0 %v1366
        %1439 = vmatpush1.bf16.msra.mxu0 %v1365
        %1440 = vmatprep.subr.bf16.mxu0 %v1368
        %1441 = vmatpush1.bf16.msra.mxu0 %v1367
        %1442 = vmatprep.subr.bf16.mxu0 %v1370
        %1443 = vmatpush1.bf16.msra.mxu0 %v1369
        %1444 = vmatprep.subr.bf16.mxu0 %v1372
        %1445 = vmatpush1.bf16.msra.mxu0 %v1371
        %1446 = vmatprep.subr.bf16.mxu0 %v1374
        %1447 = vmatpush1.bf16.msra.mxu0 %v1373
        %1448 = vmatprep.subr.bf16.mxu0 %v1376
        %1449 = vmatpush1.bf16.msra.mxu0 %v1375
        %1450 = vmatprep.subr.bf16.mxu0 %v1378
        %1451 = vmatpush1.bf16.msra.mxu0 %v1377
        %1452 = vmatprep.subr.bf16.mxu0 %v1380
        %1453 = vmatpush1.bf16.msra.mxu0 %v1379
        %1454 = vmatprep.subr.bf16.mxu0 %v1382
        %1455 = vmatpush1.bf16.msra.mxu0 %v1381
        %1456 = vmatprep.subr.bf16.mxu0 %v1384
        %1457 = vmatpush1.bf16.msra.mxu0 %v1383
        %1458 = vmatprep.subr.bf16.mxu0 %v1426
        %1459 = vmatpush1.bf16.msra.mxu0 %v1423
        %1460 = vmatprep.mubr.bf16.mxu0 %v1419
        %1461 = vmatmul.mubr.bf16.gmra.mrb[0].mxu0 %v1198
        %v1462 = vpop.f32.mrb[0].mxu0
        %v1463 = vadd.f32 0.0, %v1462
        %v1464 = vpop.f32.mrb[0].mxu0
        %v1465 = vadd.f32 0.0, %v1464
        %v1466 = vpop.f32.mrb[0].mxu0
        %v1467 = vadd.f32 0.0, %v1466
        %v1468 = vpop.f32.mrb[0].mxu0
        %v1469 = vadd.f32 0.0, %v1468
        %1470 = vdwg.mxu0
        %v1502 = vunpack.c.l.b16 %v1200
        %v1503 = vunpack.c.h.b16 %v1200
        %v1504 = vunpack.c.l.b16 %v1201
        %v1505 = vunpack.c.h.b16 %v1201
        %v1506 = vunpack.c.l.b16 %v1202
        %v1507 = vunpack.c.h.b16 %v1202
        %v1508 = vunpack.c.l.b16 %v1203
        %v1509 = vunpack.c.h.b16 %v1203
        %v1510 = vunpack.c.l.b16 %v1204
        %v1511 = vunpack.c.h.b16 %v1204
        %v1512 = vunpack.c.l.b16 %v1205
        %v1513 = vunpack.c.h.b16 %v1205
        %v1514 = vunpack.c.l.b16 %v1206
        %v1515 = vunpack.c.h.b16 %v1206
        %v1516 = vunpack.c.l.b16 %v1207
        %v1517 = vunpack.c.h.b16 %v1207
        %v1518 = vunpack.c.l.b16 %v1208
        %v1519 = vunpack.c.h.b16 %v1208
        %v1520 = vunpack.c.l.b16 %v1209
        %v1521 = vunpack.c.h.b16 %v1209
        %v1522 = vunpack.c.l.b16 %v1210
        %v1523 = vunpack.c.h.b16 %v1210
        %v1524 = vunpack.c.l.b16 %v1211
        %v1525 = vunpack.c.h.b16 %v1211
        %v1526 = vunpack.c.l.b16 %v1212
        %v1527 = vunpack.c.h.b16 %v1212
        %v1528 = vunpack.c.l.b16 %v1213
        %v1529 = vunpack.c.h.b16 %v1213
        %v1530 = vunpack.c.l.b16 %v1214
        %v1531 = vunpack.c.h.b16 %v1214
        %v1532 = vunpack.c.l.b16 %v1215
        %v1533 = vunpack.c.h.b16 %v1215
        %v1534 = vunpack.c.l.b16 %v1216
        %v1535 = vunpack.c.h.b16 %v1216
        %v1536 = vunpack.c.l.b16 %v1217
        %v1537 = vunpack.c.h.b16 %v1217
        %v1538 = vunpack.c.l.b16 %v1218
        %v1539 = vunpack.c.h.b16 %v1218
        %v1540 = vunpack.c.l.b16 %v1219
        %v1541 = vunpack.c.h.b16 %v1219
        %v1542 = vunpack.c.l.b16 %v1220
        %v1543 = vunpack.c.h.b16 %v1220
        %v1544 = vunpack.c.l.b16 %v1221
        %v1545 = vunpack.c.h.b16 %v1221
        %v1546 = vunpack.c.l.b16 %v1222
        %v1547 = vunpack.c.h.b16 %v1222
        %v1548 = vunpack.c.l.b16 %v1223
        %v1549 = vunpack.c.h.b16 %v1223
        %v1550 = vunpack.c.l.b16 %v1224
        %v1551 = vunpack.c.h.b16 %v1224
        %v1552 = vunpack.c.l.b16 %v1225
        %v1553 = vunpack.c.h.b16 %v1225
        %v1554 = vunpack.c.l.b16 %v1226
        %v1555 = vunpack.c.h.b16 %v1226
        %v1556 = vunpack.c.l.b16 %v1227
        %v1557 = vunpack.c.h.b16 %v1227
        %v1558 = vunpack.c.l.b16 %v1228
        %v1559 = vunpack.c.h.b16 %v1228
        %v1560 = vunpack.c.l.b16 %v1229
        %v1561 = vunpack.c.h.b16 %v1229
        %v1562 = vunpack.c.l.b16 %v1230
        %v1563 = vunpack.c.h.b16 %v1230
        %v1564 = vpack.c.b16 %v1504, %v1502
        %v1565 = vpack.c.b16 %v1505, %v1503
        %v1566 = vpack.c.b16 %v1508, %v1506
        %v1567 = vpack.c.b16 %v1509, %v1507
        %v1568 = vpack.c.b16 %v1512, %v1510
        %v1569 = vpack.c.b16 %v1513, %v1511
        %v1570 = vpack.c.b16 %v1516, %v1514
        %v1571 = vpack.c.b16 %v1517, %v1515
        %v1572 = vpack.c.b16 %v1520, %v1518
        %v1573 = vpack.c.b16 %v1521, %v1519
        %v1574 = vpack.c.b16 %v1524, %v1522
        %v1575 = vpack.c.b16 %v1525, %v1523
        %v1576 = vpack.c.b16 %v1528, %v1526
        %v1577 = vpack.c.b16 %v1529, %v1527
        %v1578 = vpack.c.b16 %v1532, %v1530
        %v1579 = vpack.c.b16 %v1533, %v1531
        %v1580 = vpack.c.b16 %v1536, %v1534
        %v1581 = vpack.c.b16 %v1537, %v1535
        %v1582 = vpack.c.b16 %v1540, %v1538
        %v1583 = vpack.c.b16 %v1541, %v1539
        %v1584 = vpack.c.b16 %v1544, %v1542
        %v1585 = vpack.c.b16 %v1545, %v1543
        %v1586 = vpack.c.b16 %v1548, %v1546
        %v1587 = vpack.c.b16 %v1549, %v1547
        %v1588 = vpack.c.b16 %v1552, %v1550
        %v1589 = vpack.c.b16 %v1553, %v1551
        %v1590 = vpack.c.b16 %v1556, %v1554
        %v1591 = vpack.c.b16 %v1557, %v1555
        %v1592 = vpack.c.b16 %v1560, %v1558
        %v1593 = vpack.c.b16 %v1561, %v1559
        %v1594 = vpack.c.b16 %v1562, %v1562
        %v1595 = vpack.c.b16 %v1563, %v1563
        %v1627 = vsel %vm1417, %v1151, 0
        %v1630 = vsel %vm1421, %v1594, 0
        %v1633 = vsel %vm1421, %v1595, 0
        %1635 = vmatprep.subr.bf16.mxu0 %v1565
        %1636 = vmatpush1.bf16.msra.mxu0 %v1564
        %1637 = vmatprep.subr.bf16.mxu0 %v1567
        %1638 = vmatpush1.bf16.msra.mxu0 %v1566
        %1639 = vmatprep.subr.bf16.mxu0 %v1569
        %1640 = vmatpush1.bf16.msra.mxu0 %v1568
        %1641 = vmatprep.subr.bf16.mxu0 %v1571
        %1642 = vmatpush1.bf16.msra.mxu0 %v1570
        %1643 = vmatprep.subr.bf16.mxu0 %v1573
        %1644 = vmatpush1.bf16.msra.mxu0 %v1572
        %1645 = vmatprep.subr.bf16.mxu0 %v1575
        %1646 = vmatpush1.bf16.msra.mxu0 %v1574
        %1647 = vmatprep.subr.bf16.mxu0 %v1577
        %1648 = vmatpush1.bf16.msra.mxu0 %v1576
        %1649 = vmatprep.subr.bf16.mxu0 %v1579
        %1650 = vmatpush1.bf16.msra.mxu0 %v1578
        %1651 = vmatprep.subr.bf16.mxu0 %v1581
        %1652 = vmatpush1.bf16.msra.mxu0 %v1580
        %1653 = vmatprep.subr.bf16.mxu0 %v1583
        %1654 = vmatpush1.bf16.msra.mxu0 %v1582
        %1655 = vmatprep.subr.bf16.mxu0 %v1585
        %1656 = vmatpush1.bf16.msra.mxu0 %v1584
        %1657 = vmatprep.subr.bf16.mxu0 %v1587
        %1658 = vmatpush1.bf16.msra.mxu0 %v1586
        %1659 = vmatprep.subr.bf16.mxu0 %v1589
        %1660 = vmatpush1.bf16.msra.mxu0 %v1588
        %1661 = vmatprep.subr.bf16.mxu0 %v1591
        %1662 = vmatpush1.bf16.msra.mxu0 %v1590
        %1663 = vmatprep.subr.bf16.mxu0 %v1593
        %1664 = vmatpush1.bf16.msra.mxu0 %v1592
        %1665 = vmatprep.subr.bf16.mxu0 %v1633
        %1666 = vmatpush1.bf16.msra.mxu0 %v1630
        %1667 = vmatprep.mubr.bf16.mxu0 %v1627
        %1668 = vmatmul.mubr.bf16.gmra.mrb[0].mxu0 %v1150
        %v1669 = vpop.f32.mrb[0].mxu0
        %v1670 = vadd.f32 %v1463, %v1669
        %v1671 = vpop.f32.mrb[0].mxu0
        %v1672 = vadd.f32 %v1465, %v1671
        %v1673 = vpop.f32.mrb[0].mxu0
        %v1674 = vadd.f32 %v1467, %v1673
        %v1675 = vpop.f32.mrb[0].mxu0
        %v1676 = vadd.f32 %v1469, %v1675
        %1677 = vdwg.mxu0
        %v1678 = vld [vmem:[%s6] sm:$0x3]
        %v1680 = vlaneseq
        %v1681 = vshrl.u32 %v1680, 7
        %v1682 = vsub.s32 0, %v1681
        %v1683 = vrot.slane %v1678, %v1682
        %v1684 = vlaneseq
        %v1685 = vshrl.u32 %v1684, 7
        %v1686 = vsub.s32 1, %v1685
        %v1687 = vrot.slane %v1678, %v1686
        %v1690 = vadd.f32 %v1670, %v1683
        %v1691 = vadd.f32 %v1672, %v1687
        %v1692 = vadd.f32 %v1674, %v1683
        %v1693 = vadd.f32 %v1676, %v1687
        %v1694 = vmax.f32 %v1690, 0.0
        %v1695 = vmax.f32 %v1691, 0.0
        %v1696 = vmax.f32 %v1692, 0.0
        %v1697 = vmax.f32 %v1693, 0.0
        %1702 = vrot.lane.b32.xlu0 %v1694, 16
        %v1703 = vpop.permute.xlu0 %1702
        %1704 = vrot.lane.b32.xlu0 %v1695, 16
        %v1705 = vpop.permute.xlu0 %1704
        %1706 = vrot.lane.b32.xlu0 %v1696, 16
        %v1707 = vpop.permute.xlu0 %1706
        %1708 = vrot.lane.b32.xlu0 %v1697, 16
        %v1709 = vpop.permute.xlu0 %1708
        %vm1710 = vcmask 130048
        %v1711 = vsel %vm1710, %v1703, %v1705
        %v1712 = vsel %vm1710, %v1707, %v1709
        %v1715 = vsel %vm1710, 0.0, %v1703
        %v1716 = vsel %vm1710, 0.0, %v1707
        %v1720 = vrot.slane %v1715, 7
        %v1721 = vrot.slane %v1711, 7
        %v1722 = vrot.slane 0.0, 7
        %v1723 = vrot.slane %v1716, 7
        %v1724 = vsel %vm1061, %v1720, %v1723
        %v1725 = vrot.slane %v1712, 7
        %v1726 = vsel %vm1061, %v1721, %v1725
        %v1727 = vsel %vm1061, %v1722, %v1722
        %v1734 = vsel %vm1061, 0.0, %v1720
        %v1735 = vsel %vm1061, 0.0, %v1721
        %v1736 = vsel %vm1061, 0.0, %v1722
        %v1737 = vpack.c.bf16 %v1724, %v1734
        %v1738 = vpack.c.bf16 %v1726, %v1735
        %v1739 = vpack.c.bf16 %v1727, %v1736
        %v1740 = vpack.c.bf16 0.0, 0.0
        %v1741 = vld [vmem:[%s7] sm:$0xff]
        %v1742 = vld [vmem:[%s7 + $0x8] sm:$0xf]
        %v1743 = vld [vmem:[%s7 + $0xc] sm:$0xff]
        %v1744 = vld [vmem:[%s7 + $0x14] sm:$0xf]
        %v1745 = vld [vmem:[%s7 + $0x18] sm:$0xff]
        %v1746 = vld [vmem:[%s7 + $0x20] sm:$0xf]
        %v1747 = vld [vmem:[%s7 + $0x24] sm:$0xff]
        %v1748 = vld [vmem:[%s7 + $0x2c] sm:$0xf]
        %v1749 = vld [vmem:[%s7 + $0x30] sm:$0xff]
        %v1750 = vld [vmem:[%s7 + $0x38] sm:$0xf]
        %v1751 = vld [vmem:[%s7 + $0x3c] sm:$0xff]
        %v1752 = vld [vmem:[%s7 + $0x44] sm:$0xf]
        %v1753 = vld [vmem:[%s7 + $0x48] sm:$0xff]
        %v1754 = vld [vmem:[%s7 + $0x50] sm:$0xf]
        %v1755 = vld [vmem:[%s7 + $0x54] sm:$0xff]
        %v1756 = vld [vmem:[%s7 + $0x5c] sm:$0xf]
        %v1757 = vld [vmem:[%s7 + $0x60] sm:$0xff]
        %v1758 = vld [vmem:[%s7 + $0x68] sm:$0xf]
        %v1759 = vld [vmem:[%s7 + $0x6c] sm:$0xff]
        %v1760 = vld [vmem:[%s7 + $0x74] sm:$0xf]
        %v1761 = vld [vmem:[%s7 + $0x78] sm:$0xff]
        %v1762 = vld [vmem:[%s7 + $0x80] sm:$0xf]
        %v1763 = vld [vmem:[%s7 + $0x84] sm:$0xff]
        %v1764 = vld [vmem:[%s7 + $0x8c] sm:$0xf]
        %v1765 = vld [vmem:[%s7 + $0x90] sm:$0xff]
        %v1766 = vld [vmem:[%s7 + $0x98] sm:$0xf]
        %v1767 = vld [vmem:[%s7 + $0x9c] sm:$0xff]
        %v1768 = vld [vmem:[%s7 + $0xa4] sm:$0xf]
        %v1769 = vld [vmem:[%s7 + $0xa8] sm:$0xff]
        %v1770 = vld [vmem:[%s7 + $0xb0] sm:$0xf]
        %v1771 = vld [vmem:[%s7 + $0xb4] sm:$0xff]
        %v1772 = vld [vmem:[%s7 + $0xbc] sm:$0xf]
        %v1773 = vld [vmem:[%s7 + $0xc0] sm:$0xff]
        %v1774 = vld [vmem:[%s7 + $0xc8] sm:$0xf]
        %v1775 = vld [vmem:[%s7 + $0xcc] sm:$0xff]
        %v1776 = vld [vmem:[%s7 + $0xd4] sm:$0xf]
        %v1777 = vld [vmem:[%s7 + $0xd8] sm:$0xff]
        %v1778 = vld [vmem:[%s7 + $0xe0] sm:$0xf]
        %v1779 = vld [vmem:[%s7 + $0xe4] sm:$0xff]
        %v1780 = vld [vmem:[%s7 + $0xec] sm:$0xf]
        %v1781 = vld [vmem:[%s7 + $0xf0] sm:$0xff]
        %v1782 = vld [vmem:[%s7 + $0xf8] sm:$0xf]
        %v1783 = vld [vmem:[%s7 + $0xfc] sm:$0xff]
        %v1784 = vld [vmem:[%s7 + $0x104] sm:$0xf]
        %v1785 = vld [vmem:[%s7 + $0x108] sm:$0xff]
        %v1786 = vld [vmem:[%s7 + $0x110] sm:$0xf]
        %v1787 = vld [vmem:[%s7 + $0x114] sm:$0xff]
        %v1788 = vld [vmem:[%s7 + $0x11c] sm:$0xf]
        %v1789 = vld [vmem:[%s7 + $0x120] sm:$0xff]
        %v1790 = vld [vmem:[%s7 + $0x128] sm:$0xf]
        %v1791 = vld [vmem:[%s7 + $0x12c] sm:$0xff]
        %v1792 = vld [vmem:[%s7 + $0x134] sm:$0xf]
        %v1793 = vld [vmem:[%s7 + $0x138] sm:$0xff]
        %v1794 = vld [vmem:[%s7 + $0x140] sm:$0xf]
        %v1795 = vld [vmem:[%s7 + $0x144] sm:$0xff]
        %v1796 = vld [vmem:[%s7 + $0x14c] sm:$0xf]
        %v1797 = vld [vmem:[%s7 + $0x150] sm:$0xff]
        %v1798 = vld [vmem:[%s7 + $0x158] sm:$0xf]
        %v1799 = vld [vmem:[%s7 + $0x15c] sm:$0xff]
        %v1800 = vld [vmem:[%s7 + $0x164] sm:$0xf]
        %v1801 = vld [vmem:[%s7 + $0x168] sm:$0xff]
        %v1802 = vld [vmem:[%s7 + $0x170] sm:$0xf]
        %v1803 = vld [vmem:[%s7 + $0x174] sm:$0xff]
        %v1804 = vld [vmem:[%s7 + $0x17c] sm:$0xf]
        %v1805 = vld [vmem:[%s7 + $0x180] sm:$0xff]
        %v1806 = vld [vmem:[%s7 + $0x188] sm:$0xf]
        %v1807 = vld [vmem:[%s7 + $0x18c] sm:$0xff]
        %v1808 = vld [vmem:[%s7 + $0x194] sm:$0xf]
        %v1809 = vld [vmem:[%s8] sm:$0xff]
        %v1810 = vld [vmem:[%s8 + $0x8] sm:$0xf]
        %v1811 = vld [vmem:[%s8 + $0xc] sm:$0xff]
        %v1812 = vld [vmem:[%s8 + $0x14] sm:$0xf]
        %v1813 = vld [vmem:[%s8 + $0x18] sm:$0xff]
        %v1814 = vld [vmem:[%s8 + $0x20] sm:$0xf]
        %v1815 = vld [vmem:[%s8 + $0x24] sm:$0xff]
        %v1816 = vld [vmem:[%s8 + $0x2c] sm:$0xf]
        %v1817 = vld [vmem:[%s8 + $0x30] sm:$0xff]
        %v1818 = vld [vmem:[%s8 + $0x38] sm:$0xf]
        %v1819 = vld [vmem:[%s8 + $0x3c] sm:$0xff]
        %v1820 = vld [vmem:[%s8 + $0x44] sm:$0xf]
        %v1821 = vld [vmem:[%s8 + $0x48] sm:$0xff]
        %v1822 = vld [vmem:[%s8 + $0x50] sm:$0xf]
        %v1823 = vld [vmem:[%s8 + $0x54] sm:$0xff]
        %v1824 = vld [vmem:[%s8 + $0x5c] sm:$0xf]
        %v1825 = vld [vmem:[%s8 + $0x60] sm:$0xff]
        %v1826 = vld [vmem:[%s8 + $0x68] sm:$0xf]
        %v1827 = vld [vmem:[%s8 + $0x6c] sm:$0xff]
        %v1828 = vld [vmem:[%s8 + $0x74] sm:$0xf]
        %v1829 = vld [vmem:[%s8 + $0x78] sm:$0xff]
        %v1830 = vld [vmem:[%s8 + $0x80] sm:$0xf]
        %v1831 = vld [vmem:[%s8 + $0x84] sm:$0xff]
        %v1832 = vld [vmem:[%s8 + $0x8c] sm:$0xf]
        %v1833 = vld [vmem:[%s8 + $0x90] sm:$0xff]
        %v1834 = vld [vmem:[%s8 + $0x98] sm:$0xf]
        %v1835 = vld [vmem:[%s8 + $0x9c] sm:$0xff]
        %v1836 = vld [vmem:[%s8 + $0xa4] sm:$0xf]
        %v1837 = vld [vmem:[%s8 + $0xa8] sm:$0xff]
        %v1838 = vld [vmem:[%s8 + $0xb0] sm:$0xf]
        %v1839 = vld [vmem:[%s8 + $0xb4] sm:$0xff]
        %v1840 = vld [vmem:[%s8 + $0xbc] sm:$0xf]
        %v1841 = vld [vmem:[%s8 + $0xc0] sm:$0xff]
        %v1842 = vld [vmem:[%s8 + $0xc8] sm:$0xf]
        %v1843 = vld [vmem:[%s8 + $0xcc] sm:$0xff]
        %v1844 = vld [vmem:[%s8 + $0xd4] sm:$0xf]
        %v1845 = vld [vmem:[%s8 + $0xd8] sm:$0xff]
        %v1846 = vld [vmem:[%s8 + $0xe0] sm:$0xf]
        %v1847 = vld [vmem:[%s8 + $0xe4] sm:$0xff]
        %v1848 = vld [vmem:[%s8 + $0xec] sm:$0xf]
        %v1849 = vld [vmem:[%s8 + $0xf0] sm:$0xff]
        %v1850 = vld [vmem:[%s8 + $0xf8] sm:$0xf]
        %v1851 = vld [vmem:[%s8 + $0xfc] sm:$0xff]
        %v1852 = vld [vmem:[%s8 + $0x104] sm:$0xf]
        %v1853 = vld [vmem:[%s8 + $0x108] sm:$0xff]
        %v1854 = vld [vmem:[%s8 + $0x110] sm:$0xf]
        %v1855 = vld [vmem:[%s8 + $0x114] sm:$0xff]
        %v1856 = vld [vmem:[%s8 + $0x11c] sm:$0xf]
        %v1857 = vld [vmem:[%s8 + $0x120] sm:$0xff]
        %v1858 = vld [vmem:[%s8 + $0x128] sm:$0xf]
        %v1859 = vld [vmem:[%s8 + $0x12c] sm:$0xff]
        %v1860 = vld [vmem:[%s8 + $0x134] sm:$0xf]
        %v1861 = vld [vmem:[%s8 + $0x138] sm:$0xff]
        %v1862 = vld [vmem:[%s8 + $0x140] sm:$0xf]
        %v1863 = vld [vmem:[%s8 + $0x144] sm:$0xff]
        %v1864 = vld [vmem:[%s8 + $0x14c] sm:$0xf]
        %v1865 = vld [vmem:[%s8 + $0x150] sm:$0xff]
        %v1866 = vld [vmem:[%s8 + $0x158] sm:$0xf]
        %v1867 = vld [vmem:[%s8 + $0x15c] sm:$0xff]
        %v1868 = vld [vmem:[%s8 + $0x164] sm:$0xf]
        %v1869 = vld [vmem:[%s8 + $0x168] sm:$0xff]
        %v1870 = vld [vmem:[%s8 + $0x170] sm:$0xf]
        %v1871 = vld [vmem:[%s8 + $0x174] sm:$0xff]
        %v1872 = vld [vmem:[%s8 + $0x17c] sm:$0xf]
        %v1873 = vld [vmem:[%s8 + $0x180] sm:$0xff]
        %v1874 = vld [vmem:[%s8 + $0x188] sm:$0xf]
        %v1875 = vld [vmem:[%s8 + $0x18c] sm:$0xff]
        %v1876 = vld [vmem:[%s8 + $0x194] sm:$0xf]
        %v1878 = vshrl.u32 %v1737, 16
        %v1880 = vshll.u32 %v1737, 16
        %v1882 = vrot.slane %v1880, 1
        %v1883 = vor.u32 %v1878, %v1882
        %v1885 = vshll.u32 %v1740, 16
        %v1887 = vrot.slane %v1885, 1
        %v1888 = vsel %vm717, %v1883, %v1887
        %v1890 = vshrl.u32 %v1738, 16
        %v1892 = vshll.u32 %v1738, 16
        %v1894 = vrot.slane %v1892, 1
        %v1895 = vor.u32 %v1890, %v1894
        %v1896 = vsel %vm717, %v1895, %v1887
        %v1898 = vshrl.u32 %v1739, 16
        %v1900 = vshll.u32 %v1739, 16
        %v1902 = vrot.slane %v1900, 1
        %v1903 = vor.u32 %v1898, %v1902
        %v1904 = vsel %vm717, %v1903, %v1887
        %v1975 = vunpack.c.l.b16 %v1809
        %v1976 = vunpack.c.h.b16 %v1809
        %v1977 = vunpack.c.l.b16 %v1810
        %v1978 = vunpack.c.l.b16 %v1811
        %v1979 = vunpack.c.h.b16 %v1811
        %v1980 = vunpack.c.l.b16 %v1812
        %v1981 = vunpack.c.l.b16 %v1813
        %v1982 = vunpack.c.h.b16 %v1813
        %v1983 = vunpack.c.l.b16 %v1814
        %v1984 = vunpack.c.l.b16 %v1815
        %v1985 = vunpack.c.h.b16 %v1815
        %v1986 = vunpack.c.l.b16 %v1816
        %v1987 = vunpack.c.l.b16 %v1817
        %v1988 = vunpack.c.h.b16 %v1817
        %v1989 = vunpack.c.l.b16 %v1818
        %v1990 = vunpack.c.l.b16 %v1819
        %v1991 = vunpack.c.h.b16 %v1819
        %v1992 = vunpack.c.l.b16 %v1820
        %v1993 = vunpack.c.l.b16 %v1821
        %v1994 = vunpack.c.h.b16 %v1821
        %v1995 = vunpack.c.l.b16 %v1822
        %v1996 = vunpack.c.l.b16 %v1823
        %v1997 = vunpack.c.h.b16 %v1823
        %v1998 = vunpack.c.l.b16 %v1824
        %v1999 = vunpack.c.l.b16 %v1825
        %v2000 = vunpack.c.h.b16 %v1825
        %v2001 = vunpack.c.l.b16 %v1826
        %v2002 = vunpack.c.l.b16 %v1827
        %v2003 = vunpack.c.h.b16 %v1827
        %v2004 = vunpack.c.l.b16 %v1828
        %v2005 = vunpack.c.l.b16 %v1829
        %v2006 = vunpack.c.h.b16 %v1829
        %v2007 = vunpack.c.l.b16 %v1830
        %v2008 = vunpack.c.l.b16 %v1831
        %v2009 = vunpack.c.h.b16 %v1831
        %v2010 = vunpack.c.l.b16 %v1832
        %v2011 = vunpack.c.l.b16 %v1833
        %v2012 = vunpack.c.h.b16 %v1833
        %v2013 = vunpack.c.l.b16 %v1834
        %v2014 = vunpack.c.l.b16 %v1835
        %v2015 = vunpack.c.h.b16 %v1835
        %v2016 = vunpack.c.l.b16 %v1836
        %v2017 = vunpack.c.l.b16 %v1837
        %v2018 = vunpack.c.h.b16 %v1837
        %v2019 = vunpack.c.l.b16 %v1838
        %v2020 = vunpack.c.l.b16 %v1839
        %v2021 = vunpack.c.h.b16 %v1839
        %v2022 = vunpack.c.l.b16 %v1840
        %v2023 = vunpack.c.l.b16 %v1841
        %v2024 = vunpack.c.h.b16 %v1841
        %v2025 = vunpack.c.l.b16 %v1842
        %v2026 = vunpack.c.l.b16 %v1843
        %v2027 = vunpack.c.h.b16 %v1843
        %v2028 = vunpack.c.l.b16 %v1844
        %v2029 = vunpack.c.l.b16 %v1845
        %v2030 = vunpack.c.h.b16 %v1845
        %v2031 = vunpack.c.l.b16 %v1846
        %v2032 = vunpack.c.l.b16 %v1847
        %v2033 = vunpack.c.h.b16 %v1847
        %v2034 = vunpack.c.l.b16 %v1848
        %v2035 = vunpack.c.l.b16 %v1849
        %v2036 = vunpack.c.h.b16 %v1849
        %v2037 = vunpack.c.l.b16 %v1850
        %v2038 = vunpack.c.l.b16 %v1851
        %v2039 = vunpack.c.h.b16 %v1851
        %v2040 = vunpack.c.l.b16 %v1852
        %v2041 = vunpack.c.l.b16 %v1853
        %v2042 = vunpack.c.h.b16 %v1853
        %v2043 = vunpack.c.l.b16 %v1854
        %v2044 = vunpack.c.l.b16 %v1855
        %v2045 = vunpack.c.h.b16 %v1855
        %v2046 = vunpack.c.l.b16 %v1856
        %v2047 = vunpack.c.l.b16 %v1857
        %v2048 = vunpack.c.h.b16 %v1857
        %v2049 = vunpack.c.l.b16 %v1858
        %v2050 = vunpack.c.l.b16 %v1859
        %v2051 = vunpack.c.h.b16 %v1859
        %v2052 = vunpack.c.l.b16 %v1860
        %v2053 = vunpack.c.l.b16 %v1861
        %v2054 = vunpack.c.h.b16 %v1861
        %v2055 = vunpack.c.l.b16 %v1862
        %v2056 = vunpack.c.l.b16 %v1863
        %v2057 = vunpack.c.h.b16 %v1863
        %v2058 = vunpack.c.l.b16 %v1864
        %v2059 = vunpack.c.l.b16 %v1865
        %v2060 = vunpack.c.h.b16 %v1865
        %v2061 = vunpack.c.l.b16 %v1866
        %v2062 = vunpack.c.l.b16 %v1867
        %v2063 = vunpack.c.h.b16 %v1867
        %v2064 = vunpack.c.l.b16 %v1868
        %v2065 = vunpack.c.l.b16 %v1869
        %v2066 = vunpack.c.h.b16 %v1869
        %v2067 = vunpack.c.l.b16 %v1870
        %v2068 = vunpack.c.l.b16 %v1871
        %v2069 = vunpack.c.h.b16 %v1871
        %v2070 = vunpack.c.l.b16 %v1872
        %v2071 = vunpack.c.l.b16 %v1873
        %v2072 = vunpack.c.h.b16 %v1873
        %v2073 = vunpack.c.l.b16 %v1874
        %v2074 = vunpack.c.l.b16 %v1875
        %v2075 = vunpack.c.h.b16 %v1875
        %v2076 = vunpack.c.l.b16 %v1876
        %v2077 = vpack.c.b16 %v1978, %v1975
        %v2078 = vpack.c.b16 %v1979, %v1976
        %v2079 = vpack.c.b16 %v1980, %v1977
        %v2080 = vpack.c.b16 %v1984, %v1981
        %v2081 = vpack.c.b16 %v1985, %v1982
        %v2082 = vpack.c.b16 %v1986, %v1983
        %v2083 = vpack.c.b16 %v1990, %v1987
        %v2084 = vpack.c.b16 %v1991, %v1988
        %v2085 = vpack.c.b16 %v1992, %v1989
        %v2086 = vpack.c.b16 %v1996, %v1993
        %v2087 = vpack.c.b16 %v1997, %v1994
        %v2088 = vpack.c.b16 %v1998, %v1995
        %v2089 = vpack.c.b16 %v2002, %v1999
        %v2090 = vpack.c.b16 %v2003, %v2000
        %v2091 = vpack.c.b16 %v2004, %v2001
        %v2092 = vpack.c.b16 %v2008, %v2005
        %v2093 = vpack.c.b16 %v2009, %v2006
        %v2094 = vpack.c.b16 %v2010, %v2007
        %v2095 = vpack.c.b16 %v2014, %v2011
        %v2096 = vpack.c.b16 %v2015, %v2012
        %v2097 = vpack.c.b16 %v2016, %v2013
        %v2098 = vpack.c.b16 %v2020, %v2017
        %v2099 = vpack.c.b16 %v2021, %v2018
        %v2100 = vpack.c.b16 %v2022, %v2019
        %v2101 = vpack.c.b16 %v2026, %v2023
        %v2102 = vpack.c.b16 %v2027, %v2024
        %v2103 = vpack.c.b16 %v2028, %v2025
        %v2104 = vpack.c.b16 %v2032, %v2029
        %v2105 = vpack.c.b16 %v2033, %v2030
        %v2106 = vpack.c.b16 %v2034, %v2031
        %v2107 = vpack.c.b16 %v2038, %v2035
        %v2108 = vpack.c.b16 %v2039, %v2036
        %v2109 = vpack.c.b16 %v2040, %v2037
        %v2110 = vpack.c.b16 %v2044, %v2041
        %v2111 = vpack.c.b16 %v2045, %v2042
        %v2112 = vpack.c.b16 %v2046, %v2043
        %v2113 = vpack.c.b16 %v2050, %v2047
        %v2114 = vpack.c.b16 %v2051, %v2048
        %v2115 = vpack.c.b16 %v2052, %v2049
        %v2116 = vpack.c.b16 %v2056, %v2053
        %v2117 = vpack.c.b16 %v2057, %v2054
        %v2118 = vpack.c.b16 %v2058, %v2055
        %v2119 = vpack.c.b16 %v2062, %v2059
        %v2120 = vpack.c.b16 %v2063, %v2060
        %v2121 = vpack.c.b16 %v2064, %v2061
        %v2122 = vpack.c.b16 %v2068, %v2065
        %v2123 = vpack.c.b16 %v2069, %v2066
        %v2124 = vpack.c.b16 %v2070, %v2067
        %v2125 = vpack.c.b16 %v2074, %v2071
        %v2126 = vpack.c.b16 %v2075, %v2072
        %v2127 = vpack.c.b16 %v2076, %v2073
        %v2180 = vsel %vm1710, %v1904, 0
        %2182 = vmatprep.subr.bf16.mxu0 %v2078
        %2183 = vmatpush1.bf16.msra.mxu0 %v2077
        %2184 = vmatprep.subr.bf16.mxu0 %v2081
        %2185 = vmatpush1.bf16.msra.mxu0 %v2080
        %2186 = vmatprep.subr.bf16.mxu0 %v2084
        %2187 = vmatpush1.bf16.msra.mxu0 %v2083
        %2188 = vmatprep.subr.bf16.mxu0 %v2087
        %2189 = vmatpush1.bf16.msra.mxu0 %v2086
        %2190 = vmatprep.subr.bf16.mxu0 %v2090
        %2191 = vmatpush1.bf16.msra.mxu0 %v2089
        %2192 = vmatprep.subr.bf16.mxu0 %v2093
        %2193 = vmatpush1.bf16.msra.mxu0 %v2092
        %2194 = vmatprep.subr.bf16.mxu0 %v2096
        %2195 = vmatpush1.bf16.msra.mxu0 %v2095
        %2196 = vmatprep.subr.bf16.mxu0 %v2099
        %2197 = vmatpush1.bf16.msra.mxu0 %v2098
        %2198 = vmatprep.subr.bf16.mxu0 %v2102
        %2199 = vmatpush1.bf16.msra.mxu0 %v2101
        %2200 = vmatprep.subr.bf16.mxu0 %v2105
        %2201 = vmatpush1.bf16.msra.mxu0 %v2104
        %2202 = vmatprep.subr.bf16.mxu0 %v2108
        %2203 = vmatpush1.bf16.msra.mxu0 %v2107
        %2204 = vmatprep.subr.bf16.mxu0 %v2111
        %2205 = vmatpush1.bf16.msra.mxu0 %v2110
        %2206 = vmatprep.subr.bf16.mxu0 %v2114
        %2207 = vmatpush1.bf16.msra.mxu0 %v2113
        %2208 = vmatprep.subr.bf16.mxu0 %v2117
        %2209 = vmatpush1.bf16.msra.mxu0 %v2116
        %2210 = vmatprep.subr.bf16.mxu0 %v2120
        %2211 = vmatpush1.bf16.msra.mxu0 %v2119
        %2212 = vmatprep.subr.bf16.mxu0 %v2123
        %2213 = vmatpush1.bf16.msra.mxu0 %v2122
        %2214 = vmatprep.mubr.bf16.mxu0 %v1896
        %2215 = vmatmul.mubr.bf16.gmra.mrb[0].mxu0 %v1888
        %v2216 = vpop.f32.mrb[0].mxu0
        %v2217 = vadd.f32 0.0, %v2216
        %v2218 = vpop.f32.mrb[0].mxu0
        %v2219 = vadd.f32 0.0, %v2218
        %v2220 = vpop.f32.mrb[0].mxu0
        %v2221 = vadd.f32 0.0, %v2220
        %v2222 = vpop.f32.mrb[0].mxu0
        %v2223 = vadd.f32 0.0, %v2222
        %2224 = vdwg.mxu0
        %2225 = vmatprep.subr.bf16.mxu0 %v2126
        %2226 = vmatpush1.bf16.msra.mxu0 %v2125
        %2227 = vmatprep.subr.bf16.mxu0 0
        %2228 = vmatpush1.bf16.msra.mxu0 0
        %2229 = vmatprep.subr.bf16.mxu0 0
        %2230 = vmatpush1.bf16.msra.mxu0 0
        %2231 = vmatprep.subr.bf16.mxu0 0
        %2232 = vmatpush1.bf16.msra.mxu0 0
        %2233 = vmatprep.subr.bf16.mxu0 0
        %2234 = vmatpush1.bf16.msra.mxu0 0
        %2235 = vmatprep.subr.bf16.mxu0 0
        %2236 = vmatpush1.bf16.msra.mxu0 0
        %2237 = vmatprep.subr.bf16.mxu0 0
        %2238 = vmatpush1.bf16.msra.mxu0 0
        %2239 = vmatprep.subr.bf16.mxu0 0
        %2240 = vmatpush1.bf16.msra.mxu0 0
        %2241 = vmatprep.subr.bf16.mxu0 0
        %2242 = vmatpush1.bf16.msra.mxu0 0
        %2243 = vmatprep.subr.bf16.mxu0 0
        %2244 = vmatpush1.bf16.msra.mxu0 0
        %2245 = vmatprep.subr.bf16.mxu0 0
        %2246 = vmatpush1.bf16.msra.mxu0 0
        %2247 = vmatprep.subr.bf16.mxu0 0
        %2248 = vmatpush1.bf16.msra.mxu0 0
        %2249 = vmatprep.subr.bf16.mxu0 0
        %2250 = vmatpush1.bf16.msra.mxu0 0
        %2251 = vmatprep.subr.bf16.mxu0 0
        %2252 = vmatpush1.bf16.msra.mxu0 0
        %2253 = vmatprep.subr.bf16.mxu0 0
        %2254 = vmatpush1.bf16.msra.mxu0 0
        %2255 = vmatprep.subr.bf16.mxu0 0
        %2256 = vmatpush1.bf16.msra.mxu0 0
        %2257 = vmatprep.mubr.bf16.mxu0 0
        %2258 = vmatmul.mubr.bf16.gmra.mrb[0].mxu0 %v2180
        %v2259 = vpop.f32.mrb[0].mxu0
        %v2260 = vadd.f32 %v2217, %v2259
        %v2261 = vpop.f32.mrb[0].mxu0
        %v2262 = vadd.f32 %v2219, %v2261
        %v2263 = vpop.f32.mrb[0].mxu0
        %v2264 = vadd.f32 %v2221, %v2263
        %v2265 = vpop.f32.mrb[0].mxu0
        %v2266 = vadd.f32 %v2223, %v2265
        %2267 = vdwg.mxu0
        %2268 = vmatprep.subr.bf16.mxu0 0
        %2269 = vmatpush1.bf16.msra.mxu0 %v2079
        %2270 = vmatprep.subr.bf16.mxu0 0
        %2271 = vmatpush1.bf16.msra.mxu0 %v2082
        %2272 = vmatprep.subr.bf16.mxu0 0
        %2273 = vmatpush1.bf16.msra.mxu0 %v2085
        %2274 = vmatprep.subr.bf16.mxu0 0
        %2275 = vmatpush1.bf16.msra.mxu0 %v2088
        %2276 = vmatprep.subr.bf16.mxu0 0
        %2277 = vmatpush1.bf16.msra.mxu0 %v2091
        %2278 = vmatprep.subr.bf16.mxu0 0
        %2279 = vmatpush1.bf16.msra.mxu0 %v2094
        %2280 = vmatprep.subr.bf16.mxu0 0
        %2281 = vmatpush1.bf16.msra.mxu0 %v2097
        %2282 = vmatprep.subr.bf16.mxu0 0
        %2283 = vmatpush1.bf16.msra.mxu0 %v2100
        %2284 = vmatprep.subr.bf16.mxu0 0
        %2285 = vmatpush1.bf16.msra.mxu0 %v2103
        %2286 = vmatprep.subr.bf16.mxu0 0
        %2287 = vmatpush1.bf16.msra.mxu0 %v2106
        %2288 = vmatprep.subr.bf16.mxu0 0
        %2289 = vmatpush1.bf16.msra.mxu0 %v2109
        %2290 = vmatprep.subr.bf16.mxu0 0
        %2291 = vmatpush1.bf16.msra.mxu0 %v2112
        %2292 = vmatprep.subr.bf16.mxu0 0
        %2293 = vmatpush1.bf16.msra.mxu0 %v2115
        %2294 = vmatprep.subr.bf16.mxu0 0
        %2295 = vmatpush1.bf16.msra.mxu0 %v2118
        %2296 = vmatprep.subr.bf16.mxu0 0
        %2297 = vmatpush1.bf16.msra.mxu0 %v2121
        %2298 = vmatprep.subr.bf16.mxu0 0
        %2299 = vmatpush1.bf16.msra.mxu0 %v2124
        %2300 = vmatprep.mubr.bf16.mxu0 %v1896
        %2301 = vmatmul.mubr.bf16.gmra.mrb[0].mxu0 %v1888
        %v2302 = vpop.f32.mrb[0].mxu0
        %v2303 = vadd.f32 0.0, %v2302
        %v2304 = vpop.f32.mrb[0].mxu0
        %v2305 = vpop.f32.mrb[0].mxu0
        %v2306 = vadd.f32 0.0, %v2305
        %v2307 = vpop.f32.mrb[0].mxu0
        %2308 = vdwg.mxu0
        %2309 = vmatprep.subr.bf16.mxu0 0
        %2310 = vmatpush1.bf16.msra.mxu0 %v2127
        %2311 = vmatprep.subr.bf16.mxu0 0
        %2312 = vmatpush1.bf16.msra.mxu0 0
        %2313 = vmatprep.subr.bf16.mxu0 0
        %2314 = vmatpush1.bf16.msra.mxu0 0
        %2315 = vmatprep.subr.bf16.mxu0 0
        %2316 = vmatpush1.bf16.msra.mxu0 0
        %2317 = vmatprep.subr.bf16.mxu0 0
        %2318 = vmatpush1.bf16.msra.mxu0 0
        %2319 = vmatprep.subr.bf16.mxu0 0
        %2320 = vmatpush1.bf16.msra.mxu0 0
        %2321 = vmatprep.subr.bf16.mxu0 0
        %2322 = vmatpush1.bf16.msra.mxu0 0
        %2323 = vmatprep.subr.bf16.mxu0 0
        %2324 = vmatpush1.bf16.msra.mxu0 0
        %2325 = vmatprep.subr.bf16.mxu0 0
        %2326 = vmatpush1.bf16.msra.mxu0 0
        %2327 = vmatprep.subr.bf16.mxu0 0
        %2328 = vmatpush1.bf16.msra.mxu0 0
        %2329 = vmatprep.subr.bf16.mxu0 0
        %2330 = vmatpush1.bf16.msra.mxu0 0
        %2331 = vmatprep.subr.bf16.mxu0 0
        %2332 = vmatpush1.bf16.msra.mxu0 0
        %2333 = vmatprep.subr.bf16.mxu0 0
        %2334 = vmatpush1.bf16.msra.mxu0 0
        %2335 = vmatprep.subr.bf16.mxu0 0
        %2336 = vmatpush1.bf16.msra.mxu0 0
        %2337 = vmatprep.subr.bf16.mxu0 0
        %2338 = vmatpush1.bf16.msra.mxu0 0
        %2339 = vmatprep.subr.bf16.mxu0 0
        %2340 = vmatpush1.bf16.msra.mxu0 0
        %2341 = vmatprep.mubr.bf16.mxu0 0
        %2342 = vmatmul.mubr.bf16.gmra.mrb[0].mxu0 %v2180
        %v2343 = vpop.f32.mrb[0].mxu0
        %v2344 = vadd.f32 %v2303, %v2343
        %v2345 = vpop.f32.mrb[0].mxu0
        %v2346 = vpop.f32.mrb[0].mxu0
        %v2347 = vadd.f32 %v2306, %v2346
        %v2348 = vpop.f32.mrb[0].mxu0
        %2349 = vdwg.mxu0
        %v2418 = vunpack.c.l.b16 %v1741
        %v2419 = vunpack.c.h.b16 %v1741
        %v2420 = vunpack.c.l.b16 %v1742
        %v2421 = vunpack.c.l.b16 %v1743
        %v2422 = vunpack.c.h.b16 %v1743
        %v2423 = vunpack.c.l.b16 %v1744
        %v2424 = vunpack.c.l.b16 %v1745
        %v2425 = vunpack.c.h.b16 %v1745
        %v2426 = vunpack.c.l.b16 %v1746
        %v2427 = vunpack.c.l.b16 %v1747
        %v2428 = vunpack.c.h.b16 %v1747
        %v2429 = vunpack.c.l.b16 %v1748
        %v2430 = vunpack.c.l.b16 %v1749
        %v2431 = vunpack.c.h.b16 %v1749
        %v2432 = vunpack.c.l.b16 %v1750
        %v2433 = vunpack.c.l.b16 %v1751
        %v2434 = vunpack.c.h.b16 %v1751
        %v2435 = vunpack.c.l.b16 %v1752
        %v2436 = vunpack.c.l.b16 %v1753
        %v2437 = vunpack.c.h.b16 %v1753
        %v2438 = vunpack.c.l.b16 %v1754
        %v2439 = vunpack.c.l.b16 %v1755
        %v2440 = vunpack.c.h.b16 %v1755
        %v2441 = vunpack.c.l.b16 %v1756
        %v2442 = vunpack.c.l.b16 %v1757
        %v2443 = vunpack.c.h.b16 %v1757
        %v2444 = vunpack.c.l.b16 %v1758
        %v2445 = vunpack.c.l.b16 %v1759
        %v2446 = vunpack.c.h.b16 %v1759
        %v2447 = vunpack.c.l.b16 %v1760
        %v2448 = vunpack.c.l.b16 %v1761
        %v2449 = vunpack.c.h.b16 %v1761
        %v2450 = vunpack.c.l.b16 %v1762
        %v2451 = vunpack.c.l.b16 %v1763
        %v2452 = vunpack.c.h.b16 %v1763
        %v2453 = vunpack.c.l.b16 %v1764
        %v2454 = vunpack.c.l.b16 %v1765
        %v2455 = vunpack.c.h.b16 %v1765
        %v2456 = vunpack.c.l.b16 %v1766
        %v2457 = vunpack.c.l.b16 %v1767
        %v2458 = vunpack.c.h.b16 %v1767
        %v2459 = vunpack.c.l.b16 %v1768
        %v2460 = vunpack.c.l.b16 %v1769
        %v2461 = vunpack.c.h.b16 %v1769
        %v2462 = vunpack.c.l.b16 %v1770
        %v2463 = vunpack.c.l.b16 %v1771
        %v2464 = vunpack.c.h.b16 %v1771
        %v2465 = vunpack.c.l.b16 %v1772
        %v2466 = vunpack.c.l.b16 %v1773
        %v2467 = vunpack.c.h.b16 %v1773
        %v2468 = vunpack.c.l.b16 %v1774
        %v2469 = vunpack.c.l.b16 %v1775
        %v2470 = vunpack.c.h.b16 %v1775
        %v2471 = vunpack.c.l.b16 %v1776
        %v2472 = vunpack.c.l.b16 %v1777
        %v2473 = vunpack.c.h.b16 %v1777
        %v2474 = vunpack.c.l.b16 %v1778
        %v2475 = vunpack.c.l.b16 %v1779
        %v2476 = vunpack.c.h.b16 %v1779
        %v2477 = vunpack.c.l.b16 %v1780
        %v2478 = vunpack.c.l.b16 %v1781
        %v2479 = vunpack.c.h.b16 %v1781
        %v2480 = vunpack.c.l.b16 %v1782
        %v2481 = vunpack.c.l.b16 %v1783
        %v2482 = vunpack.c.h.b16 %v1783
        %v2483 = vunpack.c.l.b16 %v1784
        %v2484 = vunpack.c.l.b16 %v1785
        %v2485 = vunpack.c.h.b16 %v1785
        %v2486 = vunpack.c.l.b16 %v1786
        %v2487 = vunpack.c.l.b16 %v1787
        %v2488 = vunpack.c.h.b16 %v1787
        %v2489 = vunpack.c.l.b16 %v1788
        %v2490 = vunpack.c.l.b16 %v1789
        %v2491 = vunpack.c.h.b16 %v1789
        %v2492 = vunpack.c.l.b16 %v1790
        %v2493 = vunpack.c.l.b16 %v1791
        %v2494 = vunpack.c.h.b16 %v1791
        %v2495 = vunpack.c.l.b16 %v1792
        %v2496 = vunpack.c.l.b16 %v1793
        %v2497 = vunpack.c.h.b16 %v1793
        %v2498 = vunpack.c.l.b16 %v1794
        %v2499 = vunpack.c.l.b16 %v1795
        %v2500 = vunpack.c.h.b16 %v1795
        %v2501 = vunpack.c.l.b16 %v1796
        %v2502 = vunpack.c.l.b16 %v1797
        %v2503 = vunpack.c.h.b16 %v1797
        %v2504 = vunpack.c.l.b16 %v1798
        %v2505 = vunpack.c.l.b16 %v1799
        %v2506 = vunpack.c.h.b16 %v1799
        %v2507 = vunpack.c.l.b16 %v1800
        %v2508 = vunpack.c.l.b16 %v1801
        %v2509 = vunpack.c.h.b16 %v1801
        %v2510 = vunpack.c.l.b16 %v1802
        %v2511 = vunpack.c.l.b16 %v1803
        %v2512 = vunpack.c.h.b16 %v1803
        %v2513 = vunpack.c.l.b16 %v1804
        %v2514 = vunpack.c.l.b16 %v1805
        %v2515 = vunpack.c.h.b16 %v1805
        %v2516 = vunpack.c.l.b16 %v1806
        %v2517 = vunpack.c.l.b16 %v1807
        %v2518 = vunpack.c.h.b16 %v1807
        %v2519 = vunpack.c.l.b16 %v1808
        %v2520 = vpack.c.b16 %v2421, %v2418
        %v2521 = vpack.c.b16 %v2422, %v2419
        %v2522 = vpack.c.b16 %v2423, %v2420
        %v2523 = vpack.c.b16 %v2427, %v2424
        %v2524 = vpack.c.b16 %v2428, %v2425
        %v2525 = vpack.c.b16 %v2429, %v2426
        %v2526 = vpack.c.b16 %v2433, %v2430
        %v2527 = vpack.c.b16 %v2434, %v2431
        %v2528 = vpack.c.b16 %v2435, %v2432
        %v2529 = vpack.c.b16 %v2439, %v2436
        %v2530 = vpack.c.b16 %v2440, %v2437
        %v2531 = vpack.c.b16 %v2441, %v2438
        %v2532 = vpack.c.b16 %v2445, %v2442
        %v2533 = vpack.c.b16 %v2446, %v2443
        %v2534 = vpack.c.b16 %v2447, %v2444
        %v2535 = vpack.c.b16 %v2451, %v2448
        %v2536 = vpack.c.b16 %v2452, %v2449
        %v2537 = vpack.c.b16 %v2453, %v2450
        %v2538 = vpack.c.b16 %v2457, %v2454
        %v2539 = vpack.c.b16 %v2458, %v2455
        %v2540 = vpack.c.b16 %v2459, %v2456
        %v2541 = vpack.c.b16 %v2463, %v2460
        %v2542 = vpack.c.b16 %v2464, %v2461
        %v2543 = vpack.c.b16 %v2465, %v2462
        %v2544 = vpack.c.b16 %v2469, %v2466
        %v2545 = vpack.c.b16 %v2470, %v2467
        %v2546 = vpack.c.b16 %v2471, %v2468
        %v2547 = vpack.c.b16 %v2475, %v2472
        %v2548 = vpack.c.b16 %v2476, %v2473
        %v2549 = vpack.c.b16 %v2477, %v2474
        %v2550 = vpack.c.b16 %v2481, %v2478
        %v2551 = vpack.c.b16 %v2482, %v2479
        %v2552 = vpack.c.b16 %v2483, %v2480
        %v2553 = vpack.c.b16 %v2487, %v2484
        %v2554 = vpack.c.b16 %v2488, %v2485
        %v2555 = vpack.c.b16 %v2489, %v2486
        %v2556 = vpack.c.b16 %v2493, %v2490
        %v2557 = vpack.c.b16 %v2494, %v2491
        %v2558 = vpack.c.b16 %v2495, %v2492
        %v2559 = vpack.c.b16 %v2499, %v2496
        %v2560 = vpack.c.b16 %v2500, %v2497
        %v2561 = vpack.c.b16 %v2501, %v2498
        %v2562 = vpack.c.b16 %v2505, %v2502
        %v2563 = vpack.c.b16 %v2506, %v2503
        %v2564 = vpack.c.b16 %v2507, %v2504
        %v2565 = vpack.c.b16 %v2511, %v2508
        %v2566 = vpack.c.b16 %v2512, %v2509
        %v2567 = vpack.c.b16 %v2513, %v2510
        %v2568 = vpack.c.b16 %v2517, %v2514
        %v2569 = vpack.c.b16 %v2518, %v2515
        %v2570 = vpack.c.b16 %v2519, %v2516
        %v2622 = vsel %vm1710, %v1739, 0
        %2624 = vmatprep.subr.bf16.mxu0 %v2521
        %2625 = vmatpush1.bf16.msra.mxu0 %v2520
        %2626 = vmatprep.subr.bf16.mxu0 %v2524
        %2627 = vmatpush1.bf16.msra.mxu0 %v2523
        %2628 = vmatprep.subr.bf16.mxu0 %v2527
        %2629 = vmatpush1.bf16.msra.mxu0 %v2526
        %2630 = vmatprep.subr.bf16.mxu0 %v2530
        %2631 = vmatpush1.bf16.msra.mxu0 %v2529
        %2632 = vmatprep.subr.bf16.mxu0 %v2533
        %2633 = vmatpush1.bf16.msra.mxu0 %v2532
        %2634 = vmatprep.subr.bf16.mxu0 %v2536
        %2635 = vmatpush1.bf16.msra.mxu0 %v2535
        %2636 = vmatprep.subr.bf16.mxu0 %v2539
        %2637 = vmatpush1.bf16.msra.mxu0 %v2538
        %2638 = vmatprep.subr.bf16.mxu0 %v2542
        %2639 = vmatpush1.bf16.msra.mxu0 %v2541
        %2640 = vmatprep.subr.bf16.mxu0 %v2545
        %2641 = vmatpush1.bf16.msra.mxu0 %v2544
        %2642 = vmatprep.subr.bf16.mxu0 %v2548
        %2643 = vmatpush1.bf16.msra.mxu0 %v2547
        %2644 = vmatprep.subr.bf16.mxu0 %v2551
        %2645 = vmatpush1.bf16.msra.mxu0 %v2550
        %2646 = vmatprep.subr.bf16.mxu0 %v2554
        %2647 = vmatpush1.bf16.msra.mxu0 %v2553
        %2648 = vmatprep.subr.bf16.mxu0 %v2557
        %2649 = vmatpush1.bf16.msra.mxu0 %v2556
        %2650 = vmatprep.subr.bf16.mxu0 %v2560
        %2651 = vmatpush1.bf16.msra.mxu0 %v2559
        %2652 = vmatprep.subr.bf16.mxu0 %v2563
        %2653 = vmatpush1.bf16.msra.mxu0 %v2562
        %2654 = vmatprep.subr.bf16.mxu0 %v2566
        %2655 = vmatpush1.bf16.msra.mxu0 %v2565
        %2656 = vmatprep.mubr.bf16.mxu0 %v1738
        %2657 = vmatmul.mubr.bf16.gmra.mrb[0].mxu0 %v1737
        %v2658 = vpop.f32.mrb[0].mxu0
        %v2659 = vadd.f32 %v2260, %v2658
        %v2660 = vpop.f32.mrb[0].mxu0
        %v2661 = vadd.f32 %v2262, %v2660
        %v2662 = vpop.f32.mrb[0].mxu0
        %v2663 = vadd.f32 %v2264, %v2662
        %v2664 = vpop.f32.mrb[0].mxu0
        %v2665 = vadd.f32 %v2266, %v2664
        %2666 = vdwg.mxu0
        %2667 = vmatprep.subr.bf16.mxu0 %v2569
        %2668 = vmatpush1.bf16.msra.mxu0 %v2568
        %2669 = vmatprep.subr.bf16.mxu0 0
        %2670 = vmatpush1.bf16.msra.mxu0 0
        %2671 = vmatprep.subr.bf16.mxu0 0
        %2672 = vmatpush1.bf16.msra.mxu0 0
        %2673 = vmatprep.subr.bf16.mxu0 0
        %2674 = vmatpush1.bf16.msra.mxu0 0
        %2675 = vmatprep.subr.bf16.mxu0 0
        %2676 = vmatpush1.bf16.msra.mxu0 0
        %2677 = vmatprep.subr.bf16.mxu0 0
        %2678 = vmatpush1.bf16.msra.mxu0 0
        %2679 = vmatprep.subr.bf16.mxu0 0
        %2680 = vmatpush1.bf16.msra.mxu0 0
        %2681 = vmatprep.subr.bf16.mxu0 0
        %2682 = vmatpush1.bf16.msra.mxu0 0
        %2683 = vmatprep.subr.bf16.mxu0 0
        %2684 = vmatpush1.bf16.msra.mxu0 0
        %2685 = vmatprep.subr.bf16.mxu0 0
        %2686 = vmatpush1.bf16.msra.mxu0 0
        %2687 = vmatprep.subr.bf16.mxu0 0
        %2688 = vmatpush1.bf16.msra.mxu0 0
        %2689 = vmatprep.subr.bf16.mxu0 0
        %2690 = vmatpush1.bf16.msra.mxu0 0
        %2691 = vmatprep.subr.bf16.mxu0 0
        %2692 = vmatpush1.bf16.msra.mxu0 0
        %2693 = vmatprep.subr.bf16.mxu0 0
        %2694 = vmatpush1.bf16.msra.mxu0 0
        %2695 = vmatprep.subr.bf16.mxu0 0
        %2696 = vmatpush1.bf16.msra.mxu0 0
        %2697 = vmatprep.subr.bf16.mxu0 0
        %2698 = vmatpush1.bf16.msra.mxu0 0
        %2699 = vmatprep.mubr.bf16.mxu0 0
        %2700 = vmatmul.mubr.bf16.gmra.mrb[0].mxu0 %v2622
        %v2701 = vpop.f32.mrb[0].mxu0
        %v2702 = vadd.f32 %v2659, %v2701
        %v2703 = vpop.f32.mrb[0].mxu0
        %v2704 = vadd.f32 %v2661, %v2703
        %v2705 = vpop.f32.mrb[0].mxu0
        %v2706 = vadd.f32 %v2663, %v2705
        %v2707 = vpop.f32.mrb[0].mxu0
        %v2708 = vadd.f32 %v2665, %v2707
        %2709 = vdwg.mxu0
        %2710 = vmatprep.subr.bf16.mxu0 0
        %2711 = vmatpush1.bf16.msra.mxu0 %v2522
        %2712 = vmatprep.subr.bf16.mxu0 0
        %2713 = vmatpush1.bf16.msra.mxu0 %v2525
        %2714 = vmatprep.subr.bf16.mxu0 0
        %2715 = vmatpush1.bf16.msra.mxu0 %v2528
        %2716 = vmatprep.subr.bf16.mxu0 0
        %2717 = vmatpush1.bf16.msra.mxu0 %v2531
        %2718 = vmatprep.subr.bf16.mxu0 0
        %2719 = vmatpush1.bf16.msra.mxu0 %v2534
        %2720 = vmatprep.subr.bf16.mxu0 0
        %2721 = vmatpush1.bf16.msra.mxu0 %v2537
        %2722 = vmatprep.subr.bf16.mxu0 0
        %2723 = vmatpush1.bf16.msra.mxu0 %v2540
        %2724 = vmatprep.subr.bf16.mxu0 0
        %2725 = vmatpush1.bf16.msra.mxu0 %v2543
        %2726 = vmatprep.subr.bf16.mxu0 0
        %2727 = vmatpush1.bf16.msra.mxu0 %v2546
        %2728 = vmatprep.subr.bf16.mxu0 0
        %2729 = vmatpush1.bf16.msra.mxu0 %v2549
        %2730 = vmatprep.subr.bf16.mxu0 0
        %2731 = vmatpush1.bf16.msra.mxu0 %v2552
        %2732 = vmatprep.subr.bf16.mxu0 0
        %2733 = vmatpush1.bf16.msra.mxu0 %v2555
        %2734 = vmatprep.subr.bf16.mxu0 0
        %2735 = vmatpush1.bf16.msra.mxu0 %v2558
        %2736 = vmatprep.subr.bf16.mxu0 0
        %2737 = vmatpush1.bf16.msra.mxu0 %v2561
        %2738 = vmatprep.subr.bf16.mxu0 0
        %2739 = vmatpush1.bf16.msra.mxu0 %v2564
        %2740 = vmatprep.subr.bf16.mxu0 0
        %2741 = vmatpush1.bf16.msra.mxu0 %v2567
        %2742 = vmatprep.mubr.bf16.mxu0 %v1738
        %2743 = vmatmul.mubr.bf16.gmra.mrb[0].mxu0 %v1737
        %v2744 = vpop.f32.mrb[0].mxu0
        %v2745 = vadd.f32 %v2344, %v2744
        %v2746 = vpop.f32.mrb[0].mxu0
        %v2747 = vpop.f32.mrb[0].mxu0
        %v2748 = vadd.f32 %v2347, %v2747
        %v2749 = vpop.f32.mrb[0].mxu0
        %2750 = vdwg.mxu0
        %2751 = vmatprep.subr.bf16.mxu0 0
        %2752 = vmatpush1.bf16.msra.mxu0 %v2570
        %2753 = vmatprep.subr.bf16.mxu0 0
        %2754 = vmatpush1.bf16.msra.mxu0 0
        %2755 = vmatprep.subr.bf16.mxu0 0
        %2756 = vmatpush1.bf16.msra.mxu0 0
        %2757 = vmatprep.subr.bf16.mxu0 0
        %2758 = vmatpush1.bf16.msra.mxu0 0
        %2759 = vmatprep.subr.bf16.mxu0 0
        %2760 = vmatpush1.bf16.msra.mxu0 0
        %2761 = vmatprep.subr.bf16.mxu0 0
        %2762 = vmatpush1.bf16.msra.mxu0 0
        %2763 = vmatprep.subr.bf16.mxu0 0
        %2764 = vmatpush1.bf16.msra.mxu0 0
        %2765 = vmatprep.subr.bf16.mxu0 0
        %2766 = vmatpush1.bf16.msra.mxu0 0
        %2767 = vmatprep.subr.bf16.mxu0 0
        %2768 = vmatpush1.bf16.msra.mxu0 0
        %2769 = vmatprep.subr.bf16.mxu0 0
        %2770 = vmatpush1.bf16.msra.mxu0 0
        %2771 = vmatprep.subr.bf16.mxu0 0
        %2772 = vmatpush1.bf16.msra.mxu0 0
        %2773 = vmatprep.subr.bf16.mxu0 0
        %2774 = vmatpush1.bf16.msra.mxu0 0
        %2775 = vmatprep.subr.bf16.mxu0 0
        %2776 = vmatpush1.bf16.msra.mxu0 0
        %2777 = vmatprep.subr.bf16.mxu0 0
        %2778 = vmatpush1.bf16.msra.mxu0 0
        %2779 = vmatprep.subr.bf16.mxu0 0
        %2780 = vmatpush1.bf16.msra.mxu0 0
        %2781 = vmatprep.subr.bf16.mxu0 0
        %2782 = vmatpush1.bf16.msra.mxu0 0
        %2783 = vmatprep.mubr.bf16.mxu0 0
        %2784 = vmatmul.mubr.bf16.gmra.mrb[0].mxu0 %v2622
        %v2785 = vpop.f32.mrb[0].mxu0
        %v2786 = vadd.f32 %v2745, %v2785
        %v2787 = vpop.f32.mrb[0].mxu0
        %v2788 = vpop.f32.mrb[0].mxu0
        %v2789 = vadd.f32 %v2748, %v2788
        %v2790 = vpop.f32.mrb[0].mxu0
        %2791 = vdwg.mxu0
        %v2792 = vld [vmem:[%s9] sm:$0x7]
        %v2794 = vlaneseq
        %v2795 = vshrl.u32 %v2794, 7
        %v2796 = vsub.s32 0, %v2795
        %v2797 = vrot.slane %v2792, %v2796
        %v2798 = vlaneseq
        %v2799 = vshrl.u32 %v2798, 7
        %v2800 = vsub.s32 1, %v2799
        %v2801 = vrot.slane %v2792, %v2800
        %v2802 = vlaneseq
        %v2803 = vshrl.u32 %v2802, 7
        %v2804 = vsub.s32 2, %v2803
        %v2805 = vrot.slane %v2792, %v2804
        %v2809 = vadd.f32 %v2702, %v2797
        %v2810 = vadd.f32 %v2704, %v2801
        %v2811 = vadd.f32 %v2786, %v2805
        %v2812 = vadd.f32 %v2706, %v2797
        %v2813 = vadd.f32 %v2708, %v2801
        %v2814 = vadd.f32 %v2789, %v2805
        %v2815 = vmax.f32 %v2809, 0.0
        %v2816 = vmax.f32 %v2810, 0.0
        %v2817 = vmax.f32 %v2811, 0.0
        %v2818 = vmax.f32 %v2812, 0.0
        %v2819 = vmax.f32 %v2813, 0.0
        %v2820 = vmax.f32 %v2814, 0.0
        %2827 = vrot.lane.b32.xlu0 %v2815, 20
        %v2828 = vpop.permute.xlu0 %2827
        %2829 = vrot.lane.b32.xlu0 %v2816, 20
        %v2830 = vpop.permute.xlu0 %2829
        %2831 = vrot.lane.b32.xlu0 %v2817, 20
        %v2832 = vpop.permute.xlu0 %2831
        %2833 = vrot.lane.b32.xlu0 %v2818, 20
        %v2834 = vpop.permute.xlu0 %2833
        %2835 = vrot.lane.b32.xlu0 %v2819, 20
        %v2836 = vpop.permute.xlu0 %2835
        %2837 = vrot.lane.b32.xlu0 %v2820, 20
        %v2838 = vpop.permute.xlu0 %2837
        %vm2839 = vcmask 162816
        %v2840 = vsel %vm2839, %v2828, %v2830
        %v2841 = vsel %vm2839, %v2830, %v2832
        %v2842 = vsel %vm2839, %v2834, %v2836
        %v2843 = vsel %vm2839, %v2836, %v2838
        %v2848 = vsel %vm2839, 0.0, %v2828
        %v2849 = vsel %vm2839, 0.0, %v2834
        %vm2850 = vcmask 687104
        %v2851 = vsel %vm2850, %v2841, 0.0
        %v2852 = vsel %vm2850, %v2843, 0.0
        %v2857 = vrot.slane %v2848, 7
        %v2858 = vrot.slane %v2840, 7
        %v2859 = vrot.slane %v2851, 7
        %v2860 = vrot.slane %v2849, 7
        %v2861 = vsel %vm1061, %v2857, %v2860
        %v2862 = vrot.slane %v2842, 7
        %v2863 = vsel %vm1061, %v2858, %v2862
        %v2864 = vrot.slane %v2852, 7
        %v2865 = vsel %vm1061, %v2859, %v2864
        %v2875 = vsel %vm1061, 0.0, %v2857
        %v2876 = vsel %vm1061, 0.0, %v2858
        %v2877 = vsel %vm1061, 0.0, %v2859
        %v2878 = vsel %vm1061, %v2860, 0.0
        %v2879 = vsel %vm1061, %v2862, 0.0
        %v2880 = vsel %vm1061, %v2864, 0.0
        %v2881 = vpack.c.bf16 %v2861, %v2875
        %v2882 = vpack.c.bf16 %v2863, %v2876
        %v2883 = vpack.c.bf16 %v2865, %v2877
        %v2884 = vpack.c.bf16 %v2878, %v2878
        %v2885 = vpack.c.bf16 %v2879, %v2879
        %v2886 = vpack.c.bf16 %v2880, %v2880
        %vm2887 = vcmask 146432
        %v2888 = vsel %vm2887, %v671, 0
        %v2891 = vsel %vm1061, %v2884, 0
        %v2894 = vsel %vm1061, %v2885, 0
        %v2897 = vsel %vm1061, %v2886, 0
        %2899 = vmatprep.subr.bf16.mxu0 %v2882
        %2900 = vmatpush1.bf16.msra.mxu0 %v2881
        %2901 = vmatprep.subr.bf16.mxu0 %v2894
        %2902 = vmatpush1.bf16.msra.mxu0 %v2891
        %2903 = vmatprep.subr.bf16.mxu0 0
        %2904 = vmatpush1.bf16.msra.mxu0 0
        %2905 = vmatprep.subr.bf16.mxu0 0
        %2906 = vmatpush1.bf16.msra.mxu0 0
        %2907 = vmatprep.subr.bf16.mxu0 0
        %2908 = vmatpush1.bf16.msra.mxu0 0
        %2909 = vmatprep.subr.bf16.mxu0 0
        %2910 = vmatpush1.bf16.msra.mxu0 0
        %2911 = vmatprep.subr.bf16.mxu0 0
        %2912 = vmatpush1.bf16.msra.mxu0 0
        %2913 = vmatprep.subr.bf16.mxu0 0
        %2914 = vmatpush1.bf16.msra.mxu0 0
        %2915 = vmatprep.subr.bf16.mxu0 0
        %2916 = vmatpush1.bf16.msra.mxu0 0
        %2917 = vmatprep.subr.bf16.mxu0 0
        %2918 = vmatpush1.bf16.msra.mxu0 0
        %2919 = vmatprep.subr.bf16.mxu0 0
        %2920 = vmatpush1.bf16.msra.mxu0 0
        %2921 = vmatprep.subr.bf16.mxu0 0
        %2922 = vmatpush1.bf16.msra.mxu0 0
        %2923 = vmatprep.subr.bf16.mxu0 0
        %2924 = vmatpush1.bf16.msra.mxu0 0
        %2925 = vmatprep.subr.bf16.mxu0 0
        %2926 = vmatpush1.bf16.msra.mxu0 0
        %2927 = vmatprep.subr.bf16.mxu0 0
        %2928 = vmatpush1.bf16.msra.mxu0 0
        %2929 = vmatprep.subr.bf16.mxu0 0
        %2930 = vmatpush1.bf16.msra.mxu0 0
        %2931 = vmatprep.mubr.bf16.mxu0 0
        %2932 = vmatmul.mubr.bf16.gmra.mrb[0].mxu0 %v2888
        %v2933 = vpop.f32.mrb[0].mxu0
        %v2934 = vadd.f32 0.0, %v2933
        %v2935 = vpop.f32.mrb[0].mxu0
        %v2936 = vadd.f32 0.0, %v2935
        %v2937 = vpop.f32.mrb[0].mxu0
        %v2938 = vadd.f32 0.0, %v2937
        %v2939 = vpop.f32.mrb[0].mxu0
        %v2940 = vadd.f32 0.0, %v2939
        %2941 = vdwg.mxu0
        %2942 = vmatprep.subr.bf16.mxu0 0
        %2943 = vmatpush1.bf16.msra.mxu0 %v2883
        %2944 = vmatprep.subr.bf16.mxu0 0
        %2945 = vmatpush1.bf16.msra.mxu0 %v2897
        %2946 = vmatprep.subr.bf16.mxu0 0
        %2947 = vmatpush1.bf16.msra.mxu0 0
        %2948 = vmatprep.subr.bf16.mxu0 0
        %2949 = vmatpush1.bf16.msra.mxu0 0
        %2950 = vmatprep.subr.bf16.mxu0 0
        %2951 = vmatpush1.bf16.msra.mxu0 0
        %2952 = vmatprep.subr.bf16.mxu0 0
        %2953 = vmatpush1.bf16.msra.mxu0 0
        %2954 = vmatprep.subr.bf16.mxu0 0
        %2955 = vmatpush1.bf16.msra.mxu0 0
        %2956 = vmatprep.subr.bf16.mxu0 0
        %2957 = vmatpush1.bf16.msra.mxu0 0
        %2958 = vmatprep.subr.bf16.mxu0 0
        %2959 = vmatpush1.bf16.msra.mxu0 0
        %2960 = vmatprep.subr.bf16.mxu0 0
        %2961 = vmatpush1.bf16.msra.mxu0 0
        %2962 = vmatprep.subr.bf16.mxu0 0
        %2963 = vmatpush1.bf16.msra.mxu0 0
        %2964 = vmatprep.subr.bf16.mxu0 0
        %2965 = vmatpush1.bf16.msra.mxu0 0
        %2966 = vmatprep.subr.bf16.mxu0 0
        %2967 = vmatpush1.bf16.msra.mxu0 0
        %2968 = vmatprep.subr.bf16.mxu0 0
        %2969 = vmatpush1.bf16.msra.mxu0 0
        %2970 = vmatprep.subr.bf16.mxu0 0
        %2971 = vmatpush1.bf16.msra.mxu0 0
        %2972 = vmatprep.subr.bf16.mxu0 0
        %2973 = vmatpush1.bf16.msra.mxu0 0
        %2974 = vmatprep.mubr.bf16.mxu0 0
        %2975 = vmatmul.mubr.bf16.gmra.mrb[0].mxu0 %v2888
        %v2976 = vpop.f32.mrb[0].mxu0
        %v2977 = vadd.f32 0.0, %v2976
        %v2978 = vpop.f32.mrb[0].mxu0
        %v2979 = vpop.f32.mrb[0].mxu0
        %v2980 = vadd.f32 0.0, %v2979
        %v2981 = vpop.f32.mrb[0].mxu0
        %2982 = vdwg.mxu0
        %v2983 = vpack.c.bf16 %v2938, %v2934
        %v2984 = vpack.c.bf16 %v2940, %v2936
        %v2985 = vpack.c.bf16 %v2980, %v2977
        %v2986 = vsel %vm2887, %v678, 0
        %2988 = vmatprep.subr.bf16.mxu0 %v2882
        %2989 = vmatpush1.bf16.msra.mxu0 %v2881
        %2990 = vmatprep.subr.bf16.mxu0 %v2894
        %2991 = vmatpush1.bf16.msra.mxu0 %v2891
        %2992 = vmatprep.subr.bf16.mxu0 0
        %2993 = vmatpush1.bf16.msra.mxu0 0
        %2994 = vmatprep.subr.bf16.mxu0 0
        %2995 = vmatpush1.bf16.msra.mxu0 0
        %2996 = vmatprep.subr.bf16.mxu0 0
        %2997 = vmatpush1.bf16.msra.mxu0 0
        %2998 = vmatprep.subr.bf16.mxu0 0
        %2999 = vmatpush1.bf16.msra.mxu0 0
        %3000 = vmatprep.subr.bf16.mxu0 0
        %3001 = vmatpush1.bf16.msra.mxu0 0
        %3002 = vmatprep.subr.bf16.mxu0 0
        %3003 = vmatpush1.bf16.msra.mxu0 0
        %3004 = vmatprep.subr.bf16.mxu0 0
        %3005 = vmatpush1.bf16.msra.mxu0 0
        %3006 = vmatprep.subr.bf16.mxu0 0
        %3007 = vmatpush1.bf16.msra.mxu0 0
        %3008 = vmatprep.subr.bf16.mxu0 0
        %3009 = vmatpush1.bf16.msra.mxu0 0
        %3010 = vmatprep.subr.bf16.mxu0 0
        %3011 = vmatpush1.bf16.msra.mxu0 0
        %3012 = vmatprep.subr.bf16.mxu0 0
        %3013 = vmatpush1.bf16.msra.mxu0 0
        %3014 = vmatprep.subr.bf16.mxu0 0
        %3015 = vmatpush1.bf16.msra.mxu0 0
        %3016 = vmatprep.subr.bf16.mxu0 0
        %3017 = vmatpush1.bf16.msra.mxu0 0
        %3018 = vmatprep.subr.bf16.mxu0 0
        %3019 = vmatpush1.bf16.msra.mxu0 0
        %3020 = vmatprep.mubr.bf16.mxu0 0
        %3021 = vmatmul.mubr.bf16.gmra.mrb[0].mxu0 %v2986
        %v3022 = vpop.f32.mrb[0].mxu0
        %v3023 = vadd.f32 0.0, %v3022
        %v3024 = vpop.f32.mrb[0].mxu0
        %v3025 = vadd.f32 0.0, %v3024
        %v3026 = vpop.f32.mrb[0].mxu0
        %v3027 = vadd.f32 0.0, %v3026
        %v3028 = vpop.f32.mrb[0].mxu0
        %v3029 = vadd.f32 0.0, %v3028
        %3030 = vdwg.mxu0
        %3031 = vmatprep.subr.bf16.mxu0 0
        %3032 = vmatpush1.bf16.msra.mxu0 %v2883
        %3033 = vmatprep.subr.bf16.mxu0 0
        %3034 = vmatpush1.bf16.msra.mxu0 %v2897
        %3035 = vmatprep.subr.bf16.mxu0 0
        %3036 = vmatpush1.bf16.msra.mxu0 0
        %3037 = vmatprep.subr.bf16.mxu0 0
        %3038 = vmatpush1.bf16.msra.mxu0 0
        %3039 = vmatprep.subr.bf16.mxu0 0
        %3040 = vmatpush1.bf16.msra.mxu0 0
        %3041 = vmatprep.subr.bf16.mxu0 0
        %3042 = vmatpush1.bf16.msra.mxu0 0
        %3043 = vmatprep.subr.bf16.mxu0 0
        %3044 = vmatpush1.bf16.msra.mxu0 0
        %3045 = vmatprep.subr.bf16.mxu0 0
        %3046 = vmatpush1.bf16.msra.mxu0 0
        %3047 = vmatprep.subr.bf16.mxu0 0
        %3048 = vmatpush1.bf16.msra.mxu0 0
        %3049 = vmatprep.subr.bf16.mxu0 0
        %3050 = vmatpush1.bf16.msra.mxu0 0
        %3051 = vmatprep.subr.bf16.mxu0 0
        %3052 = vmatpush1.bf16.msra.mxu0 0
        %3053 = vmatprep.subr.bf16.mxu0 0
        %3054 = vmatpush1.bf16.msra.mxu0 0
        %3055 = vmatprep.subr.bf16.mxu0 0
        %3056 = vmatpush1.bf16.msra.mxu0 0
        %3057 = vmatprep.subr.bf16.mxu0 0
        %3058 = vmatpush1.bf16.msra.mxu0 0
        %3059 = vmatprep.subr.bf16.mxu0 0
        %3060 = vmatpush1.bf16.msra.mxu0 0
        %3061 = vmatprep.subr.bf16.mxu0 0
        %3062 = vmatpush1.bf16.msra.mxu0 0
        %3063 = vmatprep.mubr.bf16.mxu0 0
        %3064 = vmatmul.mubr.bf16.gmra.mrb[0].mxu0 %v2986
        %v3065 = vpop.f32.mrb[0].mxu0
        %v3066 = vadd.f32 0.0, %v3065
        %v3067 = vpop.f32.mrb[0].mxu0
        %v3068 = vpop.f32.mrb[0].mxu0
        %v3069 = vadd.f32 0.0, %v3068
        %v3070 = vpop.f32.mrb[0].mxu0
        %3071 = vdwg.mxu0
        %v3072 = vpack.c.bf16 %v3027, %v3023
        %v3073 = vpack.c.bf16 %v3029, %v3025
        %v3074 = vpack.c.bf16 %v3069, %v3066
        %v3075 = vld [vmem:[%s10] sm:$0xff]
        %v3076 = vld [vmem:[%s10 + $0x8] sm:$0xff]
        %v3077 = vld [vmem:[%s10 + $0x10] sm:$0xff]
        %v3078 = vld [vmem:[%s10 + $0x18] sm:$0xff]
        %v3079 = vld [vmem:[%s10 + $0x20] sm:$0xff]
        %v3080 = vld [vmem:[%s10 + $0x28] sm:$0xff]
        %v3081 = vld [vmem:[%s10 + $0x30] sm:$0xff]
        %v3082 = vld [vmem:[%s10 + $0x38] sm:$0xff]
        %v3083 = vld [vmem:[%s10 + $0x40] sm:$0xff]
        %v3084 = vld [vmem:[%s10 + $0x48] sm:$0xff]
        %v3085 = vld [vmem:[%s10 + $0x50] sm:$0xff]
        %v3086 = vld [vmem:[%s10 + $0x58] sm:$0xff]
        %v3087 = vld [vmem:[%s10 + $0x60] sm:$0xff]
        %v3088 = vld [vmem:[%s10 + $0x68] sm:$0xff]
        %v3089 = vld [vmem:[%s10 + $0x70] sm:$0xff]
        %v3090 = vld [vmem:[%s10 + $0x78] sm:$0xff]
        %v3091 = vld [vmem:[%s10 + $0x80] sm:$0xff]
        %v3092 = vld [vmem:[%s10 + $0x88] sm:$0xff]
        %v3093 = vld [vmem:[%s10 + $0x90] sm:$0xff]
        %v3094 = vld [vmem:[%s10 + $0x98] sm:$0xff]
        %v3095 = vld [vmem:[%s10 + $0xa0] sm:$0xff]
        %v3096 = vld [vmem:[%s10 + $0xa8] sm:$0xff]
        %v3097 = vld [vmem:[%s10 + $0xb0] sm:$0xff]
        %v3098 = vld [vmem:[%s10 + $0xb8] sm:$0xff]
        %v3099 = vld [vmem:[%s10 + $0xc0] sm:$0xff]
        %v3100 = vld [vmem:[%s10 + $0xc8] sm:$0xff]
        %v3101 = vld [vmem:[%s10 + $0xd0] sm:$0xff]
        %v3102 = vld [vmem:[%s10 + $0xd8] sm:$0xff]
        %v3103 = vld [vmem:[%s10 + $0xe0] sm:$0xff]
        %v3104 = vld [vmem:[%s10 + $0xe8] sm:$0xff]
        %v3105 = vld [vmem:[%s10 + $0xf0] sm:$0xff]
        %v3106 = vld [vmem:[%s10 + $0xf8] sm:$0xff]
        %v3107 = vld [vmem:[%s10 + $0x100] sm:$0xff]
        %v3108 = vld [vmem:[%s10 + $0x108] sm:$0xff]
        %v3109 = vld [vmem:[%s10 + $0x110] sm:$0xff]
        %v3110 = vld [vmem:[%s10 + $0x118] sm:$0xff]
        %v3111 = vld [vmem:[%s10 + $0x120] sm:$0xff]
        %v3112 = vld [vmem:[%s10 + $0x128] sm:$0xff]
        %v3113 = vld [vmem:[%s10 + $0x130] sm:$0xff]
        %v3114 = vld [vmem:[%s10 + $0x138] sm:$0xff]
        %v3115 = vld [vmem:[%s10 + $0x140] sm:$0xff]
        %v3116 = vld [vmem:[%s10 + $0x148] sm:$0xff]
        %v3117 = vld [vmem:[%s10 + $0x150] sm:$0xff]
        %v3118 = vld [vmem:[%s10 + $0x158] sm:$0xff]
        %v3119 = vld [vmem:[%s10 + $0x160] sm:$0xff]
        %v3120 = vld [vmem:[%s11] sm:$0xff]
        %v3121 = vld [vmem:[%s11 + $0x8] sm:$0xff]
        %v3122 = vld [vmem:[%s11 + $0x10] sm:$0xff]
        %v3123 = vld [vmem:[%s11 + $0x18] sm:$0xff]
        %v3124 = vld [vmem:[%s11 + $0x20] sm:$0xff]
        %v3125 = vld [vmem:[%s11 + $0x28] sm:$0xff]
        %v3126 = vld [vmem:[%s11 + $0x30] sm:$0xff]
        %v3127 = vld [vmem:[%s11 + $0x38] sm:$0xff]
        %v3128 = vld [vmem:[%s11 + $0x40] sm:$0xff]
        %v3129 = vld [vmem:[%s11 + $0x48] sm:$0xff]
        %v3130 = vld [vmem:[%s11 + $0x50] sm:$0xff]
        %v3131 = vld [vmem:[%s11 + $0x58] sm:$0xff]
        %v3132 = vld [vmem:[%s11 + $0x60] sm:$0xff]
        %v3133 = vld [vmem:[%s11 + $0x68] sm:$0xff]
        %v3134 = vld [vmem:[%s11 + $0x70] sm:$0xff]
        %v3135 = vld [vmem:[%s11 + $0x78] sm:$0xff]
        %v3136 = vld [vmem:[%s11 + $0x80] sm:$0xff]
        %v3137 = vld [vmem:[%s11 + $0x88] sm:$0xff]
        %v3138 = vld [vmem:[%s11 + $0x90] sm:$0xff]
        %v3139 = vld [vmem:[%s11 + $0x98] sm:$0xff]
        %v3140 = vld [vmem:[%s11 + $0xa0] sm:$0xff]
        %v3141 = vld [vmem:[%s11 + $0xa8] sm:$0xff]
        %v3142 = vld [vmem:[%s11 + $0xb0] sm:$0xff]
        %v3143 = vld [vmem:[%s11 + $0xb8] sm:$0xff]
        %v3144 = vld [vmem:[%s11 + $0xc0] sm:$0xff]
        %v3145 = vld [vmem:[%s11 + $0xc8] sm:$0xff]
        %v3146 = vld [vmem:[%s11 + $0xd0] sm:$0xff]
        %v3147 = vld [vmem:[%s11 + $0xd8] sm:$0xff]
        %v3148 = vld [vmem:[%s11 + $0xe0] sm:$0xff]
        %v3149 = vld [vmem:[%s11 + $0xe8] sm:$0xff]
        %v3150 = vld [vmem:[%s11 + $0xf0] sm:$0xff]
        %v3151 = vld [vmem:[%s11 + $0xf8] sm:$0xff]
        %v3152 = vld [vmem:[%s11 + $0x100] sm:$0xff]
        %v3153 = vld [vmem:[%s11 + $0x108] sm:$0xff]
        %v3154 = vld [vmem:[%s11 + $0x110] sm:$0xff]
        %v3155 = vld [vmem:[%s11 + $0x118] sm:$0xff]
        %v3156 = vld [vmem:[%s11 + $0x120] sm:$0xff]
        %v3157 = vld [vmem:[%s11 + $0x128] sm:$0xff]
        %v3158 = vld [vmem:[%s11 + $0x130] sm:$0xff]
        %v3159 = vld [vmem:[%s11 + $0x138] sm:$0xff]
        %v3160 = vld [vmem:[%s11 + $0x140] sm:$0xff]
        %v3161 = vld [vmem:[%s11 + $0x148] sm:$0xff]
        %v3162 = vld [vmem:[%s11 + $0x150] sm:$0xff]
        %v3163 = vld [vmem:[%s11 + $0x158] sm:$0xff]
        %v3164 = vld [vmem:[%s11 + $0x160] sm:$0xff]
        %v3210 = vunpack.c.l.b16 %v3120
        %v3211 = vunpack.c.h.b16 %v3120
        %v3212 = vunpack.c.l.b16 %v3121
        %v3213 = vunpack.c.h.b16 %v3121
        %v3214 = vunpack.c.l.b16 %v3122
        %v3215 = vunpack.c.h.b16 %v3122
        %v3216 = vunpack.c.l.b16 %v3123
        %v3217 = vunpack.c.h.b16 %v3123
        %v3218 = vunpack.c.l.b16 %v3124
        %v3219 = vunpack.c.h.b16 %v3124
        %v3220 = vunpack.c.l.b16 %v3125
        %v3221 = vunpack.c.h.b16 %v3125
        %v3222 = vunpack.c.l.b16 %v3126
        %v3223 = vunpack.c.h.b16 %v3126
        %v3224 = vunpack.c.l.b16 %v3127
        %v3225 = vunpack.c.h.b16 %v3127
        %v3226 = vunpack.c.l.b16 %v3128
        %v3227 = vunpack.c.h.b16 %v3128
        %v3228 = vunpack.c.l.b16 %v3129
        %v3229 = vunpack.c.h.b16 %v3129
        %v3230 = vunpack.c.l.b16 %v3130
        %v3231 = vunpack.c.h.b16 %v3130
        %v3232 = vunpack.c.l.b16 %v3131
        %v3233 = vunpack.c.h.b16 %v3131
        %v3234 = vunpack.c.l.b16 %v3132
        %v3235 = vunpack.c.h.b16 %v3132
        %v3236 = vunpack.c.l.b16 %v3133
        %v3237 = vunpack.c.h.b16 %v3133
        %v3238 = vunpack.c.l.b16 %v3134
        %v3239 = vunpack.c.h.b16 %v3134
        %v3240 = vunpack.c.l.b16 %v3135
        %v3241 = vunpack.c.h.b16 %v3135
        %v3242 = vunpack.c.l.b16 %v3136
        %v3243 = vunpack.c.h.b16 %v3136
        %v3244 = vunpack.c.l.b16 %v3137
        %v3245 = vunpack.c.h.b16 %v3137
        %v3246 = vunpack.c.l.b16 %v3138
        %v3247 = vunpack.c.h.b16 %v3138
        %v3248 = vunpack.c.l.b16 %v3139
        %v3249 = vunpack.c.h.b16 %v3139
        %v3250 = vunpack.c.l.b16 %v3140
        %v3251 = vunpack.c.h.b16 %v3140
        %v3252 = vunpack.c.l.b16 %v3141
        %v3253 = vunpack.c.h.b16 %v3141
        %v3254 = vunpack.c.l.b16 %v3142
        %v3255 = vunpack.c.h.b16 %v3142
        %v3256 = vunpack.c.l.b16 %v3143
        %v3257 = vunpack.c.h.b16 %v3143
        %v3258 = vunpack.c.l.b16 %v3144
        %v3259 = vunpack.c.h.b16 %v3144
        %v3260 = vunpack.c.l.b16 %v3145
        %v3261 = vunpack.c.h.b16 %v3145
        %v3262 = vunpack.c.l.b16 %v3146
        %v3263 = vunpack.c.h.b16 %v3146
        %v3264 = vunpack.c.l.b16 %v3147
        %v3265 = vunpack.c.h.b16 %v3147
        %v3266 = vunpack.c.l.b16 %v3148
        %v3267 = vunpack.c.h.b16 %v3148
        %v3268 = vunpack.c.l.b16 %v3149
        %v3269 = vunpack.c.h.b16 %v3149
        %v3270 = vunpack.c.l.b16 %v3150
        %v3271 = vunpack.c.h.b16 %v3150
        %v3272 = vunpack.c.l.b16 %v3151
        %v3273 = vunpack.c.h.b16 %v3151
        %v3274 = vunpack.c.l.b16 %v3152
        %v3275 = vunpack.c.h.b16 %v3152
        %v3276 = vunpack.c.l.b16 %v3153
        %v3277 = vunpack.c.h.b16 %v3153
        %v3278 = vunpack.c.l.b16 %v3154
        %v3279 = vunpack.c.h.b16 %v3154
        %v3280 = vunpack.c.l.b16 %v3155
        %v3281 = vunpack.c.h.b16 %v3155
        %v3282 = vunpack.c.l.b16 %v3156
        %v3283 = vunpack.c.h.b16 %v3156
        %v3284 = vunpack.c.l.b16 %v3157
        %v3285 = vunpack.c.h.b16 %v3157
        %v3286 = vunpack.c.l.b16 %v3158
        %v3287 = vunpack.c.h.b16 %v3158
        %v3288 = vunpack.c.l.b16 %v3159
        %v3289 = vunpack.c.h.b16 %v3159
        %v3290 = vunpack.c.l.b16 %v3160
        %v3291 = vunpack.c.h.b16 %v3160
        %v3292 = vunpack.c.l.b16 %v3161
        %v3293 = vunpack.c.h.b16 %v3161
        %v3294 = vunpack.c.l.b16 %v3162
        %v3295 = vunpack.c.h.b16 %v3162
        %v3296 = vunpack.c.l.b16 %v3163
        %v3297 = vunpack.c.h.b16 %v3163
        %v3298 = vunpack.c.l.b16 %v3164
        %v3299 = vunpack.c.h.b16 %v3164
        %v3300 = vpack.c.b16 %v3212, %v3210
        %v3301 = vpack.c.b16 %v3213, %v3211
        %v3302 = vpack.c.b16 %v3216, %v3214
        %v3303 = vpack.c.b16 %v3217, %v3215
        %v3304 = vpack.c.b16 %v3220, %v3218
        %v3305 = vpack.c.b16 %v3221, %v3219
        %v3306 = vpack.c.b16 %v3224, %v3222
        %v3307 = vpack.c.b16 %v3225, %v3223
        %v3308 = vpack.c.b16 %v3228, %v3226
        %v3309 = vpack.c.b16 %v3229, %v3227
        %v3310 = vpack.c.b16 %v3232, %v3230
        %v3311 = vpack.c.b16 %v3233, %v3231
        %v3312 = vpack.c.b16 %v3236, %v3234
        %v3313 = vpack.c.b16 %v3237, %v3235
        %v3314 = vpack.c.b16 %v3240, %v3238
        %v3315 = vpack.c.b16 %v3241, %v3239
        %v3316 = vpack.c.b16 %v3244, %v3242
        %v3317 = vpack.c.b16 %v3245, %v3243
        %v3318 = vpack.c.b16 %v3248, %v3246
        %v3319 = vpack.c.b16 %v3249, %v3247
        %v3320 = vpack.c.b16 %v3252, %v3250
        %v3321 = vpack.c.b16 %v3253, %v3251
        %v3322 = vpack.c.b16 %v3256, %v3254
        %v3323 = vpack.c.b16 %v3257, %v3255
        %v3324 = vpack.c.b16 %v3260, %v3258
        %v3325 = vpack.c.b16 %v3261, %v3259
        %v3326 = vpack.c.b16 %v3264, %v3262
        %v3327 = vpack.c.b16 %v3265, %v3263
        %v3328 = vpack.c.b16 %v3268, %v3266
        %v3329 = vpack.c.b16 %v3269, %v3267
        %v3330 = vpack.c.b16 %v3272, %v3270
        %v3331 = vpack.c.b16 %v3273, %v3271
        %v3332 = vpack.c.b16 %v3276, %v3274
        %v3333 = vpack.c.b16 %v3277, %v3275
        %v3334 = vpack.c.b16 %v3280, %v3278
        %v3335 = vpack.c.b16 %v3281, %v3279
        %v3336 = vpack.c.b16 %v3284, %v3282
        %v3337 = vpack.c.b16 %v3285, %v3283
        %v3338 = vpack.c.b16 %v3288, %v3286
        %v3339 = vpack.c.b16 %v3289, %v3287
        %v3340 = vpack.c.b16 %v3292, %v3290
        %v3341 = vpack.c.b16 %v3293, %v3291
        %v3342 = vpack.c.b16 %v3296, %v3294
        %v3343 = vpack.c.b16 %v3297, %v3295
        %v3344 = vpack.c.b16 %v3298, %v3298
        %v3345 = vpack.c.b16 %v3299, %v3299
        %vm3390 = vcmask 850944
        %v3392 = vsel %vm3390, %v3074, 0
        %v3395 = vsel %vm1421, %v3344, 0
        %v3398 = vsel %vm1421, %v3345, 0
        %3400 = vmatprep.subr.bf16.mxu0 %v3301
        %3401 = vmatpush1.bf16.msra.mxu0 %v3300
        %3402 = vmatprep.subr.bf16.mxu0 %v3303
        %3403 = vmatpush1.bf16.msra.mxu0 %v3302
        %3404 = vmatprep.subr.bf16.mxu0 %v3305
        %3405 = vmatpush1.bf16.msra.mxu0 %v3304
        %3406 = vmatprep.subr.bf16.mxu0 %v3307
        %3407 = vmatpush1.bf16.msra.mxu0 %v3306
        %3408 = vmatprep.subr.bf16.mxu0 %v3309
        %3409 = vmatpush1.bf16.msra.mxu0 %v3308
        %3410 = vmatprep.subr.bf16.mxu0 %v3311
        %3411 = vmatpush1.bf16.msra.mxu0 %v3310
        %3412 = vmatprep.subr.bf16.mxu0 %v3313
        %3413 = vmatpush1.bf16.msra.mxu0 %v3312
        %3414 = vmatprep.subr.bf16.mxu0 %v3315
        %3415 = vmatpush1.bf16.msra.mxu0 %v3314
        %3416 = vmatprep.subr.bf16.mxu0 %v3317
        %3417 = vmatpush1.bf16.msra.mxu0 %v3316
        %3418 = vmatprep.subr.bf16.mxu0 %v3319
        %3419 = vmatpush1.bf16.msra.mxu0 %v3318
        %3420 = vmatprep.subr.bf16.mxu0 %v3321
        %3421 = vmatpush1.bf16.msra.mxu0 %v3320
        %3422 = vmatprep.subr.bf16.mxu0 %v3323
        %3423 = vmatpush1.bf16.msra.mxu0 %v3322
        %3424 = vmatprep.subr.bf16.mxu0 %v3325
        %3425 = vmatpush1.bf16.msra.mxu0 %v3324
        %3426 = vmatprep.subr.bf16.mxu0 %v3327
        %3427 = vmatpush1.bf16.msra.mxu0 %v3326
        %3428 = vmatprep.subr.bf16.mxu0 %v3329
        %3429 = vmatpush1.bf16.msra.mxu0 %v3328
        %3430 = vmatprep.subr.bf16.mxu0 %v3331
        %3431 = vmatpush1.bf16.msra.mxu0 %v3330
        %3432 = vmatprep.mubr.bf16.mxu0 %v3073
        %3433 = vmatmul.mubr.bf16.gmra.mrb[0].mxu0 %v3072
        %v3434 = vpop.f32.mrb[0].mxu0
        %v3435 = vadd.f32 0.0, %v3434
        %v3436 = vpop.f32.mrb[0].mxu0
        %v3437 = vadd.f32 0.0, %v3436
        %v3438 = vpop.f32.mrb[0].mxu0
        %v3439 = vadd.f32 0.0, %v3438
        %v3440 = vpop.f32.mrb[0].mxu0
        %v3441 = vadd.f32 0.0, %v3440
        %3442 = vdwg.mxu0
        %3443 = vmatprep.subr.bf16.mxu0 %v3333
        %3444 = vmatpush1.bf16.msra.mxu0 %v3332
        %3445 = vmatprep.subr.bf16.mxu0 %v3335
        %3446 = vmatpush1.bf16.msra.mxu0 %v3334
        %3447 = vmatprep.subr.bf16.mxu0 %v3337
        %3448 = vmatpush1.bf16.msra.mxu0 %v3336
        %3449 = vmatprep.subr.bf16.mxu0 %v3339
        %3450 = vmatpush1.bf16.msra.mxu0 %v3338
        %3451 = vmatprep.subr.bf16.mxu0 %v3341
        %3452 = vmatpush1.bf16.msra.mxu0 %v3340
        %3453 = vmatprep.subr.bf16.mxu0 %v3343
        %3454 = vmatpush1.bf16.msra.mxu0 %v3342
        %3455 = vmatprep.subr.bf16.mxu0 %v3398
        %3456 = vmatpush1.bf16.msra.mxu0 %v3395
        %3457 = vmatprep.subr.bf16.mxu0 0
        %3458 = vmatpush1.bf16.msra.mxu0 0
        %3459 = vmatprep.subr.bf16.mxu0 0
        %3460 = vmatpush1.bf16.msra.mxu0 0
        %3461 = vmatprep.subr.bf16.mxu0 0
        %3462 = vmatpush1.bf16.msra.mxu0 0
        %3463 = vmatprep.subr.bf16.mxu0 0
        %3464 = vmatpush1.bf16.msra.mxu0 0
        %3465 = vmatprep.subr.bf16.mxu0 0
        %3466 = vmatpush1.bf16.msra.mxu0 0
        %3467 = vmatprep.subr.bf16.mxu0 0
        %3468 = vmatpush1.bf16.msra.mxu0 0
        %3469 = vmatprep.subr.bf16.mxu0 0
        %3470 = vmatpush1.bf16.msra.mxu0 0
        %3471 = vmatprep.subr.bf16.mxu0 0
        %3472 = vmatpush1.bf16.msra.mxu0 0
        %3473 = vmatprep.subr.bf16.mxu0 0
        %3474 = vmatpush1.bf16.msra.mxu0 0
        %3475 = vmatprep.mubr.bf16.mxu0 0
        %3476 = vmatmul.mubr.bf16.gmra.mrb[0].mxu0 %v3392
        %v3477 = vpop.f32.mrb[0].mxu0
        %v3478 = vadd.f32 %v3435, %v3477
        %v3479 = vpop.f32.mrb[0].mxu0
        %v3480 = vadd.f32 %v3437, %v3479
        %v3481 = vpop.f32.mrb[0].mxu0
        %v3482 = vadd.f32 %v3439, %v3481
        %v3483 = vpop.f32.mrb[0].mxu0
        %v3484 = vadd.f32 %v3441, %v3483
        %3485 = vdwg.mxu0
        %v3531 = vunpack.c.l.b16 %v3075
        %v3532 = vunpack.c.h.b16 %v3075
        %v3533 = vunpack.c.l.b16 %v3076
        %v3534 = vunpack.c.h.b16 %v3076
        %v3535 = vunpack.c.l.b16 %v3077
        %v3536 = vunpack.c.h.b16 %v3077
        %v3537 = vunpack.c.l.b16 %v3078
        %v3538 = vunpack.c.h.b16 %v3078
        %v3539 = vunpack.c.l.b16 %v3079
        %v3540 = vunpack.c.h.b16 %v3079
        %v3541 = vunpack.c.l.b16 %v3080
        %v3542 = vunpack.c.h.b16 %v3080
        %v3543 = vunpack.c.l.b16 %v3081
        %v3544 = vunpack.c.h.b16 %v3081
        %v3545 = vunpack.c.l.b16 %v3082
        %v3546 = vunpack.c.h.b16 %v3082
        %v3547 = vunpack.c.l.b16 %v3083
        %v3548 = vunpack.c.h.b16 %v3083
        %v3549 = vunpack.c.l.b16 %v3084
        %v3550 = vunpack.c.h.b16 %v3084
        %v3551 = vunpack.c.l.b16 %v3085
        %v3552 = vunpack.c.h.b16 %v3085
        %v3553 = vunpack.c.l.b16 %v3086
        %v3554 = vunpack.c.h.b16 %v3086
        %v3555 = vunpack.c.l.b16 %v3087
        %v3556 = vunpack.c.h.b16 %v3087
        %v3557 = vunpack.c.l.b16 %v3088
        %v3558 = vunpack.c.h.b16 %v3088
        %v3559 = vunpack.c.l.b16 %v3089
        %v3560 = vunpack.c.h.b16 %v3089
        %v3561 = vunpack.c.l.b16 %v3090
        %v3562 = vunpack.c.h.b16 %v3090
        %v3563 = vunpack.c.l.b16 %v3091
        %v3564 = vunpack.c.h.b16 %v3091
        %v3565 = vunpack.c.l.b16 %v3092
        %v3566 = vunpack.c.h.b16 %v3092
        %v3567 = vunpack.c.l.b16 %v3093
        %v3568 = vunpack.c.h.b16 %v3093
        %v3569 = vunpack.c.l.b16 %v3094
        %v3570 = vunpack.c.h.b16 %v3094
        %v3571 = vunpack.c.l.b16 %v3095
        %v3572 = vunpack.c.h.b16 %v3095
        %v3573 = vunpack.c.l.b16 %v3096
        %v3574 = vunpack.c.h.b16 %v3096
        %v3575 = vunpack.c.l.b16 %v3097
        %v3576 = vunpack.c.h.b16 %v3097
        %v3577 = vunpack.c.l.b16 %v3098
        %v3578 = vunpack.c.h.b16 %v3098
        %v3579 = vunpack.c.l.b16 %v3099
        %v3580 = vunpack.c.h.b16 %v3099
        %v3581 = vunpack.c.l.b16 %v3100
        %v3582 = vunpack.c.h.b16 %v3100
        %v3583 = vunpack.c.l.b16 %v3101
        %v3584 = vunpack.c.h.b16 %v3101
        %v3585 = vunpack.c.l.b16 %v3102
        %v3586 = vunpack.c.h.b16 %v3102
        %v3587 = vunpack.c.l.b16 %v3103
        %v3588 = vunpack.c.h.b16 %v3103
        %v3589 = vunpack.c.l.b16 %v3104
        %v3590 = vunpack.c.h.b16 %v3104
        %v3591 = vunpack.c.l.b16 %v3105
        %v3592 = vunpack.c.h.b16 %v3105
        %v3593 = vunpack.c.l.b16 %v3106
        %v3594 = vunpack.c.h.b16 %v3106
        %v3595 = vunpack.c.l.b16 %v3107
        %v3596 = vunpack.c.h.b16 %v3107
        %v3597 = vunpack.c.l.b16 %v3108
        %v3598 = vunpack.c.h.b16 %v3108
        %v3599 = vunpack.c.l.b16 %v3109
        %v3600 = vunpack.c.h.b16 %v3109
        %v3601 = vunpack.c.l.b16 %v3110
        %v3602 = vunpack.c.h.b16 %v3110
        %v3603 = vunpack.c.l.b16 %v3111
        %v3604 = vunpack.c.h.b16 %v3111
        %v3605 = vunpack.c.l.b16 %v3112
        %v3606 = vunpack.c.h.b16 %v3112
        %v3607 = vunpack.c.l.b16 %v3113
        %v3608 = vunpack.c.h.b16 %v3113
        %v3609 = vunpack.c.l.b16 %v3114
        %v3610 = vunpack.c.h.b16 %v3114
        %v3611 = vunpack.c.l.b16 %v3115
        %v3612 = vunpack.c.h.b16 %v3115
        %v3613 = vunpack.c.l.b16 %v3116
        %v3614 = vunpack.c.h.b16 %v3116
        %v3615 = vunpack.c.l.b16 %v3117
        %v3616 = vunpack.c.h.b16 %v3117
        %v3617 = vunpack.c.l.b16 %v3118
        %v3618 = vunpack.c.h.b16 %v3118
        %v3619 = vunpack.c.l.b16 %v3119
        %v3620 = vunpack.c.h.b16 %v3119
        %v3621 = vpack.c.b16 %v3533, %v3531
        %v3622 = vpack.c.b16 %v3534, %v3532
        %v3623 = vpack.c.b16 %v3537, %v3535
        %v3624 = vpack.c.b16 %v3538, %v3536
        %v3625 = vpack.c.b16 %v3541, %v3539
        %v3626 = vpack.c.b16 %v3542, %v3540
        %v3627 = vpack.c.b16 %v3545, %v3543
        %v3628 = vpack.c.b16 %v3546, %v3544
        %v3629 = vpack.c.b16 %v3549, %v3547
        %v3630 = vpack.c.b16 %v3550, %v3548
        %v3631 = vpack.c.b16 %v3553, %v3551
        %v3632 = vpack.c.b16 %v3554, %v3552
        %v3633 = vpack.c.b16 %v3557, %v3555
        %v3634 = vpack.c.b16 %v3558, %v3556
        %v3635 = vpack.c.b16 %v3561, %v3559
        %v3636 = vpack.c.b16 %v3562, %v3560
        %v3637 = vpack.c.b16 %v3565, %v3563
        %v3638 = vpack.c.b16 %v3566, %v3564
        %v3639 = vpack.c.b16 %v3569, %v3567
        %v3640 = vpack.c.b16 %v3570, %v3568
        %v3641 = vpack.c.b16 %v3573, %v3571
        %v3642 = vpack.c.b16 %v3574, %v3572
        %v3643 = vpack.c.b16 %v3577, %v3575
        %v3644 = vpack.c.b16 %v3578, %v3576
        %v3645 = vpack.c.b16 %v3581, %v3579
        %v3646 = vpack.c.b16 %v3582, %v3580
        %v3647 = vpack.c.b16 %v3585, %v3583
        %v3648 = vpack.c.b16 %v3586, %v3584
        %v3649 = vpack.c.b16 %v3589, %v3587
        %v3650 = vpack.c.b16 %v3590, %v3588
        %v3651 = vpack.c.b16 %v3593, %v3591
        %v3652 = vpack.c.b16 %v3594, %v3592
        %v3653 = vpack.c.b16 %v3597, %v3595
        %v3654 = vpack.c.b16 %v3598, %v3596
        %v3655 = vpack.c.b16 %v3601, %v3599
        %v3656 = vpack.c.b16 %v3602, %v3600
        %v3657 = vpack.c.b16 %v3605, %v3603
        %v3658 = vpack.c.b16 %v3606, %v3604
        %v3659 = vpack.c.b16 %v3609, %v3607
        %v3660 = vpack.c.b16 %v3610, %v3608
        %v3661 = vpack.c.b16 %v3613, %v3611
        %v3662 = vpack.c.b16 %v3614, %v3612
        %v3663 = vpack.c.b16 %v3617, %v3615
        %v3664 = vpack.c.b16 %v3618, %v3616
        %v3665 = vpack.c.b16 %v3619, %v3619
        %v3666 = vpack.c.b16 %v3620, %v3620
        %v3712 = vsel %vm3390, %v2985, 0
        %v3715 = vsel %vm1421, %v3665, 0
        %v3718 = vsel %vm1421, %v3666, 0
        %3720 = vmatprep.subr.bf16.mxu0 %v3622
        %3721 = vmatpush1.bf16.msra.mxu0 %v3621
        %3722 = vmatprep.subr.bf16.mxu0 %v3624
        %3723 = vmatpush1.bf16.msra.mxu0 %v3623
        %3724 = vmatprep.subr.bf16.mxu0 %v3626
        %3725 = vmatpush1.bf16.msra.mxu0 %v3625
        %3726 = vmatprep.subr.bf16.mxu0 %v3628
        %3727 = vmatpush1.bf16.msra.mxu0 %v3627
        %3728 = vmatprep.subr.bf16.mxu0 %v3630
        %3729 = vmatpush1.bf16.msra.mxu0 %v3629
        %3730 = vmatprep.subr.bf16.mxu0 %v3632
        %3731 = vmatpush1.bf16.msra.mxu0 %v3631
        %3732 = vmatprep.subr.bf16.mxu0 %v3634
        %3733 = vmatpush1.bf16.msra.mxu0 %v3633
        %3734 = vmatprep.subr.bf16.mxu0 %v3636
        %3735 = vmatpush1.bf16.msra.mxu0 %v3635
        %3736 = vmatprep.subr.bf16.mxu0 %v3638
        %3737 = vmatpush1.bf16.msra.mxu0 %v3637
        %3738 = vmatprep.subr.bf16.mxu0 %v3640
        %3739 = vmatpush1.bf16.msra.mxu0 %v3639
        %3740 = vmatprep.subr.bf16.mxu0 %v3642
        %3741 = vmatpush1.bf16.msra.mxu0 %v3641
        %3742 = vmatprep.subr.bf16.mxu0 %v3644
        %3743 = vmatpush1.bf16.msra.mxu0 %v3643
        %3744 = vmatprep.subr.bf16.mxu0 %v3646
        %3745 = vmatpush1.bf16.msra.mxu0 %v3645
        %3746 = vmatprep.subr.bf16.mxu0 %v3648
        %3747 = vmatpush1.bf16.msra.mxu0 %v3647
        %3748 = vmatprep.subr.bf16.mxu0 %v3650
        %3749 = vmatpush1.bf16.msra.mxu0 %v3649
        %3750 = vmatprep.subr.bf16.mxu0 %v3652
        %3751 = vmatpush1.bf16.msra.mxu0 %v3651
        %3752 = vmatprep.mubr.bf16.mxu0 %v2984
        %3753 = vmatmul.mubr.bf16.gmra.mrb[0].mxu0 %v2983
        %v3754 = vpop.f32.mrb[0].mxu0
        %v3755 = vadd.f32 %v3478, %v3754
        %v3756 = vpop.f32.mrb[0].mxu0
        %v3757 = vadd.f32 %v3480, %v3756
        %v3758 = vpop.f32.mrb[0].mxu0
        %v3759 = vadd.f32 %v3482, %v3758
        %v3760 = vpop.f32.mrb[0].mxu0
        %v3761 = vadd.f32 %v3484, %v3760
        %3762 = vdwg.mxu0
        %3763 = vmatprep.subr.bf16.mxu0 %v3654
        %3764 = vmatpush1.bf16.msra.mxu0 %v3653
        %3765 = vmatprep.subr.bf16.mxu0 %v3656
        %3766 = vmatpush1.bf16.msra.mxu0 %v3655
        %3767 = vmatprep.subr.bf16.mxu0 %v3658
        %3768 = vmatpush1.bf16.msra.mxu0 %v3657
        %3769 = vmatprep.subr.bf16.mxu0 %v3660
        %3770 = vmatpush1.bf16.msra.mxu0 %v3659
        %3771 = vmatprep.subr.bf16.mxu0 %v3662
        %3772 = vmatpush1.bf16.msra.mxu0 %v3661
        %3773 = vmatprep.subr.bf16.mxu0 %v3664
        %3774 = vmatpush1.bf16.msra.mxu0 %v3663
        %3775 = vmatprep.subr.bf16.mxu0 %v3718
        %3776 = vmatpush1.bf16.msra.mxu0 %v3715
        %3777 = vmatprep.subr.bf16.mxu0 0
        %3778 = vmatpush1.bf16.msra.mxu0 0
        %3779 = vmatprep.subr.bf16.mxu0 0
        %3780 = vmatpush1.bf16.msra.mxu0 0
        %3781 = vmatprep.subr.bf16.mxu0 0
        %3782 = vmatpush1.bf16.msra.mxu0 0
        %3783 = vmatprep.subr.bf16.mxu0 0
        %3784 = vmatpush1.bf16.msra.mxu0 0
        %3785 = vmatprep.subr.bf16.mxu0 0
        %3786 = vmatpush1.bf16.msra.mxu0 0
        %3787 = vmatprep.subr.bf16.mxu0 0
        %3788 = vmatpush1.bf16.msra.mxu0 0
        %3789 = vmatprep.subr.bf16.mxu0 0
        %3790 = vmatpush1.bf16.msra.mxu0 0
        %3791 = vmatprep.subr.bf16.mxu0 0
        %3792 = vmatpush1.bf16.msra.mxu0 0
        %3793 = vmatprep.subr.bf16.mxu0 0
        %3794 = vmatpush1.bf16.msra.mxu0 0
        %3795 = vmatprep.mubr.bf16.mxu0 0
        %3796 = vmatmul.mubr.bf16.gmra.mrb[0].mxu0 %v3712
        %v3797 = vpop.f32.mrb[0].mxu0
        %v3798 = vadd.f32 %v3755, %v3797
        %v3799 = vpop.f32.mrb[0].mxu0
        %v3800 = vadd.f32 %v3757, %v3799
        %v3801 = vpop.f32.mrb[0].mxu0
        %v3802 = vadd.f32 %v3759, %v3801
        %v3803 = vpop.f32.mrb[0].mxu0
        %v3804 = vadd.f32 %v3761, %v3803
        %3805 = vdwg.mxu0
        %v3806 = vld [vmem:[%s12] sm:$0x3]
        %v3808 = vlaneseq
        %v3809 = vshrl.u32 %v3808, 7
        %v3810 = vsub.s32 0, %v3809
        %v3811 = vrot.slane %v3806, %v3810
        %v3812 = vlaneseq
        %v3813 = vshrl.u32 %v3812, 7
        %v3814 = vsub.s32 1, %v3813
        %v3815 = vrot.slane %v3806, %v3814
        %v3818 = vadd.f32 %v3798, %v3811
        %v3819 = vadd.f32 %v3800, %v3815
        %v3820 = vadd.f32 %v3802, %v3811
        %v3821 = vadd.f32 %v3804, %v3815
        %v3822 = vmax.f32 %v3818, 0.0
        %v3823 = vmax.f32 %v3819, 0.0
        %v3824 = vmax.f32 %v3820, 0.0
        %v3825 = vmax.f32 %v3821, 0.0
        %v3828 = vrot.slane %v3822, 1
        %v3829 = vrot.slane %v3823, 1
        %3830 = vrot.lane.b32.xlu0 %v3828, 88
        %v3831 = vpop.permute.xlu0 %3830
        %3832 = vrot.lane.b32.xlu0 %v3829, 88
        %v3833 = vpop.permute.xlu0 %3832
        %vm3834 = vcmask 719872
        %v3835 = vsel %vm3834, %v3831, %v3833
        %v3839 = vrot.slane %v3822, 2
        %v3840 = vrot.slane %v3823, 2
        %3841 = vrot.lane.b32.xlu0 %v3839, 48
        %v3842 = vpop.permute.xlu0 %3841
        %3843 = vrot.lane.b32.xlu0 %v3840, 48
        %v3844 = vpop.permute.xlu0 %3843
        %vm3845 = vcmask 392192
        %v3846 = vsel %vm3845, %v3842, %v3844
        %v3850 = vrot.slane %v3822, 3
        %v3851 = vrot.slane %v3823, 3
        %3852 = vrot.lane.b32.xlu0 %v3850, 8
        %v3853 = vpop.permute.xlu0 %3852
        %3854 = vrot.lane.b32.xlu0 %v3851, 8
        %v3855 = vpop.permute.xlu0 %3854
        %v3856 = vsel %vm1031, %v3853, %v3855
        %v3859 = vrot.slane %v3822, 4
        %v3860 = vrot.slane %v3823, 4
        %3861 = vrot.lane.b32.xlu0 %v3859, 96
        %v3862 = vpop.permute.xlu0 %3861
        %3863 = vrot.lane.b32.xlu0 %v3860, 96
        %v3864 = vpop.permute.xlu0 %3863
        %vm3865 = vcmask 785408
        %v3866 = vsel %vm3865, %v3862, %v3864
        %v3870 = vrot.slane %v3822, 5
        %v3871 = vrot.slane %v3823, 5
        %3872 = vrot.lane.b32.xlu0 %v3870, 56
        %v3873 = vpop.permute.xlu0 %3872
        %3874 = vrot.lane.b32.xlu0 %v3871, 56
        %v3875 = vpop.permute.xlu0 %3874
        %vm3876 = vcmask 457728
        %v3877 = vsel %vm3876, %v3873, %v3875
        %v3881 = vrot.slane %v3822, 6
        %v3882 = vrot.slane %v3823, 6
        %3883 = vrot.lane.b32.xlu0 %v3881, 16
        %v3884 = vpop.permute.xlu0 %3883
        %3885 = vrot.lane.b32.xlu0 %v3882, 16
        %v3886 = vpop.permute.xlu0 %3885
        %v3887 = vsel %vm1710, %v3884, %v3886
        %v3890 = vrot.slane %v3822, 7
        %v3891 = vrot.slane %v3823, 7
        %3892 = vrot.lane.b32.xlu0 %v3890, 104
        %v3893 = vpop.permute.xlu0 %3892
        %3894 = vrot.lane.b32.xlu0 %v3891, 104
        %v3895 = vpop.permute.xlu0 %3894
        %v3896 = vsel %vm3390, %v3893, %v3895
        %3902 = vrot.lane.b32.xlu0 %v3824, 64
        %v3903 = vpop.permute.xlu0 %3902
        %3904 = vrot.lane.b32.xlu0 %v3825, 64
        %v3905 = vpop.permute.xlu0 %3904
        %vm3906 = vcmask 523264
        %v3907 = vsel %vm3906, %v3903, %v3905
        %v3911 = vsel %vm3834, %v3823, %v3831
        %v3912 = vsel %vm3845, %v3833, %v3842
        %v3913 = vsel %vm1031, %v3844, %v3853
        %v3914 = vsel %vm3865, %v3856, %v3862
        %v3915 = vsel %vm3876, %v3864, %v3873
        %v3916 = vsel %vm1710, %v3875, %v3884
        %v3917 = vsel %vm3390, %v3887, %v3893
        %v3918 = vsel %vm3906, %v3895, %v3903
        %v3919 = vpack.c.bf16 %v3822, %v3822
        %v3920 = vpack.c.bf16 %v3911, %v3911
        %v3921 = vpack.c.bf16 %v3835, %v3835
        %v3922 = vpack.c.bf16 %v3912, %v3912
        %v3923 = vpack.c.bf16 %v3846, %v3846
        %v3924 = vpack.c.bf16 %v3913, %v3913
        %v3925 = vpack.c.bf16 %v3914, %v3914
        %v3926 = vpack.c.bf16 %v3866, %v3866
        %v3927 = vpack.c.bf16 %v3915, %v3915
        %v3928 = vpack.c.bf16 %v3877, %v3877
        %v3929 = vpack.c.bf16 %v3916, %v3916
        %v3930 = vpack.c.bf16 %v3917, %v3917
        %v3931 = vpack.c.bf16 %v3896, %v3896
        %v3932 = vpack.c.bf16 %v3918, %v3918
        %v3933 = vpack.c.bf16 %v3907, %v3907
        %v3934 = vpack.c.bf16 %v3905, %v3905
        %v3935 = vld [vmem:[%s13] sm:$0xff]
        %v3936 = vld [vmem:[%s13 + $0x8] sm:$0xff]
        %v3937 = vld [vmem:[%s13 + $0x10] sm:$0xff]
        %v3938 = vld [vmem:[%s13 + $0x18] sm:$0xff]
        %v3939 = vld [vmem:[%s13 + $0x20] sm:$0xff]
        %v3940 = vld [vmem:[%s13 + $0x28] sm:$0xff]
        %v3941 = vld [vmem:[%s13 + $0x30] sm:$0xff]
        %v3942 = vld [vmem:[%s13 + $0x38] sm:$0xff]
        %v3943 = vld [vmem:[%s13 + $0x40] sm:$0xff]
        %v3944 = vld [vmem:[%s13 + $0x48] sm:$0xff]
        %v3945 = vld [vmem:[%s13 + $0x50] sm:$0xff]
        %v3946 = vld [vmem:[%s13 + $0x58] sm:$0xff]
        %v3947 = vld [vmem:[%s13 + $0x60] sm:$0xff]
        %v3948 = vld [vmem:[%s13 + $0x68] sm:$0xff]
        %v3949 = vld [vmem:[%s13 + $0x70] sm:$0xff]
        %v3950 = vld [vmem:[%s13 + $0x78] sm:$0xff]
        %v3951 = vld [vmem:[%s13 + $0x80] sm:$0xff]
        %v3952 = vld [vmem:[%s13 + $0x88] sm:$0xff]
        %v3953 = vld [vmem:[%s13 + $0x90] sm:$0xff]
        %v3954 = vld [vmem:[%s13 + $0x98] sm:$0xff]
        %v3955 = vld [vmem:[%s13 + $0xa0] sm:$0xff]
        %v3956 = vld [vmem:[%s13 + $0xa8] sm:$0xff]
        %v3957 = vld [vmem:[%s13 + $0xb0] sm:$0xff]
        %v3958 = vld [vmem:[%s13 + $0xb8] sm:$0xff]
        %v3959 = vld [vmem:[%s13 + $0xc0] sm:$0xff]
        %v3960 = vld [vmem:[%s13 + $0xc8] sm:$0xff]
        %v3961 = vld [vmem:[%s13 + $0xd0] sm:$0xff]
        %v3962 = vld [vmem:[%s13 + $0xd8] sm:$0xff]
        %v3963 = vld [vmem:[%s13 + $0xe0] sm:$0xff]
        %v3964 = vld [vmem:[%s13 + $0xe8] sm:$0xff]
        %v3965 = vld [vmem:[%s13 + $0xf0] sm:$0xff]
        %v3966 = vld [vmem:[%s13 + $0xf8] sm:$0xff]
        %v3967 = vld [vmem:[%s13 + $0x100] sm:$0xff]
        %v3968 = vld [vmem:[%s13 + $0x108] sm:$0xff]
        %v3969 = vld [vmem:[%s13 + $0x110] sm:$0xff]
        %v3970 = vld [vmem:[%s13 + $0x118] sm:$0xff]
        %v3971 = vld [vmem:[%s13 + $0x120] sm:$0xff]
        %v3972 = vld [vmem:[%s13 + $0x128] sm:$0xff]
        %v3973 = vld [vmem:[%s13 + $0x130] sm:$0xff]
        %v3974 = vld [vmem:[%s13 + $0x138] sm:$0xff]
        %v3975 = vld [vmem:[%s13 + $0x140] sm:$0xff]
        %v3976 = vld [vmem:[%s13 + $0x148] sm:$0xff]
        %v3977 = vld [vmem:[%s13 + $0x150] sm:$0xff]
        %v3978 = vld [vmem:[%s13 + $0x158] sm:$0xff]
        %v3979 = vld [vmem:[%s13 + $0x160] sm:$0xff]
        %v3980 = vld [vmem:[%s13 + $0x168] sm:$0xff]
        %v3981 = vld [vmem:[%s13 + $0x170] sm:$0xff]
        %v3982 = vld [vmem:[%s13 + $0x178] sm:$0xff]
        %v3983 = vld [vmem:[%s13 + $0x180] sm:$0xff]
        %v3984 = vld [vmem:[%s13 + $0x188] sm:$0xff]
        %v3985 = vld [vmem:[%s13 + $0x190] sm:$0xff]
        %v3986 = vld [vmem:[%s13 + $0x198] sm:$0xff]
        %v3987 = vld [vmem:[%s13 + $0x1a0] sm:$0xff]
        %v3988 = vld [vmem:[%s13 + $0x1a8] sm:$0xff]
        %v3989 = vld [vmem:[%s13 + $0x1b0] sm:$0xff]
        %v3990 = vld [vmem:[%s13 + $0x1b8] sm:$0xff]
        %v3991 = vld [vmem:[%s13 + $0x1c0] sm:$0xff]
        %v3992 = vld [vmem:[%s13 + $0x1c8] sm:$0xff]
        %v3993 = vld [vmem:[%s13 + $0x1d0] sm:$0xff]
        %v3994 = vld [vmem:[%s13 + $0x1d8] sm:$0xff]
        %v3995 = vld [vmem:[%s13 + $0x1e0] sm:$0xff]
        %v3996 = vld [vmem:[%s13 + $0x1e8] sm:$0xff]
        %v3997 = vld [vmem:[%s13 + $0x1f0] sm:$0xff]
        %v3998 = vld [vmem:[%s13 + $0x1f8] sm:$0xff]
        %v3999 = vld [vmem:[%s13 + $0x200] sm:$0xff]
        %v4000 = vld [vmem:[%s13 + $0x208] sm:$0xff]
        %v4001 = vld [vmem:[%s13 + $0x210] sm:$0xff]
        %v4002 = vld [vmem:[%s13 + $0x218] sm:$0xff]
        %v4003 = vld [vmem:[%s13 + $0x220] sm:$0xff]
        %v4004 = vld [vmem:[%s13 + $0x228] sm:$0xff]
        %v4005 = vld [vmem:[%s13 + $0x230] sm:$0xff]
        %v4006 = vld [vmem:[%s13 + $0x238] sm:$0xff]
        %v4007 = vld [vmem:[%s13 + $0x240] sm:$0xff]
        %v4008 = vld [vmem:[%s13 + $0x248] sm:$0xff]
        %v4009 = vld [vmem:[%s13 + $0x250] sm:$0xff]
        %v4010 = vld [vmem:[%s13 + $0x258] sm:$0xff]
        %v4011 = vld [vmem:[%s13 + $0x260] sm:$0xff]
        %v4012 = vld [vmem:[%s13 + $0x268] sm:$0xff]
        %v4013 = vld [vmem:[%s13 + $0x270] sm:$0xff]
        %v4014 = vld [vmem:[%s13 + $0x278] sm:$0xff]
        %v4015 = vld [vmem:[%s13 + $0x280] sm:$0xff]
        %v4016 = vld [vmem:[%s13 + $0x288] sm:$0xff]
        %v4017 = vld [vmem:[%s13 + $0x290] sm:$0xff]
        %v4018 = vld [vmem:[%s13 + $0x298] sm:$0xff]
        %v4019 = vld [vmem:[%s13 + $0x2a0] sm:$0xff]
        %v4020 = vld [vmem:[%s13 + $0x2a8] sm:$0xff]
        %v4021 = vld [vmem:[%s13 + $0x2b0] sm:$0xff]
        %v4022 = vld [vmem:[%s13 + $0x2b8] sm:$0xff]
        %v4023 = vld [vmem:[%s13 + $0x2c0] sm:$0xff]
        %v4024 = vld [vmem:[%s13 + $0x2c8] sm:$0xff]
        %v4025 = vld [vmem:[%s13 + $0x2d0] sm:$0xff]
        %v4026 = vld [vmem:[%s13 + $0x2d8] sm:$0xff]
        %v4027 = vld [vmem:[%s13 + $0x2e0] sm:$0xff]
        %v4028 = vld [vmem:[%s13 + $0x2e8] sm:$0xff]
        %v4029 = vld [vmem:[%s13 + $0x2f0] sm:$0xff]
        %v4030 = vld [vmem:[%s13 + $0x2f8] sm:$0xff]
        %v4031 = vld [vmem:[%s13 + $0x300] sm:$0xff]
        %v4032 = vld [vmem:[%s13 + $0x308] sm:$0xff]
        %v4033 = vld [vmem:[%s13 + $0x310] sm:$0xff]
        %v4034 = vld [vmem:[%s13 + $0x318] sm:$0xff]
        %v4035 = vld [vmem:[%s13 + $0x320] sm:$0xff]
        %v4036 = vld [vmem:[%s13 + $0x328] sm:$0xff]
        %v4037 = vld [vmem:[%s13 + $0x330] sm:$0xff]
        %v4038 = vld [vmem:[%s13 + $0x338] sm:$0xff]
        %v4039 = vld [vmem:[%s13 + $0x340] sm:$0xff]
        %v4040 = vld [vmem:[%s13 + $0x348] sm:$0xff]
        %v4041 = vld [vmem:[%s13 + $0x350] sm:$0xff]
        %v4042 = vld [vmem:[%s13 + $0x358] sm:$0xff]
        %v4043 = vld [vmem:[%s13 + $0x360] sm:$0xff]
        %v4044 = vld [vmem:[%s13 + $0x368] sm:$0xff]
        %v4045 = vld [vmem:[%s13 + $0x370] sm:$0xff]
        %v4046 = vld [vmem:[%s13 + $0x378] sm:$0xff]
        %v4047 = vld [vmem:[%s13 + $0x380] sm:$0xff]
        %v4048 = vld [vmem:[%s13 + $0x388] sm:$0xff]
        %v4049 = vld [vmem:[%s13 + $0x390] sm:$0xff]
        %v4050 = vld [vmem:[%s13 + $0x398] sm:$0xff]
        %v4051 = vld [vmem:[%s13 + $0x3a0] sm:$0xff]
        %v4052 = vld [vmem:[%s13 + $0x3a8] sm:$0xff]
        %v4053 = vld [vmem:[%s13 + $0x3b0] sm:$0xff]
        %v4054 = vld [vmem:[%s13 + $0x3b8] sm:$0xff]
        %v4055 = vld [vmem:[%s13 + $0x3c0] sm:$0xff]
        %v4056 = vld [vmem:[%s13 + $0x3c8] sm:$0xff]
        %v4057 = vld [vmem:[%s13 + $0x3d0] sm:$0xff]
        %v4058 = vld [vmem:[%s13 + $0x3d8] sm:$0xff]
        %v4059 = vld [vmem:[%s13 + $0x3e0] sm:$0xff]
        %v4060 = vld [vmem:[%s13 + $0x3e8] sm:$0xff]
        %v4061 = vld [vmem:[%s13 + $0x3f0] sm:$0xff]
        %v4062 = vld [vmem:[%s13 + $0x3f8] sm:$0xff]
        %v4063 = vld [vmem:[%s13 + $0x400] sm:$0xff]
        %v4064 = vld [vmem:[%s13 + $0x408] sm:$0xff]
        %v4065 = vld [vmem:[%s13 + $0x410] sm:$0xff]
        %v4066 = vld [vmem:[%s13 + $0x418] sm:$0xff]
        %v4067 = vld [vmem:[%s13 + $0x420] sm:$0xff]
        %v4068 = vld [vmem:[%s13 + $0x428] sm:$0xff]
        %v4069 = vld [vmem:[%s13 + $0x430] sm:$0xff]
        %v4070 = vld [vmem:[%s13 + $0x438] sm:$0xff]
        %v4071 = vld [vmem:[%s13 + $0x440] sm:$0xff]
        %v4072 = vld [vmem:[%s13 + $0x448] sm:$0xff]
        %v4073 = vld [vmem:[%s13 + $0x450] sm:$0xff]
        %v4074 = vld [vmem:[%s13 + $0x458] sm:$0xff]
        %v4075 = vld [vmem:[%s13 + $0x460] sm:$0xff]
        %v4076 = vld [vmem:[%s13 + $0x468] sm:$0xff]
        %v4077 = vld [vmem:[%s13 + $0x470] sm:$0xff]
        %v4078 = vld [vmem:[%s13 + $0x478] sm:$0xff]
        %v4079 = vld [vmem:[%s13 + $0x480] sm:$0xff]
        %v4080 = vld [vmem:[%s13 + $0x488] sm:$0xff]
        %v4081 = vld [vmem:[%s13 + $0x490] sm:$0xff]
        %v4082 = vld [vmem:[%s13 + $0x498] sm:$0xff]
        %v4083 = vld [vmem:[%s13 + $0x4a0] sm:$0xff]
        %v4084 = vld [vmem:[%s13 + $0x4a8] sm:$0xff]
        %v4085 = vld [vmem:[%s13 + $0x4b0] sm:$0xff]
        %v4086 = vld [vmem:[%s13 + $0x4b8] sm:$0xff]
        %v4087 = vld [vmem:[%s13 + $0x4c0] sm:$0xff]
        %v4088 = vld [vmem:[%s13 + $0x4c8] sm:$0xff]
        %v4089 = vld [vmem:[%s13 + $0x4d0] sm:$0xff]
        %v4090 = vld [vmem:[%s13 + $0x4d8] sm:$0xff]
        %v4091 = vld [vmem:[%s13 + $0x4e0] sm:$0xff]
        %v4092 = vld [vmem:[%s13 + $0x4e8] sm:$0xff]
        %v4093 = vld [vmem:[%s13 + $0x4f0] sm:$0xff]
        %v4094 = vld [vmem:[%s13 + $0x4f8] sm:$0xff]
        %v4095 = vld [vmem:[%s13 + $0x500] sm:$0xff]
        %v4096 = vld [vmem:[%s13 + $0x508] sm:$0xff]
        %v4097 = vld [vmem:[%s13 + $0x510] sm:$0xff]
        %v4098 = vld [vmem:[%s13 + $0x518] sm:$0xff]
        %v4099 = vld [vmem:[%s13 + $0x520] sm:$0xff]
        %v4100 = vld [vmem:[%s13 + $0x528] sm:$0xff]
        %v4101 = vld [vmem:[%s13 + $0x530] sm:$0xff]
        %v4102 = vld [vmem:[%s13 + $0x538] sm:$0xff]
        %v4103 = vld [vmem:[%s13 + $0x540] sm:$0xff]
        %v4104 = vld [vmem:[%s13 + $0x548] sm:$0xff]
        %v4105 = vld [vmem:[%s13 + $0x550] sm:$0xff]
        %v4106 = vld [vmem:[%s13 + $0x558] sm:$0xff]
        %v4107 = vld [vmem:[%s13 + $0x560] sm:$0xff]
        %v4108 = vld [vmem:[%s13 + $0x568] sm:$0xff]
        %v4109 = vld [vmem:[%s13 + $0x570] sm:$0xff]
        %v4110 = vld [vmem:[%s13 + $0x578] sm:$0xff]
        %v4111 = vld [vmem:[%s13 + $0x580] sm:$0xff]
        %v4112 = vld [vmem:[%s13 + $0x588] sm:$0xff]
        %v4113 = vld [vmem:[%s13 + $0x590] sm:$0xff]
        %v4114 = vld [vmem:[%s13 + $0x598] sm:$0xff]
        %v4115 = vld [vmem:[%s13 + $0x5a0] sm:$0xff]
        %v4116 = vld [vmem:[%s13 + $0x5a8] sm:$0xff]
        %v4117 = vld [vmem:[%s13 + $0x5b0] sm:$0xff]
        %v4118 = vld [vmem:[%s13 + $0x5b8] sm:$0xff]
        %v4119 = vld [vmem:[%s13 + $0x5c0] sm:$0xff]
        %v4120 = vld [vmem:[%s13 + $0x5c8] sm:$0xff]
        %v4121 = vld [vmem:[%s13 + $0x5d0] sm:$0xff]
        %v4122 = vld [vmem:[%s13 + $0x5d8] sm:$0xff]
        %v4123 = vld [vmem:[%s13 + $0x5e0] sm:$0xff]
        %v4124 = vld [vmem:[%s13 + $0x5e8] sm:$0xff]
        %v4125 = vld [vmem:[%s13 + $0x5f0] sm:$0xff]
        %v4126 = vld [vmem:[%s13 + $0x5f8] sm:$0xff]
        %v4127 = vld [vmem:[%s13 + $0x600] sm:$0xff]
        %v4128 = vld [vmem:[%s13 + $0x608] sm:$0xff]
        %v4129 = vld [vmem:[%s13 + $0x610] sm:$0xff]
        %v4130 = vld [vmem:[%s13 + $0x618] sm:$0xff]
        %v4131 = vld [vmem:[%s13 + $0x620] sm:$0xff]
        %v4132 = vld [vmem:[%s13 + $0x628] sm:$0xff]
        %v4133 = vld [vmem:[%s13 + $0x630] sm:$0xff]
        %v4134 = vld [vmem:[%s13 + $0x638] sm:$0xff]
        %v4135 = vld [vmem:[%s13 + $0x640] sm:$0xff]
        %v4136 = vld [vmem:[%s13 + $0x648] sm:$0xff]
        %v4137 = vld [vmem:[%s13 + $0x650] sm:$0xff]
        %v4138 = vld [vmem:[%s13 + $0x658] sm:$0xff]
        %v4139 = vld [vmem:[%s13 + $0x660] sm:$0xff]
        %v4140 = vld [vmem:[%s13 + $0x668] sm:$0xff]
        %v4141 = vld [vmem:[%s13 + $0x670] sm:$0xff]
        %v4142 = vld [vmem:[%s13 + $0x678] sm:$0xff]
        %v4143 = vld [vmem:[%s13 + $0x680] sm:$0xff]
        %v4144 = vld [vmem:[%s13 + $0x688] sm:$0xff]
        %v4145 = vld [vmem:[%s13 + $0x690] sm:$0xff]
        %v4146 = vld [vmem:[%s13 + $0x698] sm:$0xff]
        %v4147 = vld [vmem:[%s13 + $0x6a0] sm:$0xff]
        %v4148 = vld [vmem:[%s13 + $0x6a8] sm:$0xff]
        %v4149 = vld [vmem:[%s13 + $0x6b0] sm:$0xff]
        %v4150 = vld [vmem:[%s13 + $0x6b8] sm:$0xff]
        %v4151 = vld [vmem:[%s13 + $0x6c0] sm:$0xff]
        %v4152 = vld [vmem:[%s13 + $0x6c8] sm:$0xff]
        %v4153 = vld [vmem:[%s13 + $0x6d0] sm:$0xff]
        %v4154 = vld [vmem:[%s13 + $0x6d8] sm:$0xff]
        %v4155 = vld [vmem:[%s13 + $0x6e0] sm:$0xff]
        %v4156 = vld [vmem:[%s13 + $0x6e8] sm:$0xff]
        %v4157 = vld [vmem:[%s13 + $0x6f0] sm:$0xff]
        %v4158 = vld [vmem:[%s13 + $0x6f8] sm:$0xff]
        %v4159 = vld [vmem:[%s13 + $0x700] sm:$0xff]
        %v4160 = vld [vmem:[%s13 + $0x708] sm:$0xff]
        %v4161 = vld [vmem:[%s13 + $0x710] sm:$0xff]
        %v4162 = vld [vmem:[%s13 + $0x718] sm:$0xff]
        %v4163 = vld [vmem:[%s13 + $0x720] sm:$0xff]
        %v4164 = vld [vmem:[%s13 + $0x728] sm:$0xff]
        %v4165 = vld [vmem:[%s13 + $0x730] sm:$0xff]
        %v4166 = vld [vmem:[%s13 + $0x738] sm:$0xff]
        %v4167 = vld [vmem:[%s13 + $0x740] sm:$0xff]
        %v4168 = vld [vmem:[%s13 + $0x748] sm:$0xff]
        %v4169 = vld [vmem:[%s13 + $0x750] sm:$0xff]
        %v4170 = vld [vmem:[%s13 + $0x758] sm:$0xff]
        %v4171 = vld [vmem:[%s13 + $0x760] sm:$0xff]
        %v4172 = vld [vmem:[%s13 + $0x768] sm:$0xff]
        %v4173 = vld [vmem:[%s13 + $0x770] sm:$0xff]
        %v4174 = vld [vmem:[%s13 + $0x778] sm:$0xff]
        %v4175 = vld [vmem:[%s13 + $0x780] sm:$0xff]
        %v4176 = vld [vmem:[%s13 + $0x788] sm:$0xff]
        %v4177 = vld [vmem:[%s13 + $0x790] sm:$0xff]
        %v4178 = vld [vmem:[%s14] sm:$0x3]
        %v4422 = vunpack.c.l.b16 %v3935
        %v4423 = vunpack.c.h.b16 %v3935
        %v4424 = vunpack.c.l.b16 %v3936
        %v4425 = vunpack.c.h.b16 %v3936
        %v4426 = vunpack.c.l.b16 %v3937
        %v4427 = vunpack.c.h.b16 %v3937
        %v4428 = vunpack.c.l.b16 %v3938
        %v4429 = vunpack.c.h.b16 %v3938
        %v4430 = vunpack.c.l.b16 %v3939
        %v4431 = vunpack.c.h.b16 %v3939
        %v4432 = vunpack.c.l.b16 %v3940
        %v4433 = vunpack.c.h.b16 %v3940
        %v4434 = vunpack.c.l.b16 %v3941
        %v4435 = vunpack.c.h.b16 %v3941
        %v4436 = vunpack.c.l.b16 %v3942
        %v4437 = vunpack.c.h.b16 %v3942
        %v4438 = vunpack.c.l.b16 %v3943
        %v4439 = vunpack.c.h.b16 %v3943
        %v4440 = vunpack.c.l.b16 %v3944
        %v4441 = vunpack.c.h.b16 %v3944
        %v4442 = vunpack.c.l.b16 %v3945
        %v4443 = vunpack.c.h.b16 %v3945
        %v4444 = vunpack.c.l.b16 %v3946
        %v4445 = vunpack.c.h.b16 %v3946
        %v4446 = vunpack.c.l.b16 %v3947
        %v4447 = vunpack.c.h.b16 %v3947
        %v4448 = vunpack.c.l.b16 %v3948
        %v4449 = vunpack.c.h.b16 %v3948
        %v4450 = vunpack.c.l.b16 %v3949
        %v4451 = vunpack.c.h.b16 %v3949
        %v4452 = vunpack.c.l.b16 %v3950
        %v4453 = vunpack.c.h.b16 %v3950
        %v4454 = vunpack.c.l.b16 %v3951
        %v4455 = vunpack.c.h.b16 %v3951
        %v4456 = vunpack.c.l.b16 %v3952
        %v4457 = vunpack.c.h.b16 %v3952
        %v4458 = vunpack.c.l.b16 %v3953
        %v4459 = vunpack.c.h.b16 %v3953
        %v4460 = vunpack.c.l.b16 %v3954
        %v4461 = vunpack.c.h.b16 %v3954
        %v4462 = vunpack.c.l.b16 %v3955
        %v4463 = vunpack.c.h.b16 %v3955
        %v4464 = vunpack.c.l.b16 %v3956
        %v4465 = vunpack.c.h.b16 %v3956
        %v4466 = vunpack.c.l.b16 %v3957
        %v4467 = vunpack.c.h.b16 %v3957
        %v4468 = vunpack.c.l.b16 %v3958
        %v4469 = vunpack.c.h.b16 %v3958
        %v4470 = vunpack.c.l.b16 %v3959
        %v4471 = vunpack.c.h.b16 %v3959
        %v4472 = vunpack.c.l.b16 %v3960
        %v4473 = vunpack.c.h.b16 %v3960
        %v4474 = vunpack.c.l.b16 %v3961
        %v4475 = vunpack.c.h.b16 %v3961
        %v4476 = vunpack.c.l.b16 %v3962
        %v4477 = vunpack.c.h.b16 %v3962
        %v4478 = vunpack.c.l.b16 %v3963
        %v4479 = vunpack.c.h.b16 %v3963
        %v4480 = vunpack.c.l.b16 %v3964
        %v4481 = vunpack.c.h.b16 %v3964
        %v4482 = vunpack.c.l.b16 %v3965
        %v4483 = vunpack.c.h.b16 %v3965
        %v4484 = vunpack.c.l.b16 %v3966
        %v4485 = vunpack.c.h.b16 %v3966
        %v4486 = vunpack.c.l.b16 %v3967
        %v4487 = vunpack.c.h.b16 %v3967
        %v4488 = vunpack.c.l.b16 %v3968
        %v4489 = vunpack.c.h.b16 %v3968
        %v4490 = vunpack.c.l.b16 %v3969
        %v4491 = vunpack.c.h.b16 %v3969
        %v4492 = vunpack.c.l.b16 %v3970
        %v4493 = vunpack.c.h.b16 %v3970
        %v4494 = vunpack.c.l.b16 %v3971
        %v4495 = vunpack.c.h.b16 %v3971
        %v4496 = vunpack.c.l.b16 %v3972
        %v4497 = vunpack.c.h.b16 %v3972
        %v4498 = vunpack.c.l.b16 %v3973
        %v4499 = vunpack.c.h.b16 %v3973
        %v4500 = vunpack.c.l.b16 %v3974
        %v4501 = vunpack.c.h.b16 %v3974
        %v4502 = vunpack.c.l.b16 %v3975
        %v4503 = vunpack.c.h.b16 %v3975
        %v4504 = vunpack.c.l.b16 %v3976
        %v4505 = vunpack.c.h.b16 %v3976
        %v4506 = vunpack.c.l.b16 %v3977
        %v4507 = vunpack.c.h.b16 %v3977
        %v4508 = vunpack.c.l.b16 %v3978
        %v4509 = vunpack.c.h.b16 %v3978
        %v4510 = vunpack.c.l.b16 %v3979
        %v4511 = vunpack.c.h.b16 %v3979
        %v4512 = vunpack.c.l.b16 %v3980
        %v4513 = vunpack.c.h.b16 %v3980
        %v4514 = vunpack.c.l.b16 %v3981
        %v4515 = vunpack.c.h.b16 %v3981
        %v4516 = vunpack.c.l.b16 %v3982
        %v4517 = vunpack.c.h.b16 %v3982
        %v4518 = vunpack.c.l.b16 %v3983
        %v4519 = vunpack.c.h.b16 %v3983
        %v4520 = vunpack.c.l.b16 %v3984
        %v4521 = vunpack.c.h.b16 %v3984
        %v4522 = vunpack.c.l.b16 %v3985
        %v4523 = vunpack.c.h.b16 %v3985
        %v4524 = vunpack.c.l.b16 %v3986
        %v4525 = vunpack.c.h.b16 %v3986
        %v4526 = vunpack.c.l.b16 %v3987
        %v4527 = vunpack.c.h.b16 %v3987
        %v4528 = vunpack.c.l.b16 %v3988
        %v4529 = vunpack.c.h.b16 %v3988
        %v4530 = vunpack.c.l.b16 %v3989
        %v4531 = vunpack.c.h.b16 %v3989
        %v4532 = vunpack.c.l.b16 %v3990
        %v4533 = vunpack.c.h.b16 %v3990
        %v4534 = vunpack.c.l.b16 %v3991
        %v4535 = vunpack.c.h.b16 %v3991
        %v4536 = vunpack.c.l.b16 %v3992
        %v4537 = vunpack.c.h.b16 %v3992
        %v4538 = vunpack.c.l.b16 %v3993
        %v4539 = vunpack.c.h.b16 %v3993
        %v4540 = vunpack.c.l.b16 %v3994
        %v4541 = vunpack.c.h.b16 %v3994
        %v4542 = vunpack.c.l.b16 %v3995
        %v4543 = vunpack.c.h.b16 %v3995
        %v4544 = vunpack.c.l.b16 %v3996
        %v4545 = vunpack.c.h.b16 %v3996
        %v4546 = vunpack.c.l.b16 %v3997
        %v4547 = vunpack.c.h.b16 %v3997
        %v4548 = vunpack.c.l.b16 %v3998
        %v4549 = vunpack.c.h.b16 %v3998
        %v4550 = vunpack.c.l.b16 %v3999
        %v4551 = vunpack.c.h.b16 %v3999
        %v4552 = vunpack.c.l.b16 %v4000
        %v4553 = vunpack.c.h.b16 %v4000
        %v4554 = vunpack.c.l.b16 %v4001
        %v4555 = vunpack.c.h.b16 %v4001
        %v4556 = vunpack.c.l.b16 %v4002
        %v4557 = vunpack.c.h.b16 %v4002
        %v4558 = vunpack.c.l.b16 %v4003
        %v4559 = vunpack.c.h.b16 %v4003
        %v4560 = vunpack.c.l.b16 %v4004
        %v4561 = vunpack.c.h.b16 %v4004
        %v4562 = vunpack.c.l.b16 %v4005
        %v4563 = vunpack.c.h.b16 %v4005
        %v4564 = vunpack.c.l.b16 %v4006
        %v4565 = vunpack.c.h.b16 %v4006
        %v4566 = vunpack.c.l.b16 %v4007
        %v4567 = vunpack.c.h.b16 %v4007
        %v4568 = vunpack.c.l.b16 %v4008
        %v4569 = vunpack.c.h.b16 %v4008
        %v4570 = vunpack.c.l.b16 %v4009
        %v4571 = vunpack.c.h.b16 %v4009
        %v4572 = vunpack.c.l.b16 %v4010
        %v4573 = vunpack.c.h.b16 %v4010
        %v4574 = vunpack.c.l.b16 %v4011
        %v4575 = vunpack.c.h.b16 %v4011
        %v4576 = vunpack.c.l.b16 %v4012
        %v4577 = vunpack.c.h.b16 %v4012
        %v4578 = vunpack.c.l.b16 %v4013
        %v4579 = vunpack.c.h.b16 %v4013
        %v4580 = vunpack.c.l.b16 %v4014
        %v4581 = vunpack.c.h.b16 %v4014
        %v4582 = vunpack.c.l.b16 %v4015
        %v4583 = vunpack.c.h.b16 %v4015
        %v4584 = vunpack.c.l.b16 %v4016
        %v4585 = vunpack.c.h.b16 %v4016
        %v4586 = vunpack.c.l.b16 %v4017
        %v4587 = vunpack.c.h.b16 %v4017
        %v4588 = vunpack.c.l.b16 %v4018
        %v4589 = vunpack.c.h.b16 %v4018
        %v4590 = vunpack.c.l.b16 %v4019
        %v4591 = vunpack.c.h.b16 %v4019
        %v4592 = vunpack.c.l.b16 %v4020
        %v4593 = vunpack.c.h.b16 %v4020
        %v4594 = vunpack.c.l.b16 %v4021
        %v4595 = vunpack.c.h.b16 %v4021
        %v4596 = vunpack.c.l.b16 %v4022
        %v4597 = vunpack.c.h.b16 %v4022
        %v4598 = vunpack.c.l.b16 %v4023
        %v4599 = vunpack.c.h.b16 %v4023
        %v4600 = vunpack.c.l.b16 %v4024
        %v4601 = vunpack.c.h.b16 %v4024
        %v4602 = vunpack.c.l.b16 %v4025
        %v4603 = vunpack.c.h.b16 %v4025
        %v4604 = vunpack.c.l.b16 %v4026
        %v4605 = vunpack.c.h.b16 %v4026
        %v4606 = vunpack.c.l.b16 %v4027
        %v4607 = vunpack.c.h.b16 %v4027
        %v4608 = vunpack.c.l.b16 %v4028
        %v4609 = vunpack.c.h.b16 %v4028
        %v4610 = vunpack.c.l.b16 %v4029
        %v4611 = vunpack.c.h.b16 %v4029
        %v4612 = vunpack.c.l.b16 %v4030
        %v4613 = vunpack.c.h.b16 %v4030
        %v4614 = vunpack.c.l.b16 %v4031
        %v4615 = vunpack.c.h.b16 %v4031
        %v4616 = vunpack.c.l.b16 %v4032
        %v4617 = vunpack.c.h.b16 %v4032
        %v4618 = vunpack.c.l.b16 %v4033
        %v4619 = vunpack.c.h.b16 %v4033
        %v4620 = vunpack.c.l.b16 %v4034
        %v4621 = vunpack.c.h.b16 %v4034
        %v4622 = vunpack.c.l.b16 %v4035
        %v4623 = vunpack.c.h.b16 %v4035
        %v4624 = vunpack.c.l.b16 %v4036
        %v4625 = vunpack.c.h.b16 %v4036
        %v4626 = vunpack.c.l.b16 %v4037
        %v4627 = vunpack.c.h.b16 %v4037
        %v4628 = vunpack.c.l.b16 %v4038
        %v4629 = vunpack.c.h.b16 %v4038
        %v4630 = vunpack.c.l.b16 %v4039
        %v4631 = vunpack.c.h.b16 %v4039
        %v4632 = vunpack.c.l.b16 %v4040
        %v4633 = vunpack.c.h.b16 %v4040
        %v4634 = vunpack.c.l.b16 %v4041
        %v4635 = vunpack.c.h.b16 %v4041
        %v4636 = vunpack.c.l.b16 %v4042
        %v4637 = vunpack.c.h.b16 %v4042
        %v4638 = vunpack.c.l.b16 %v4043
        %v4639 = vunpack.c.h.b16 %v4043
        %v4640 = vunpack.c.l.b16 %v4044
        %v4641 = vunpack.c.h.b16 %v4044
        %v4642 = vunpack.c.l.b16 %v4045
        %v4643 = vunpack.c.h.b16 %v4045
        %v4644 = vunpack.c.l.b16 %v4046
        %v4645 = vunpack.c.h.b16 %v4046
        %v4646 = vunpack.c.l.b16 %v4047
        %v4647 = vunpack.c.h.b16 %v4047
        %v4648 = vunpack.c.l.b16 %v4048
        %v4649 = vunpack.c.h.b16 %v4048
        %v4650 = vunpack.c.l.b16 %v4049
        %v4651 = vunpack.c.h.b16 %v4049
        %v4652 = vunpack.c.l.b16 %v4050
        %v4653 = vunpack.c.h.b16 %v4050
        %v4654 = vunpack.c.l.b16 %v4051
        %v4655 = vunpack.c.h.b16 %v4051
        %v4656 = vunpack.c.l.b16 %v4052
        %v4657 = vunpack.c.h.b16 %v4052
        %v4658 = vunpack.c.l.b16 %v4053
        %v4659 = vunpack.c.h.b16 %v4053
        %v4660 = vunpack.c.l.b16 %v4054
        %v4661 = vunpack.c.h.b16 %v4054
        %v4662 = vunpack.c.l.b16 %v4055
        %v4663 = vunpack.c.h.b16 %v4055
        %v4664 = vunpack.c.l.b16 %v4056
        %v4665 = vunpack.c.h.b16 %v4056
        %v4666 = vunpack.c.l.b16 %v4057
        %v4667 = vunpack.c.h.b16 %v4057
        %v4668 = vunpack.c.l.b16 %v4058
        %v4669 = vunpack.c.h.b16 %v4058
        %v4670 = vunpack.c.l.b16 %v4059
        %v4671 = vunpack.c.h.b16 %v4059
        %v4672 = vunpack.c.l.b16 %v4060
        %v4673 = vunpack.c.h.b16 %v4060
        %v4674 = vunpack.c.l.b16 %v4061
        %v4675 = vunpack.c.h.b16 %v4061
        %v4676 = vunpack.c.l.b16 %v4062
        %v4677 = vunpack.c.h.b16 %v4062
        %v4678 = vunpack.c.l.b16 %v4063
        %v4679 = vunpack.c.h.b16 %v4063
        %v4680 = vunpack.c.l.b16 %v4064
        %v4681 = vunpack.c.h.b16 %v4064
        %v4682 = vunpack.c.l.b16 %v4065
        %v4683 = vunpack.c.h.b16 %v4065
        %v4684 = vunpack.c.l.b16 %v4066
        %v4685 = vunpack.c.h.b16 %v4066
        %v4686 = vunpack.c.l.b16 %v4067
        %v4687 = vunpack.c.h.b16 %v4067
        %v4688 = vunpack.c.l.b16 %v4068
        %v4689 = vunpack.c.h.b16 %v4068
        %v4690 = vunpack.c.l.b16 %v4069
        %v4691 = vunpack.c.h.b16 %v4069
        %v4692 = vunpack.c.l.b16 %v4070
        %v4693 = vunpack.c.h.b16 %v4070
        %v4694 = vunpack.c.l.b16 %v4071
        %v4695 = vunpack.c.h.b16 %v4071
        %v4696 = vunpack.c.l.b16 %v4072
        %v4697 = vunpack.c.h.b16 %v4072
        %v4698 = vunpack.c.l.b16 %v4073
        %v4699 = vunpack.c.h.b16 %v4073
        %v4700 = vunpack.c.l.b16 %v4074
        %v4701 = vunpack.c.h.b16 %v4074
        %v4702 = vunpack.c.l.b16 %v4075
        %v4703 = vunpack.c.h.b16 %v4075
        %v4704 = vunpack.c.l.b16 %v4076
        %v4705 = vunpack.c.h.b16 %v4076
        %v4706 = vunpack.c.l.b16 %v4077
        %v4707 = vunpack.c.h.b16 %v4077
        %v4708 = vunpack.c.l.b16 %v4078
        %v4709 = vunpack.c.h.b16 %v4078
        %v4710 = vunpack.c.l.b16 %v4079
        %v4711 = vunpack.c.h.b16 %v4079
        %v4712 = vunpack.c.l.b16 %v4080
        %v4713 = vunpack.c.h.b16 %v4080
        %v4714 = vunpack.c.l.b16 %v4081
        %v4715 = vunpack.c.h.b16 %v4081
        %v4716 = vunpack.c.l.b16 %v4082
        %v4717 = vunpack.c.h.b16 %v4082
        %v4718 = vunpack.c.l.b16 %v4083
        %v4719 = vunpack.c.h.b16 %v4083
        %v4720 = vunpack.c.l.b16 %v4084
        %v4721 = vunpack.c.h.b16 %v4084
        %v4722 = vunpack.c.l.b16 %v4085
        %v4723 = vunpack.c.h.b16 %v4085
        %v4724 = vunpack.c.l.b16 %v4086
        %v4725 = vunpack.c.h.b16 %v4086
        %v4726 = vunpack.c.l.b16 %v4087
        %v4727 = vunpack.c.h.b16 %v4087
        %v4728 = vunpack.c.l.b16 %v4088
        %v4729 = vunpack.c.h.b16 %v4088
        %v4730 = vunpack.c.l.b16 %v4089
        %v4731 = vunpack.c.h.b16 %v4089
        %v4732 = vunpack.c.l.b16 %v4090
        %v4733 = vunpack.c.h.b16 %v4090
        %v4734 = vunpack.c.l.b16 %v4091
        %v4735 = vunpack.c.h.b16 %v4091
        %v4736 = vunpack.c.l.b16 %v4092
        %v4737 = vunpack.c.h.b16 %v4092
        %v4738 = vunpack.c.l.b16 %v4093
        %v4739 = vunpack.c.h.b16 %v4093
        %v4740 = vunpack.c.l.b16 %v4094
        %v4741 = vunpack.c.h.b16 %v4094
        %v4742 = vunpack.c.l.b16 %v4095
        %v4743 = vunpack.c.h.b16 %v4095
        %v4744 = vunpack.c.l.b16 %v4096
        %v4745 = vunpack.c.h.b16 %v4096
        %v4746 = vunpack.c.l.b16 %v4097
        %v4747 = vunpack.c.h.b16 %v4097
        %v4748 = vunpack.c.l.b16 %v4098
        %v4749 = vunpack.c.h.b16 %v4098
        %v4750 = vunpack.c.l.b16 %v4099
        %v4751 = vunpack.c.h.b16 %v4099
        %v4752 = vunpack.c.l.b16 %v4100
        %v4753 = vunpack.c.h.b16 %v4100
        %v4754 = vunpack.c.l.b16 %v4101
        %v4755 = vunpack.c.h.b16 %v4101
        %v4756 = vunpack.c.l.b16 %v4102
        %v4757 = vunpack.c.h.b16 %v4102
        %v4758 = vunpack.c.l.b16 %v4103
        %v4759 = vunpack.c.h.b16 %v4103
        %v4760 = vunpack.c.l.b16 %v4104
        %v4761 = vunpack.c.h.b16 %v4104
        %v4762 = vunpack.c.l.b16 %v4105
        %v4763 = vunpack.c.h.b16 %v4105
        %v4764 = vunpack.c.l.b16 %v4106
        %v4765 = vunpack.c.h.b16 %v4106
        %v4766 = vunpack.c.l.b16 %v4107
        %v4767 = vunpack.c.h.b16 %v4107
        %v4768 = vunpack.c.l.b16 %v4108
        %v4769 = vunpack.c.h.b16 %v4108
        %v4770 = vunpack.c.l.b16 %v4109
        %v4771 = vunpack.c.h.b16 %v4109
        %v4772 = vunpack.c.l.b16 %v4110
        %v4773 = vunpack.c.h.b16 %v4110
        %v4774 = vunpack.c.l.b16 %v4111
        %v4775 = vunpack.c.h.b16 %v4111
        %v4776 = vunpack.c.l.b16 %v4112
        %v4777 = vunpack.c.h.b16 %v4112
        %v4778 = vunpack.c.l.b16 %v4113
        %v4779 = vunpack.c.h.b16 %v4113
        %v4780 = vunpack.c.l.b16 %v4114
        %v4781 = vunpack.c.h.b16 %v4114
        %v4782 = vunpack.c.l.b16 %v4115
        %v4783 = vunpack.c.h.b16 %v4115
        %v4784 = vunpack.c.l.b16 %v4116
        %v4785 = vunpack.c.h.b16 %v4116
        %v4786 = vunpack.c.l.b16 %v4117
        %v4787 = vunpack.c.h.b16 %v4117
        %v4788 = vunpack.c.l.b16 %v4118
        %v4789 = vunpack.c.h.b16 %v4118
        %v4790 = vunpack.c.l.b16 %v4119
        %v4791 = vunpack.c.h.b16 %v4119
        %v4792 = vunpack.c.l.b16 %v4120
        %v4793 = vunpack.c.h.b16 %v4120
        %v4794 = vunpack.c.l.b16 %v4121
        %v4795 = vunpack.c.h.b16 %v4121
        %v4796 = vunpack.c.l.b16 %v4122
        %v4797 = vunpack.c.h.b16 %v4122
        %v4798 = vunpack.c.l.b16 %v4123
        %v4799 = vunpack.c.h.b16 %v4123
        %v4800 = vunpack.c.l.b16 %v4124
        %v4801 = vunpack.c.h.b16 %v4124
        %v4802 = vunpack.c.l.b16 %v4125
        %v4803 = vunpack.c.h.b16 %v4125
        %v4804 = vunpack.c.l.b16 %v4126
        %v4805 = vunpack.c.h.b16 %v4126
        %v4806 = vunpack.c.l.b16 %v4127
        %v4807 = vunpack.c.h.b16 %v4127
        %v4808 = vunpack.c.l.b16 %v4128
        %v4809 = vunpack.c.h.b16 %v4128
        %v4810 = vunpack.c.l.b16 %v4129
        %v4811 = vunpack.c.h.b16 %v4129
        %v4812 = vunpack.c.l.b16 %v4130
        %v4813 = vunpack.c.h.b16 %v4130
        %v4814 = vunpack.c.l.b16 %v4131
        %v4815 = vunpack.c.h.b16 %v4131
        %v4816 = vunpack.c.l.b16 %v4132
        %v4817 = vunpack.c.h.b16 %v4132
        %v4818 = vunpack.c.l.b16 %v4133
        %v4819 = vunpack.c.h.b16 %v4133
        %v4820 = vunpack.c.l.b16 %v4134
        %v4821 = vunpack.c.h.b16 %v4134
        %v4822 = vunpack.c.l.b16 %v4135
        %v4823 = vunpack.c.h.b16 %v4135
        %v4824 = vunpack.c.l.b16 %v4136
        %v4825 = vunpack.c.h.b16 %v4136
        %v4826 = vunpack.c.l.b16 %v4137
        %v4827 = vunpack.c.h.b16 %v4137
        %v4828 = vunpack.c.l.b16 %v4138
        %v4829 = vunpack.c.h.b16 %v4138
        %v4830 = vunpack.c.l.b16 %v4139
        %v4831 = vunpack.c.h.b16 %v4139
        %v4832 = vunpack.c.l.b16 %v4140
        %v4833 = vunpack.c.h.b16 %v4140
        %v4834 = vunpack.c.l.b16 %v4141
        %v4835 = vunpack.c.h.b16 %v4141
        %v4836 = vunpack.c.l.b16 %v4142
        %v4837 = vunpack.c.h.b16 %v4142
        %v4838 = vunpack.c.l.b16 %v4143
        %v4839 = vunpack.c.h.b16 %v4143
        %v4840 = vunpack.c.l.b16 %v4144
        %v4841 = vunpack.c.h.b16 %v4144
        %v4842 = vunpack.c.l.b16 %v4145
        %v4843 = vunpack.c.h.b16 %v4145
        %v4844 = vunpack.c.l.b16 %v4146
        %v4845 = vunpack.c.h.b16 %v4146
        %v4846 = vunpack.c.l.b16 %v4147
        %v4847 = vunpack.c.h.b16 %v4147
        %v4848 = vunpack.c.l.b16 %v4148
        %v4849 = vunpack.c.h.b16 %v4148
        %v4850 = vunpack.c.l.b16 %v4149
        %v4851 = vunpack.c.h.b16 %v4149
        %v4852 = vunpack.c.l.b16 %v4150
        %v4853 = vunpack.c.h.b16 %v4150
        %v4854 = vunpack.c.l.b16 %v4151
        %v4855 = vunpack.c.h.b16 %v4151
        %v4856 = vunpack.c.l.b16 %v4152
        %v4857 = vunpack.c.h.b16 %v4152
        %v4858 = vunpack.c.l.b16 %v4153
        %v4859 = vunpack.c.h.b16 %v4153
        %v4860 = vunpack.c.l.b16 %v4154
        %v4861 = vunpack.c.h.b16 %v4154
        %v4862 = vunpack.c.l.b16 %v4155
        %v4863 = vunpack.c.h.b16 %v4155
        %v4864 = vunpack.c.l.b16 %v4156
        %v4865 = vunpack.c.h.b16 %v4156
        %v4866 = vunpack.c.l.b16 %v4157
        %v4867 = vunpack.c.h.b16 %v4157
        %v4868 = vunpack.c.l.b16 %v4158
        %v4869 = vunpack.c.h.b16 %v4158
        %v4870 = vunpack.c.l.b16 %v4159
        %v4871 = vunpack.c.h.b16 %v4159
        %v4872 = vunpack.c.l.b16 %v4160
        %v4873 = vunpack.c.h.b16 %v4160
        %v4874 = vunpack.c.l.b16 %v4161
        %v4875 = vunpack.c.h.b16 %v4161
        %v4876 = vunpack.c.l.b16 %v4162
        %v4877 = vunpack.c.h.b16 %v4162
        %v4878 = vunpack.c.l.b16 %v4163
        %v4879 = vunpack.c.h.b16 %v4163
        %v4880 = vunpack.c.l.b16 %v4164
        %v4881 = vunpack.c.h.b16 %v4164
        %v4882 = vunpack.c.l.b16 %v4165
        %v4883 = vunpack.c.h.b16 %v4165
        %v4884 = vunpack.c.l.b16 %v4166
        %v4885 = vunpack.c.h.b16 %v4166
        %v4886 = vunpack.c.l.b16 %v4167
        %v4887 = vunpack.c.h.b16 %v4167
        %v4888 = vunpack.c.l.b16 %v4168
        %v4889 = vunpack.c.h.b16 %v4168
        %v4890 = vunpack.c.l.b16 %v4169
        %v4891 = vunpack.c.h.b16 %v4169
        %v4892 = vunpack.c.l.b16 %v4170
        %v4893 = vunpack.c.h.b16 %v4170
        %v4894 = vunpack.c.l.b16 %v4171
        %v4895 = vunpack.c.h.b16 %v4171
        %v4896 = vunpack.c.l.b16 %v4172
        %v4897 = vunpack.c.h.b16 %v4172
        %v4898 = vunpack.c.l.b16 %v4173
        %v4899 = vunpack.c.h.b16 %v4173
        %v4900 = vunpack.c.l.b16 %v4174
        %v4901 = vunpack.c.h.b16 %v4174
        %v4902 = vunpack.c.l.b16 %v4175
        %v4903 = vunpack.c.h.b16 %v4175
        %v4904 = vunpack.c.l.b16 %v4176
        %v4905 = vunpack.c.h.b16 %v4176
        %v4906 = vunpack.c.l.b16 %v4177
        %v4907 = vunpack.c.h.b16 %v4177
        %v4908 = vpack.c.b16 %v4424, %v4422
        %v4909 = vpack.c.b16 %v4425, %v4423
        %v4910 = vpack.c.b16 %v4428, %v4426
        %v4911 = vpack.c.b16 %v4429, %v4427
        %v4912 = vpack.c.b16 %v4432, %v4430
        %v4913 = vpack.c.b16 %v4433, %v4431
        %v4914 = vpack.c.b16 %v4436, %v4434
        %v4915 = vpack.c.b16 %v4437, %v4435
        %v4916 = vpack.c.b16 %v4440, %v4438
        %v4917 = vpack.c.b16 %v4441, %v4439
        %v4918 = vpack.c.b16 %v4444, %v4442
        %v4919 = vpack.c.b16 %v4445, %v4443
        %v4920 = vpack.c.b16 %v4448, %v4446
        %v4921 = vpack.c.b16 %v4449, %v4447
        %v4922 = vpack.c.b16 %v4452, %v4450
        %v4923 = vpack.c.b16 %v4453, %v4451
        %v4924 = vpack.c.b16 %v4456, %v4454
        %v4925 = vpack.c.b16 %v4457, %v4455
        %v4926 = vpack.c.b16 %v4460, %v4458
        %v4927 = vpack.c.b16 %v4461, %v4459
        %v4928 = vpack.c.b16 %v4464, %v4462
        %v4929 = vpack.c.b16 %v4465, %v4463
        %v4930 = vpack.c.b16 %v4468, %v4466
        %v4931 = vpack.c.b16 %v4469, %v4467
        %v4932 = vpack.c.b16 %v4472, %v4470
        %v4933 = vpack.c.b16 %v4473, %v4471
        %v4934 = vpack.c.b16 %v4476, %v4474
        %v4935 = vpack.c.b16 %v4477, %v4475
        %v4936 = vpack.c.b16 %v4480, %v4478
        %v4937 = vpack.c.b16 %v4481, %v4479
        %v4938 = vpack.c.b16 %v4484, %v4482
        %v4939 = vpack.c.b16 %v4485, %v4483
        %v4940 = vpack.c.b16 %v4488, %v4486
        %v4941 = vpack.c.b16 %v4489, %v4487
        %v4942 = vpack.c.b16 %v4492, %v4490
        %v4943 = vpack.c.b16 %v4493, %v4491
        %v4944 = vpack.c.b16 %v4496, %v4494
        %v4945 = vpack.c.b16 %v4497, %v4495
        %v4946 = vpack.c.b16 %v4500, %v4498
        %v4947 = vpack.c.b16 %v4501, %v4499
        %v4948 = vpack.c.b16 %v4504, %v4502
        %v4949 = vpack.c.b16 %v4505, %v4503
        %v4950 = vpack.c.b16 %v4508, %v4506
        %v4951 = vpack.c.b16 %v4509, %v4507
        %v4952 = vpack.c.b16 %v4512, %v4510
        %v4953 = vpack.c.b16 %v4513, %v4511
        %v4954 = vpack.c.b16 %v4516, %v4514
        %v4955 = vpack.c.b16 %v4517, %v4515
        %v4956 = vpack.c.b16 %v4520, %v4518
        %v4957 = vpack.c.b16 %v4521, %v4519
        %v4958 = vpack.c.b16 %v4524, %v4522
        %v4959 = vpack.c.b16 %v4525, %v4523
        %v4960 = vpack.c.b16 %v4528, %v4526
        %v4961 = vpack.c.b16 %v4529, %v4527
        %v4962 = vpack.c.b16 %v4532, %v4530
        %v4963 = vpack.c.b16 %v4533, %v4531
        %v4964 = vpack.c.b16 %v4536, %v4534
        %v4965 = vpack.c.b16 %v4537, %v4535
        %v4966 = vpack.c.b16 %v4540, %v4538
        %v4967 = vpack.c.b16 %v4541, %v4539
        %v4968 = vpack.c.b16 %v4544, %v4542
        %v4969 = vpack.c.b16 %v4545, %v4543
        %v4970 = vpack.c.b16 %v4548, %v4546
        %v4971 = vpack.c.b16 %v4549, %v4547
        %v4972 = vpack.c.b16 %v4552, %v4550
        %v4973 = vpack.c.b16 %v4553, %v4551
        %v4974 = vpack.c.b16 %v4556, %v4554
        %v4975 = vpack.c.b16 %v4557, %v4555
        %v4976 = vpack.c.b16 %v4560, %v4558
        %v4977 = vpack.c.b16 %v4561, %v4559
        %v4978 = vpack.c.b16 %v4564, %v4562
        %v4979 = vpack.c.b16 %v4565, %v4563
        %v4980 = vpack.c.b16 %v4568, %v4566
        %v4981 = vpack.c.b16 %v4569, %v4567
        %v4982 = vpack.c.b16 %v4572, %v4570
        %v4983 = vpack.c.b16 %v4573, %v4571
        %v4984 = vpack.c.b16 %v4576, %v4574
        %v4985 = vpack.c.b16 %v4577, %v4575
        %v4986 = vpack.c.b16 %v4580, %v4578
        %v4987 = vpack.c.b16 %v4581, %v4579
        %v4988 = vpack.c.b16 %v4584, %v4582
        %v4989 = vpack.c.b16 %v4585, %v4583
        %v4990 = vpack.c.b16 %v4588, %v4586
        %v4991 = vpack.c.b16 %v4589, %v4587
        %v4992 = vpack.c.b16 %v4592, %v4590
        %v4993 = vpack.c.b16 %v4593, %v4591
        %v4994 = vpack.c.b16 %v4596, %v4594
        %v4995 = vpack.c.b16 %v4597, %v4595
        %v4996 = vpack.c.b16 %v4600, %v4598
        %v4997 = vpack.c.b16 %v4601, %v4599
        %v4998 = vpack.c.b16 %v4604, %v4602
        %v4999 = vpack.c.b16 %v4605, %v4603
        %v5000 = vpack.c.b16 %v4608, %v4606
        %v5001 = vpack.c.b16 %v4609, %v4607
        %v5002 = vpack.c.b16 %v4612, %v4610
        %v5003 = vpack.c.b16 %v4613, %v4611
        %v5004 = vpack.c.b16 %v4616, %v4614
        %v5005 = vpack.c.b16 %v4617, %v4615
        %v5006 = vpack.c.b16 %v4620, %v4618
        %v5007 = vpack.c.b16 %v4621, %v4619
        %v5008 = vpack.c.b16 %v4624, %v4622
        %v5009 = vpack.c.b16 %v4625, %v4623
        %v5010 = vpack.c.b16 %v4628, %v4626
        %v5011 = vpack.c.b16 %v4629, %v4627
        %v5012 = vpack.c.b16 %v4632, %v4630
        %v5013 = vpack.c.b16 %v4633, %v4631
        %v5014 = vpack.c.b16 %v4636, %v4634
        %v5015 = vpack.c.b16 %v4637, %v4635
        %v5016 = vpack.c.b16 %v4640, %v4638
        %v5017 = vpack.c.b16 %v4641, %v4639
        %v5018 = vpack.c.b16 %v4644, %v4642
        %v5019 = vpack.c.b16 %v4645, %v4643
        %v5020 = vpack.c.b16 %v4648, %v4646
        %v5021 = vpack.c.b16 %v4649, %v4647
        %v5022 = vpack.c.b16 %v4652, %v4650
        %v5023 = vpack.c.b16 %v4653, %v4651
        %v5024 = vpack.c.b16 %v4656, %v4654
        %v5025 = vpack.c.b16 %v4657, %v4655
        %v5026 = vpack.c.b16 %v4660, %v4658
        %v5027 = vpack.c.b16 %v4661, %v4659
        %v5028 = vpack.c.b16 %v4664, %v4662
        %v5029 = vpack.c.b16 %v4665, %v4663
        %v5030 = vpack.c.b16 %v4668, %v4666
        %v5031 = vpack.c.b16 %v4669, %v4667
        %v5032 = vpack.c.b16 %v4672, %v4670
        %v5033 = vpack.c.b16 %v4673, %v4671
        %v5034 = vpack.c.b16 %v4676, %v4674
        %v5035 = vpack.c.b16 %v4677, %v4675
        %v5036 = vpack.c.b16 %v4680, %v4678
        %v5037 = vpack.c.b16 %v4681, %v4679
        %v5038 = vpack.c.b16 %v4684, %v4682
        %v5039 = vpack.c.b16 %v4685, %v4683
        %v5040 = vpack.c.b16 %v4688, %v4686
        %v5041 = vpack.c.b16 %v4689, %v4687
        %v5042 = vpack.c.b16 %v4692, %v4690
        %v5043 = vpack.c.b16 %v4693, %v4691
        %v5044 = vpack.c.b16 %v4696, %v4694
        %v5045 = vpack.c.b16 %v4697, %v4695
        %v5046 = vpack.c.b16 %v4700, %v4698
        %v5047 = vpack.c.b16 %v4701, %v4699
        %v5048 = vpack.c.b16 %v4704, %v4702
        %v5049 = vpack.c.b16 %v4705, %v4703
        %v5050 = vpack.c.b16 %v4708, %v4706
        %v5051 = vpack.c.b16 %v4709, %v4707
        %v5052 = vpack.c.b16 %v4712, %v4710
        %v5053 = vpack.c.b16 %v4713, %v4711
        %v5054 = vpack.c.b16 %v4716, %v4714
        %v5055 = vpack.c.b16 %v4717, %v4715
        %v5056 = vpack.c.b16 %v4720, %v4718
        %v5057 = vpack.c.b16 %v4721, %v4719
        %v5058 = vpack.c.b16 %v4724, %v4722
        %v5059 = vpack.c.b16 %v4725, %v4723
        %v5060 = vpack.c.b16 %v4728, %v4726
        %v5061 = vpack.c.b16 %v4729, %v4727
        %v5062 = vpack.c.b16 %v4732, %v4730
        %v5063 = vpack.c.b16 %v4733, %v4731
        %v5064 = vpack.c.b16 %v4736, %v4734
        %v5065 = vpack.c.b16 %v4737, %v4735
        %v5066 = vpack.c.b16 %v4740, %v4738
        %v5067 = vpack.c.b16 %v4741, %v4739
        %v5068 = vpack.c.b16 %v4744, %v4742
        %v5069 = vpack.c.b16 %v4745, %v4743
        %v5070 = vpack.c.b16 %v4748, %v4746
        %v5071 = vpack.c.b16 %v4749, %v4747
        %v5072 = vpack.c.b16 %v4752, %v4750
        %v5073 = vpack.c.b16 %v4753, %v4751
        %v5074 = vpack.c.b16 %v4756, %v4754
        %v5075 = vpack.c.b16 %v4757, %v4755
        %v5076 = vpack.c.b16 %v4760, %v4758
        %v5077 = vpack.c.b16 %v4761, %v4759
        %v5078 = vpack.c.b16 %v4764, %v4762
        %v5079 = vpack.c.b16 %v4765, %v4763
        %v5080 = vpack.c.b16 %v4768, %v4766
        %v5081 = vpack.c.b16 %v4769, %v4767
        %v5082 = vpack.c.b16 %v4772, %v4770
        %v5083 = vpack.c.b16 %v4773, %v4771
        %v5084 = vpack.c.b16 %v4776, %v4774
        %v5085 = vpack.c.b16 %v4777, %v4775
        %v5086 = vpack.c.b16 %v4780, %v4778
        %v5087 = vpack.c.b16 %v4781, %v4779
        %v5088 = vpack.c.b16 %v4784, %v4782
        %v5089 = vpack.c.b16 %v4785, %v4783
        %v5090 = vpack.c.b16 %v4788, %v4786
        %v5091 = vpack.c.b16 %v4789, %v4787
        %v5092 = vpack.c.b16 %v4792, %v4790
        %v5093 = vpack.c.b16 %v4793, %v4791
        %v5094 = vpack.c.b16 %v4796, %v4794
        %v5095 = vpack.c.b16 %v4797, %v4795
        %v5096 = vpack.c.b16 %v4800, %v4798
        %v5097 = vpack.c.b16 %v4801, %v4799
        %v5098 = vpack.c.b16 %v4804, %v4802
        %v5099 = vpack.c.b16 %v4805, %v4803
        %v5100 = vpack.c.b16 %v4808, %v4806
        %v5101 = vpack.c.b16 %v4809, %v4807
        %v5102 = vpack.c.b16 %v4812, %v4810
        %v5103 = vpack.c.b16 %v4813, %v4811
        %v5104 = vpack.c.b16 %v4816, %v4814
        %v5105 = vpack.c.b16 %v4817, %v4815
        %v5106 = vpack.c.b16 %v4820, %v4818
        %v5107 = vpack.c.b16 %v4821, %v4819
        %v5108 = vpack.c.b16 %v4824, %v4822
        %v5109 = vpack.c.b16 %v4825, %v4823
        %v5110 = vpack.c.b16 %v4828, %v4826
        %v5111 = vpack.c.b16 %v4829, %v4827
        %v5112 = vpack.c.b16 %v4832, %v4830
        %v5113 = vpack.c.b16 %v4833, %v4831
        %v5114 = vpack.c.b16 %v4836, %v4834
        %v5115 = vpack.c.b16 %v4837, %v4835
        %v5116 = vpack.c.b16 %v4840, %v4838
        %v5117 = vpack.c.b16 %v4841, %v4839
        %v5118 = vpack.c.b16 %v4844, %v4842
        %v5119 = vpack.c.b16 %v4845, %v4843
        %v5120 = vpack.c.b16 %v4848, %v4846
        %v5121 = vpack.c.b16 %v4849, %v4847
        %v5122 = vpack.c.b16 %v4852, %v4850
        %v5123 = vpack.c.b16 %v4853, %v4851
        %v5124 = vpack.c.b16 %v4856, %v4854
        %v5125 = vpack.c.b16 %v4857, %v4855
        %v5126 = vpack.c.b16 %v4860, %v4858
        %v5127 = vpack.c.b16 %v4861, %v4859
        %v5128 = vpack.c.b16 %v4864, %v4862
        %v5129 = vpack.c.b16 %v4865, %v4863
        %v5130 = vpack.c.b16 %v4868, %v4866
        %v5131 = vpack.c.b16 %v4869, %v4867
        %v5132 = vpack.c.b16 %v4872, %v4870
        %v5133 = vpack.c.b16 %v4873, %v4871
        %v5134 = vpack.c.b16 %v4876, %v4874
        %v5135 = vpack.c.b16 %v4877, %v4875
        %v5136 = vpack.c.b16 %v4880, %v4878
        %v5137 = vpack.c.b16 %v4881, %v4879
        %v5138 = vpack.c.b16 %v4884, %v4882
        %v5139 = vpack.c.b16 %v4885, %v4883
        %v5140 = vpack.c.b16 %v4888, %v4886
        %v5141 = vpack.c.b16 %v4889, %v4887
        %v5142 = vpack.c.b16 %v4892, %v4890
        %v5143 = vpack.c.b16 %v4893, %v4891
        %v5144 = vpack.c.b16 %v4896, %v4894
        %v5145 = vpack.c.b16 %v4897, %v4895
        %v5146 = vpack.c.b16 %v4900, %v4898
        %v5147 = vpack.c.b16 %v4901, %v4899
        %v5148 = vpack.c.b16 %v4904, %v4902
        %v5149 = vpack.c.b16 %v4905, %v4903
        %v5150 = vpack.c.b16 %v4906, %v4906
        %v5151 = vpack.c.b16 %v4907, %v4907
        %v5395 = vlaneseq
        %v5396 = vshrl.u32 %v5395, 7
        %v5397 = vsub.s32 0, %v5396
        %v5398 = vrot.slane %v4178, %v5397
        %v5399 = vlaneseq
        %v5400 = vshrl.u32 %v5399, 7
        %v5401 = vsub.s32 1, %v5400
        %v5402 = vrot.slane %v4178, %v5401
        %vm5405 = vcmask 195584
        %v5407 = vsel %vm5405, %v3934, 0
        %v5410 = vsel %vm1421, %v5150, 0
        %v5413 = vsel %vm1421, %v5151, 0
        %5415 = vmatprep.subr.bf16.mxu0 %v4909
        %5416 = vmatpush1.bf16.msra.mxu0 %v4908
        %5417 = vmatprep.subr.bf16.mxu0 %v4911
        %5418 = vmatpush1.bf16.msra.mxu0 %v4910
        %5419 = vmatprep.subr.bf16.mxu0 %v4913
        %5420 = vmatpush1.bf16.msra.mxu0 %v4912
        %5421 = vmatprep.subr.bf16.mxu0 %v4915
        %5422 = vmatpush1.bf16.msra.mxu0 %v4914
        %5423 = vmatprep.subr.bf16.mxu0 %v4917
        %5424 = vmatpush1.bf16.msra.mxu0 %v4916
        %5425 = vmatprep.subr.bf16.mxu0 %v4919
        %5426 = vmatpush1.bf16.msra.mxu0 %v4918
        %5427 = vmatprep.subr.bf16.mxu0 %v4921
        %5428 = vmatpush1.bf16.msra.mxu0 %v4920
        %5429 = vmatprep.subr.bf16.mxu0 %v4923
        %5430 = vmatpush1.bf16.msra.mxu0 %v4922
        %5431 = vmatprep.subr.bf16.mxu0 %v4925
        %5432 = vmatpush1.bf16.msra.mxu0 %v4924
        %5433 = vmatprep.subr.bf16.mxu0 %v4927
        %5434 = vmatpush1.bf16.msra.mxu0 %v4926
        %5435 = vmatprep.subr.bf16.mxu0 %v4929
        %5436 = vmatpush1.bf16.msra.mxu0 %v4928
        %5437 = vmatprep.subr.bf16.mxu0 %v4931
        %5438 = vmatpush1.bf16.msra.mxu0 %v4930
        %5439 = vmatprep.subr.bf16.mxu0 %v4933
        %5440 = vmatpush1.bf16.msra.mxu0 %v4932
        %5441 = vmatprep.subr.bf16.mxu0 %v4935
        %5442 = vmatpush1.bf16.msra.mxu0 %v4934
        %5443 = vmatprep.subr.bf16.mxu0 %v4937
        %5444 = vmatpush1.bf16.msra.mxu0 %v4936
        %5445 = vmatprep.subr.bf16.mxu0 %v4939
        %5446 = vmatpush1.bf16.msra.mxu0 %v4938
        %5447 = vmatprep.mubr.bf16.mxu0 %v3920
        %5448 = vmatmul.mubr.bf16.gmra.mrb[0].mxu0 %v3919
        %v5449 = vpop.f32.mrb[0].mxu0
        %v5450 = vadd.f32 %v5398, %v5449
        %v5451 = vpop.f32.mrb[0].mxu0
        %v5452 = vadd.f32 %v5402, %v5451
        %v5453 = vpop.f32.mrb[0].mxu0
        %v5454 = vpop.f32.mrb[0].mxu0
        %5455 = vdwg.mxu0
        %5456 = vmatprep.subr.bf16.mxu0 %v4941
        %5457 = vmatpush1.bf16.msra.mxu0 %v4940
        %5458 = vmatprep.subr.bf16.mxu0 %v4943
        %5459 = vmatpush1.bf16.msra.mxu0 %v4942
        %5460 = vmatprep.subr.bf16.mxu0 %v4945
        %5461 = vmatpush1.bf16.msra.mxu0 %v4944
        %5462 = vmatprep.subr.bf16.mxu0 %v4947
        %5463 = vmatpush1.bf16.msra.mxu0 %v4946
        %5464 = vmatprep.subr.bf16.mxu0 %v4949
        %5465 = vmatpush1.bf16.msra.mxu0 %v4948
        %5466 = vmatprep.subr.bf16.mxu0 %v4951
        %5467 = vmatpush1.bf16.msra.mxu0 %v4950
        %5468 = vmatprep.subr.bf16.mxu0 %v4953
        %5469 = vmatpush1.bf16.msra.mxu0 %v4952
        %5470 = vmatprep.subr.bf16.mxu0 %v4955
        %5471 = vmatpush1.bf16.msra.mxu0 %v4954
        %5472 = vmatprep.subr.bf16.mxu0 %v4957
        %5473 = vmatpush1.bf16.msra.mxu0 %v4956
        %5474 = vmatprep.subr.bf16.mxu0 %v4959
        %5475 = vmatpush1.bf16.msra.mxu0 %v4958
        %5476 = vmatprep.subr.bf16.mxu0 %v4961
        %5477 = vmatpush1.bf16.msra.mxu0 %v4960
        %5478 = vmatprep.subr.bf16.mxu0 %v4963
        %5479 = vmatpush1.bf16.msra.mxu0 %v4962
        %5480 = vmatprep.subr.bf16.mxu0 %v4965
        %5481 = vmatpush1.bf16.msra.mxu0 %v4964
        %5482 = vmatprep.subr.bf16.mxu0 %v4967
        %5483 = vmatpush1.bf16.msra.mxu0 %v4966
        %5484 = vmatprep.subr.bf16.mxu0 %v4969
        %5485 = vmatpush1.bf16.msra.mxu0 %v4968
        %5486 = vmatprep.subr.bf16.mxu0 %v4971
        %5487 = vmatpush1.bf16.msra.mxu0 %v4970
        %5488 = vmatprep.mubr.bf16.mxu0 %v3922
        %5489 = vmatmul.mubr.bf16.gmra.mrb[0].mxu0 %v3921
        %v5490 = vpop.f32.mrb[0].mxu0
        %v5491 = vadd.f32 %v5450, %v5490
        %v5492 = vpop.f32.mrb[0].mxu0
        %v5493 = vadd.f32 %v5452, %v5492
        %v5494 = vpop.f32.mrb[0].mxu0
        %v5495 = vpop.f32.mrb[0].mxu0
        %5496 = vdwg.mxu0
        %5497 = vmatprep.subr.bf16.mxu0 %v4973
        %5498 = vmatpush1.bf16.msra.mxu0 %v4972
        %5499 = vmatprep.subr.bf16.mxu0 %v4975
        %5500 = vmatpush1.bf16.msra.mxu0 %v4974
        %5501 = vmatprep.subr.bf16.mxu0 %v4977
        %5502 = vmatpush1.bf16.msra.mxu0 %v4976
        %5503 = vmatprep.subr.bf16.mxu0 %v4979
        %5504 = vmatpush1.bf16.msra.mxu0 %v4978
        %5505 = vmatprep.subr.bf16.mxu0 %v4981
        %5506 = vmatpush1.bf16.msra.mxu0 %v4980
        %5507 = vmatprep.subr.bf16.mxu0 %v4983
        %5508 = vmatpush1.bf16.msra.mxu0 %v4982
        %5509 = vmatprep.subr.bf16.mxu0 %v4985
        %5510 = vmatpush1.bf16.msra.mxu0 %v4984
        %5511 = vmatprep.subr.bf16.mxu0 %v4987
        %5512 = vmatpush1.bf16.msra.mxu0 %v4986
        %5513 = vmatprep.subr.bf16.mxu0 %v4989
        %5514 = vmatpush1.bf16.msra.mxu0 %v4988
        %5515 = vmatprep.subr.bf16.mxu0 %v4991
        %5516 = vmatpush1.bf16.msra.mxu0 %v4990
        %5517 = vmatprep.subr.bf16.mxu0 %v4993
        %5518 = vmatpush1.bf16.msra.mxu0 %v4992
        %5519 = vmatprep.subr.bf16.mxu0 %v4995
        %5520 = vmatpush1.bf16.msra.mxu0 %v4994
        %5521 = vmatprep.subr.bf16.mxu0 %v4997
        %5522 = vmatpush1.bf16.msra.mxu0 %v4996
        %5523 = vmatprep.subr.bf16.mxu0 %v4999
        %5524 = vmatpush1.bf16.msra.mxu0 %v4998
        %5525 = vmatprep.subr.bf16.mxu0 %v5001
        %5526 = vmatpush1.bf16.msra.mxu0 %v5000
        %5527 = vmatprep.subr.bf16.mxu0 %v5003
        %5528 = vmatpush1.bf16.msra.mxu0 %v5002
        %5529 = vmatprep.mubr.bf16.mxu0 %v3924
        %5530 = vmatmul.mubr.bf16.gmra.mrb[0].mxu0 %v3923
        %v5531 = vpop.f32.mrb[0].mxu0
        %v5532 = vadd.f32 %v5491, %v5531
        %v5533 = vpop.f32.mrb[0].mxu0
        %v5534 = vadd.f32 %v5493, %v5533
        %v5535 = vpop.f32.mrb[0].mxu0
        %v5536 = vpop.f32.mrb[0].mxu0
        %5537 = vdwg.mxu0
        %5538 = vmatprep.subr.bf16.mxu0 %v5005
        %5539 = vmatpush1.bf16.msra.mxu0 %v5004
        %5540 = vmatprep.subr.bf16.mxu0 %v5007
        %5541 = vmatpush1.bf16.msra.mxu0 %v5006
        %5542 = vmatprep.subr.bf16.mxu0 %v5009
        %5543 = vmatpush1.bf16.msra.mxu0 %v5008
        %5544 = vmatprep.subr.bf16.mxu0 %v5011
        %5545 = vmatpush1.bf16.msra.mxu0 %v5010
        %5546 = vmatprep.subr.bf16.mxu0 %v5013
        %5547 = vmatpush1.bf16.msra.mxu0 %v5012
        %5548 = vmatprep.subr.bf16.mxu0 %v5015
        %5549 = vmatpush1.bf16.msra.mxu0 %v5014
        %5550 = vmatprep.subr.bf16.mxu0 %v5017
        %5551 = vmatpush1.bf16.msra.mxu0 %v5016
        %5552 = vmatprep.subr.bf16.mxu0 %v5019
        %5553 = vmatpush1.bf16.msra.mxu0 %v5018
        %5554 = vmatprep.subr.bf16.mxu0 %v5021
        %5555 = vmatpush1.bf16.msra.mxu0 %v5020
        %5556 = vmatprep.subr.bf16.mxu0 %v5023
        %5557 = vmatpush1.bf16.msra.mxu0 %v5022
        %5558 = vmatprep.subr.bf16.mxu0 %v5025
        %5559 = vmatpush1.bf16.msra.mxu0 %v5024
        %5560 = vmatprep.subr.bf16.mxu0 %v5027
        %5561 = vmatpush1.bf16.msra.mxu0 %v5026
        %5562 = vmatprep.subr.bf16.mxu0 %v5029
        %5563 = vmatpush1.bf16.msra.mxu0 %v5028
        %5564 = vmatprep.subr.bf16.mxu0 %v5031
        %5565 = vmatpush1.bf16.msra.mxu0 %v5030
        %5566 = vmatprep.subr.bf16.mxu0 %v5033
        %5567 = vmatpush1.bf16.msra.mxu0 %v5032
        %5568 = vmatprep.subr.bf16.mxu0 %v5035
        %5569 = vmatpush1.bf16.msra.mxu0 %v5034
        %5570 = vmatprep.mubr.bf16.mxu0 %v3926
        %5571 = vmatmul.mubr.bf16.gmra.mrb[0].mxu0 %v3925
        %v5572 = vpop.f32.mrb[0].mxu0
        %v5573 = vadd.f32 %v5532, %v5572
        %v5574 = vpop.f32.mrb[0].mxu0
        %v5575 = vadd.f32 %v5534, %v5574
        %v5576 = vpop.f32.mrb[0].mxu0
        %v5577 = vpop.f32.mrb[0].mxu0
        %5578 = vdwg.mxu0
        %5579 = vmatprep.subr.bf16.mxu0 %v5037
        %5580 = vmatpush1.bf16.msra.mxu0 %v5036
        %5581 = vmatprep.subr.bf16.mxu0 %v5039
        %5582 = vmatpush1.bf16.msra.mxu0 %v5038
        %5583 = vmatprep.subr.bf16.mxu0 %v5041
        %5584 = vmatpush1.bf16.msra.mxu0 %v5040
        %5585 = vmatprep.subr.bf16.mxu0 %v5043
        %5586 = vmatpush1.bf16.msra.mxu0 %v5042
        %5587 = vmatprep.subr.bf16.mxu0 %v5045
        %5588 = vmatpush1.bf16.msra.mxu0 %v5044
        %5589 = vmatprep.subr.bf16.mxu0 %v5047
        %5590 = vmatpush1.bf16.msra.mxu0 %v5046
        %5591 = vmatprep.subr.bf16.mxu0 %v5049
        %5592 = vmatpush1.bf16.msra.mxu0 %v5048
        %5593 = vmatprep.subr.bf16.mxu0 %v5051
        %5594 = vmatpush1.bf16.msra.mxu0 %v5050
        %5595 = vmatprep.subr.bf16.mxu0 %v5053
        %5596 = vmatpush1.bf16.msra.mxu0 %v5052
        %5597 = vmatprep.subr.bf16.mxu0 %v5055
        %5598 = vmatpush1.bf16.msra.mxu0 %v5054
        %5599 = vmatprep.subr.bf16.mxu0 %v5057
        %5600 = vmatpush1.bf16.msra.mxu0 %v5056
        %5601 = vmatprep.subr.bf16.mxu0 %v5059
        %5602 = vmatpush1.bf16.msra.mxu0 %v5058
        %5603 = vmatprep.subr.bf16.mxu0 %v5061
        %5604 = vmatpush1.bf16.msra.mxu0 %v5060
        %5605 = vmatprep.subr.bf16.mxu0 %v5063
        %5606 = vmatpush1.bf16.msra.mxu0 %v5062
        %5607 = vmatprep.subr.bf16.mxu0 %v5065
        %5608 = vmatpush1.bf16.msra.mxu0 %v5064
        %5609 = vmatprep.subr.bf16.mxu0 %v5067
        %5610 = vmatpush1.bf16.msra.mxu0 %v5066
        %5611 = vmatprep.mubr.bf16.mxu0 %v3928
        %5612 = vmatmul.mubr.bf16.gmra.mrb[0].mxu0 %v3927
        %v5613 = vpop.f32.mrb[0].mxu0
        %v5614 = vadd.f32 %v5573, %v5613
        %v5615 = vpop.f32.mrb[0].mxu0
        %v5616 = vadd.f32 %v5575, %v5615
        %v5617 = vpop.f32.mrb[0].mxu0
        %v5618 = vpop.f32.mrb[0].mxu0
        %5619 = vdwg.mxu0
        %5620 = vmatprep.subr.bf16.mxu0 %v5069
        %5621 = vmatpush1.bf16.msra.mxu0 %v5068
        %5622 = vmatprep.subr.bf16.mxu0 %v5071
        %5623 = vmatpush1.bf16.msra.mxu0 %v5070
        %5624 = vmatprep.subr.bf16.mxu0 %v5073
        %5625 = vmatpush1.bf16.msra.mxu0 %v5072
        %5626 = vmatprep.subr.bf16.mxu0 %v5075
        %5627 = vmatpush1.bf16.msra.mxu0 %v5074
        %5628 = vmatprep.subr.bf16.mxu0 %v5077
        %5629 = vmatpush1.bf16.msra.mxu0 %v5076
        %5630 = vmatprep.subr.bf16.mxu0 %v5079
        %5631 = vmatpush1.bf16.msra.mxu0 %v5078
        %5632 = vmatprep.subr.bf16.mxu0 %v5081
        %5633 = vmatpush1.bf16.msra.mxu0 %v5080
        %5634 = vmatprep.subr.bf16.mxu0 %v5083
        %5635 = vmatpush1.bf16.msra.mxu0 %v5082
        %5636 = vmatprep.subr.bf16.mxu0 %v5085
        %5637 = vmatpush1.bf16.msra.mxu0 %v5084
        %5638 = vmatprep.subr.bf16.mxu0 %v5087
        %5639 = vmatpush1.bf16.msra.mxu0 %v5086
        %5640 = vmatprep.subr.bf16.mxu0 %v5089
        %5641 = vmatpush1.bf16.msra.mxu0 %v5088
        %5642 = vmatprep.subr.bf16.mxu0 %v5091
        %5643 = vmatpush1.bf16.msra.mxu0 %v5090
        %5644 = vmatprep.subr.bf16.mxu0 %v5093
        %5645 = vmatpush1.bf16.msra.mxu0 %v5092
        %5646 = vmatprep.subr.bf16.mxu0 %v5095
        %5647 = vmatpush1.bf16.msra.mxu0 %v5094
        %5648 = vmatprep.subr.bf16.mxu0 %v5097
        %5649 = vmatpush1.bf16.msra.mxu0 %v5096
        %5650 = vmatprep.subr.bf16.mxu0 %v5099
        %5651 = vmatpush1.bf16.msra.mxu0 %v5098
        %5652 = vmatprep.mubr.bf16.mxu0 %v3930
        %5653 = vmatmul.mubr.bf16.gmra.mrb[0].mxu0 %v3929
        %v5654 = vpop.f32.mrb[0].mxu0
        %v5655 = vadd.f32 %v5614, %v5654
        %v5656 = vpop.f32.mrb[0].mxu0
        %v5657 = vadd.f32 %v5616, %v5656
        %v5658 = vpop.f32.mrb[0].mxu0
        %v5659 = vpop.f32.mrb[0].mxu0
        %5660 = vdwg.mxu0
        %5661 = vmatprep.subr.bf16.mxu0 %v5101
        %5662 = vmatpush1.bf16.msra.mxu0 %v5100
        %5663 = vmatprep.subr.bf16.mxu0 %v5103
        %5664 = vmatpush1.bf16.msra.mxu0 %v5102
        %5665 = vmatprep.subr.bf16.mxu0 %v5105
        %5666 = vmatpush1.bf16.msra.mxu0 %v5104
        %5667 = vmatprep.subr.bf16.mxu0 %v5107
        %5668 = vmatpush1.bf16.msra.mxu0 %v5106
        %5669 = vmatprep.subr.bf16.mxu0 %v5109
        %5670 = vmatpush1.bf16.msra.mxu0 %v5108
        %5671 = vmatprep.subr.bf16.mxu0 %v5111
        %5672 = vmatpush1.bf16.msra.mxu0 %v5110
        %5673 = vmatprep.subr.bf16.mxu0 %v5113
        %5674 = vmatpush1.bf16.msra.mxu0 %v5112
        %5675 = vmatprep.subr.bf16.mxu0 %v5115
        %5676 = vmatpush1.bf16.msra.mxu0 %v5114
        %5677 = vmatprep.subr.bf16.mxu0 %v5117
        %5678 = vmatpush1.bf16.msra.mxu0 %v5116
        %5679 = vmatprep.subr.bf16.mxu0 %v5119
        %5680 = vmatpush1.bf16.msra.mxu0 %v5118
        %5681 = vmatprep.subr.bf16.mxu0 %v5121
        %5682 = vmatpush1.bf16.msra.mxu0 %v5120
        %5683 = vmatprep.subr.bf16.mxu0 %v5123
        %5684 = vmatpush1.bf16.msra.mxu0 %v5122
        %5685 = vmatprep.subr.bf16.mxu0 %v5125
        %5686 = vmatpush1.bf16.msra.mxu0 %v5124
        %5687 = vmatprep.subr.bf16.mxu0 %v5127
        %5688 = vmatpush1.bf16.msra.mxu0 %v5126
        %5689 = vmatprep.subr.bf16.mxu0 %v5129
        %5690 = vmatpush1.bf16.msra.mxu0 %v5128
        %5691 = vmatprep.subr.bf16.mxu0 %v5131
        %5692 = vmatpush1.bf16.msra.mxu0 %v5130
        %5693 = vmatprep.mubr.bf16.mxu0 %v3932
        %5694 = vmatmul.mubr.bf16.gmra.mrb[0].mxu0 %v3931
        %v5695 = vpop.f32.mrb[0].mxu0
        %v5696 = vadd.f32 %v5655, %v5695
        %v5697 = vpop.f32.mrb[0].mxu0
        %v5698 = vadd.f32 %v5657, %v5697
        %v5699 = vpop.f32.mrb[0].mxu0
        %v5700 = vpop.f32.mrb[0].mxu0
        %5701 = vdwg.mxu0
        %5702 = vmatprep.subr.bf16.mxu0 %v5133
        %5703 = vmatpush1.bf16.msra.mxu0 %v5132
        %5704 = vmatprep.subr.bf16.mxu0 %v5135
        %5705 = vmatpush1.bf16.msra.mxu0 %v5134
        %5706 = vmatprep.subr.bf16.mxu0 %v5137
        %5707 = vmatpush1.bf16.msra.mxu0 %v5136
        %5708 = vmatprep.subr.bf16.mxu0 %v5139
        %5709 = vmatpush1.bf16.msra.mxu0 %v5138
        %5710 = vmatprep.subr.bf16.mxu0 %v5141
        %5711 = vmatpush1.bf16.msra.mxu0 %v5140
        %5712 = vmatprep.subr.bf16.mxu0 %v5143
        %5713 = vmatpush1.bf16.msra.mxu0 %v5142
        %5714 = vmatprep.subr.bf16.mxu0 %v5145
        %5715 = vmatpush1.bf16.msra.mxu0 %v5144
        %5716 = vmatprep.subr.bf16.mxu0 %v5147
        %5717 = vmatpush1.bf16.msra.mxu0 %v5146
        %5718 = vmatprep.subr.bf16.mxu0 %v5149
        %5719 = vmatpush1.bf16.msra.mxu0 %v5148
        %5720 = vmatprep.subr.bf16.mxu0 %v5413
        %5721 = vmatpush1.bf16.msra.mxu0 %v5410
        %5722 = vmatprep.subr.bf16.mxu0 0
        %5723 = vmatpush1.bf16.msra.mxu0 0
        %5724 = vmatprep.subr.bf16.mxu0 0
        %5725 = vmatpush1.bf16.msra.mxu0 0
        %5726 = vmatprep.subr.bf16.mxu0 0
        %5727 = vmatpush1.bf16.msra.mxu0 0
        %5728 = vmatprep.subr.bf16.mxu0 0
        %5729 = vmatpush1.bf16.msra.mxu0 0
        %5730 = vmatprep.subr.bf16.mxu0 0
        %5731 = vmatpush1.bf16.msra.mxu0 0
        %5732 = vmatprep.subr.bf16.mxu0 0
        %5733 = vmatpush1.bf16.msra.mxu0 0
        %5734 = vmatprep.mubr.bf16.mxu0 %v5407
        %5735 = vmatmul.mubr.bf16.gmra.mrb[0].mxu0 %v3933
        %v5736 = vpop.f32.mrb[0].mxu0
        %v5737 = vadd.f32 %v5696, %v5736
        %v5738 = vpop.f32.mrb[0].mxu0
        %v5739 = vadd.f32 %v5698, %v5738
        %v5740 = vpop.f32.mrb[0].mxu0
        %v5741 = vpop.f32.mrb[0].mxu0
        %5742 = vdwg.mxu0
        %v5743 = vmax.f32 %v5737, 0.0
        %v5744 = vmax.f32 %v5739, 0.0
        %v5745 = vpack.c.bf16 %v5743, %v5743
        %v5746 = vpack.c.bf16 %v5744, %v5744
        %v5747 = vld [vmem:[#allocation7] sm:$0xf]
        %v5748 = vld [vmem:[#allocation7 + $0x4] sm:$0xf]
        %v5749 = vld [vmem:[#allocation7 + $0x8] sm:$0xf]
        %v5750 = vld [vmem:[#allocation7 + $0xc] sm:$0xf]
        %v5751 = vld [vmem:[#allocation7 + $0x10] sm:$0xf]
        %v5752 = vld [vmem:[#allocation7 + $0x14] sm:$0xf]
        %v5753 = vld [vmem:[#allocation7 + $0x18] sm:$0xf]
        %v5754 = vld [vmem:[#allocation7 + $0x1c] sm:$0xf]
        %v5755 = vld [vmem:[#allocation7 + $0x20] sm:$0xf]
        %v5756 = vld [vmem:[#allocation7 + $0x24] sm:$0xf]
        %v5757 = vld [vmem:[#allocation7 + $0x28] sm:$0xf]
        %v5758 = vld [vmem:[#allocation7 + $0x2c] sm:$0xf]
        %v5759 = vld [vmem:[#allocation7 + $0x30] sm:$0xf]
        %v5760 = vld [vmem:[#allocation7 + $0x34] sm:$0xf]
        %v5761 = vld [vmem:[#allocation7 + $0x38] sm:$0xf]
        %v5762 = vld [vmem:[#allocation7 + $0x3c] sm:$0xf]
        %v5763 = vld [vmem:[#allocation7 + $0x40] sm:$0xf]
        %v5764 = vld [vmem:[#allocation7 + $0x44] sm:$0xf]
        %v5765 = vld [vmem:[#allocation7 + $0x48] sm:$0xf]
        %v5766 = vld [vmem:[#allocation7 + $0x4c] sm:$0xf]
        %v5767 = vld [vmem:[#allocation7 + $0x50] sm:$0xf]
        %v5768 = vld [vmem:[#allocation7 + $0x54] sm:$0xf]
        %v5769 = vld [vmem:[#allocation7 + $0x58] sm:$0xf]
        %v5770 = vld [vmem:[#allocation7 + $0x5c] sm:$0xf]
        %v5771 = vld [vmem:[#allocation7 + $0x60] sm:$0xf]
        %v5772 = vld [vmem:[#allocation7 + $0x64] sm:$0xf]
        %v5773 = vld [vmem:[#allocation7 + $0x68] sm:$0xf]
        %v5774 = vld [vmem:[#allocation7 + $0x6c] sm:$0xf]
        %v5775 = vld [vmem:[#allocation7 + $0x70] sm:$0xf]
        %v5776 = vld [vmem:[#allocation7 + $0x74] sm:$0xf]
        %v5777 = vld [vmem:[#allocation7 + $0x78] sm:$0xf]
        %v5778 = vld [vmem:[#allocation7 + $0x7c] sm:$0xf]
        %v5779 = vld [vmem:[%s16] sm:$0x1]
        %v5812 = vunpack.c.l.b16 %v5747
        %v5813 = vunpack.c.l.b16 %v5748
        %v5814 = vunpack.c.l.b16 %v5749
        %v5815 = vunpack.c.l.b16 %v5750
        %v5816 = vunpack.c.l.b16 %v5751
        %v5817 = vunpack.c.l.b16 %v5752
        %v5818 = vunpack.c.l.b16 %v5753
        %v5819 = vunpack.c.l.b16 %v5754
        %v5820 = vunpack.c.l.b16 %v5755
        %v5821 = vunpack.c.l.b16 %v5756
        %v5822 = vunpack.c.l.b16 %v5757
        %v5823 = vunpack.c.l.b16 %v5758
        %v5824 = vunpack.c.l.b16 %v5759
        %v5825 = vunpack.c.l.b16 %v5760
        %v5826 = vunpack.c.l.b16 %v5761
        %v5827 = vunpack.c.l.b16 %v5762
        %v5828 = vunpack.c.l.b16 %v5763
        %v5829 = vunpack.c.l.b16 %v5764
        %v5830 = vunpack.c.l.b16 %v5765
        %v5831 = vunpack.c.l.b16 %v5766
        %v5832 = vunpack.c.l.b16 %v5767
        %v5833 = vunpack.c.l.b16 %v5768
        %v5834 = vunpack.c.l.b16 %v5769
        %v5835 = vunpack.c.l.b16 %v5770
        %v5836 = vunpack.c.l.b16 %v5771
        %v5837 = vunpack.c.l.b16 %v5772
        %v5838 = vunpack.c.l.b16 %v5773
        %v5839 = vunpack.c.l.b16 %v5774
        %v5840 = vunpack.c.l.b16 %v5775
        %v5841 = vunpack.c.l.b16 %v5776
        %v5842 = vunpack.c.l.b16 %v5777
        %v5843 = vunpack.c.l.b16 %v5778
        %v5844 = vpack.c.b16 %v5813, %v5812
        %v5845 = vpack.c.b16 %v5815, %v5814
        %v5846 = vpack.c.b16 %v5817, %v5816
        %v5847 = vpack.c.b16 %v5819, %v5818
        %v5848 = vpack.c.b16 %v5821, %v5820
        %v5849 = vpack.c.b16 %v5823, %v5822
        %v5850 = vpack.c.b16 %v5825, %v5824
        %v5851 = vpack.c.b16 %v5827, %v5826
        %v5852 = vpack.c.b16 %v5829, %v5828
        %v5853 = vpack.c.b16 %v5831, %v5830
        %v5854 = vpack.c.b16 %v5833, %v5832
        %v5855 = vpack.c.b16 %v5835, %v5834
        %v5856 = vpack.c.b16 %v5837, %v5836
        %v5857 = vpack.c.b16 %v5839, %v5838
        %v5858 = vpack.c.b16 %v5841, %v5840
        %v5859 = vpack.c.b16 %v5843, %v5842
        %5876 = vmatprep.subr.bf16.mxu0 0
        %5877 = vmatpush1.bf16.msra.mxu0 %v5844
        %5878 = vmatprep.subr.bf16.mxu0 0
        %5879 = vmatpush1.bf16.msra.mxu0 %v5845
        %5880 = vmatprep.subr.bf16.mxu0 0
        %5881 = vmatpush1.bf16.msra.mxu0 %v5846
        %5882 = vmatprep.subr.bf16.mxu0 0
        %5883 = vmatpush1.bf16.msra.mxu0 %v5847
        %5884 = vmatprep.subr.bf16.mxu0 0
        %5885 = vmatpush1.bf16.msra.mxu0 %v5848
        %5886 = vmatprep.subr.bf16.mxu0 0
        %5887 = vmatpush1.bf16.msra.mxu0 %v5849
        %5888 = vmatprep.subr.bf16.mxu0 0
        %5889 = vmatpush1.bf16.msra.mxu0 %v5850
        %5890 = vmatprep.subr.bf16.mxu0 0
        %5891 = vmatpush1.bf16.msra.mxu0 %v5851
        %5892 = vmatprep.subr.bf16.mxu0 0
        %5893 = vmatpush1.bf16.msra.mxu0 %v5852
        %5894 = vmatprep.subr.bf16.mxu0 0
        %5895 = vmatpush1.bf16.msra.mxu0 %v5853
        %5896 = vmatprep.subr.bf16.mxu0 0
        %5897 = vmatpush1.bf16.msra.mxu0 %v5854
        %5898 = vmatprep.subr.bf16.mxu0 0
        %5899 = vmatpush1.bf16.msra.mxu0 %v5855
        %5900 = vmatprep.subr.bf16.mxu0 0
        %5901 = vmatpush1.bf16.msra.mxu0 %v5856
        %5902 = vmatprep.subr.bf16.mxu0 0
        %5903 = vmatpush1.bf16.msra.mxu0 %v5857
        %5904 = vmatprep.subr.bf16.mxu0 0
        %5905 = vmatpush1.bf16.msra.mxu0 %v5858
        %5906 = vmatprep.subr.bf16.mxu0 0
        %5907 = vmatpush1.bf16.msra.mxu0 %v5859
        %5908 = vmatprep.mubr.bf16.mxu0 %v5746
        %5909 = vmatmul.mubr.bf16.gmra.mrb[0].mxu0 %v5745
        %v5910 = vpop.f32.mrb[0].mxu0
        %v5911 = vadd.f32 %v5779, %v5910
        %v5912 = vpop.f32.mrb[0].mxu0
        %v5913 = vpop.f32.mrb[0].mxu0
        %v5914 = vpop.f32.mrb[0].mxu0
        %5915 = vdwg.mxu0
        %v5916 = vmax.f32 %v5911, 0.0
        %v5917 = vpack.c.bf16 %v5916, %v5916
        %v5918 = vld [vmem:[#allocation8] sm:$0xf]
        %v5919 = vld [vmem:[#allocation8 + $0x4] sm:$0xf]
        %v5920 = vld [vmem:[#allocation8 + $0x8] sm:$0xf]
        %v5921 = vld [vmem:[#allocation8 + $0xc] sm:$0xf]
        %v5922 = vld [vmem:[#allocation8 + $0x10] sm:$0xf]
        %v5923 = vld [vmem:[#allocation8 + $0x14] sm:$0xf]
        %v5924 = vld [vmem:[#allocation8 + $0x18] sm:$0xf]
        %v5925 = vld [vmem:[#allocation8 + $0x1c] sm:$0xf]
        %v5926 = vld [vmem:[#allocation8 + $0x20] sm:$0xf]
        %v5927 = vld [vmem:[#allocation8 + $0x24] sm:$0xf]
        %v5928 = vld [vmem:[#allocation8 + $0x28] sm:$0xf]
        %v5929 = vld [vmem:[#allocation8 + $0x2c] sm:$0xf]
        %v5930 = vld [vmem:[#allocation8 + $0x30] sm:$0xf]
        %v5931 = vld [vmem:[#allocation8 + $0x34] sm:$0xf]
        %v5932 = vld [vmem:[#allocation8 + $0x38] sm:$0xf]
        %v5933 = vld [vmem:[#allocation8 + $0x3c] sm:$0xf]
        %v5934 = vld [vmem:[%s18] sm:$0x1]
        %v5951 = vunpack.c.l.b16 %v5918
        %v5952 = vunpack.c.l.b16 %v5919
        %v5953 = vunpack.c.l.b16 %v5920
        %v5954 = vunpack.c.l.b16 %v5921
        %v5955 = vunpack.c.l.b16 %v5922
        %v5956 = vunpack.c.l.b16 %v5923
        %v5957 = vunpack.c.l.b16 %v5924
        %v5958 = vunpack.c.l.b16 %v5925
        %v5959 = vunpack.c.l.b16 %v5926
        %v5960 = vunpack.c.l.b16 %v5927
        %v5961 = vunpack.c.l.b16 %v5928
        %v5962 = vunpack.c.l.b16 %v5929
        %v5963 = vunpack.c.l.b16 %v5930
        %v5964 = vunpack.c.l.b16 %v5931
        %v5965 = vunpack.c.l.b16 %v5932
        %v5966 = vunpack.c.l.b16 %v5933
        %v5967 = vpack.c.b16 %v5952, %v5951
        %v5968 = vpack.c.b16 %v5954, %v5953
        %v5969 = vpack.c.b16 %v5956, %v5955
        %v5970 = vpack.c.b16 %v5958, %v5957
        %v5971 = vpack.c.b16 %v5960, %v5959
        %v5972 = vpack.c.b16 %v5962, %v5961
        %v5973 = vpack.c.b16 %v5964, %v5963
        %v5974 = vpack.c.b16 %v5966, %v5965
        %5983 = vmatprep.subr.bf16.mxu0 0
        %5984 = vmatpush1.bf16.msra.mxu0 %v5967
        %5985 = vmatprep.subr.bf16.mxu0 0
        %5986 = vmatpush1.bf16.msra.mxu0 %v5968
        %5987 = vmatprep.subr.bf16.mxu0 0
        %5988 = vmatpush1.bf16.msra.mxu0 %v5969
        %5989 = vmatprep.subr.bf16.mxu0 0
        %5990 = vmatpush1.bf16.msra.mxu0 %v5970
        %5991 = vmatprep.subr.bf16.mxu0 0
        %5992 = vmatpush1.bf16.msra.mxu0 %v5971
        %5993 = vmatprep.subr.bf16.mxu0 0
        %5994 = vmatpush1.bf16.msra.mxu0 %v5972
        %5995 = vmatprep.subr.bf16.mxu0 0
        %5996 = vmatpush1.bf16.msra.mxu0 %v5973
        %5997 = vmatprep.subr.bf16.mxu0 0
        %5998 = vmatpush1.bf16.msra.mxu0 %v5974
        %5999 = vmatprep.subr.bf16.mxu0 0
        %6000 = vmatpush1.bf16.msra.mxu0 0
        %6001 = vmatprep.subr.bf16.mxu0 0
        %6002 = vmatpush1.bf16.msra.mxu0 0
        %6003 = vmatprep.subr.bf16.mxu0 0
        %6004 = vmatpush1.bf16.msra.mxu0 0
        %6005 = vmatprep.subr.bf16.mxu0 0
        %6006 = vmatpush1.bf16.msra.mxu0 0
        %6007 = vmatprep.subr.bf16.mxu0 0
        %6008 = vmatpush1.bf16.msra.mxu0 0
        %6009 = vmatprep.subr.bf16.mxu0 0
        %6010 = vmatpush1.bf16.msra.mxu0 0
        %6011 = vmatprep.subr.bf16.mxu0 0
        %6012 = vmatpush1.bf16.msra.mxu0 0
        %6013 = vmatprep.subr.bf16.mxu0 0
        %6014 = vmatpush1.bf16.msra.mxu0 0
        %6015 = vmatprep.mubr.bf16.mxu0 0
        %6016 = vmatmul.mubr.bf16.gmra.mrb[0].mxu0 %v5917
        %v6017 = vpop.f32.mrb[0].mxu0
        %v6018 = vadd.f32 %v5934, %v6017
        %v6019 = vpop.f32.mrb[0].mxu0
        %v6020 = vpop.f32.mrb[0].mxu0
        %v6021 = vpop.f32.mrb[0].mxu0
        %6022 = vdwg.mxu0
        %6023 = vst [vmem:[%s653] sm:$0x1] %v6018
        %s6024 = sand.u32 %s448, 1
        %s6025 = scalar_lea.sflag [#allocation4], %s6024
        %s6026 = sand.u32 %s448, 1
        %s6027 = scalar_lea.vmem [#allocation10], %s6026
        // Predicated region
        $region113: #{mnist_net_forward.1} parent=95 // pred_check
          %p6028 = pneg %p458
        $region114: #{mnist_net_forward.1} parent=95 // pred_check_branch
          %6030 = sbr.rel (%p6028) target = $region116
        $region115: #{mnist_net_forward.1} parent=95 // pred_region
          %s6032 = ssub.s32 16, 16
          %6033 = vsyncadd %s6025, %s6032
          %s6034 = smul.addr %s36, 16
          %s6035 = scalar_lea.hbm %s19, %s6034
          %s6037 = sshll.u32 %s6027, 4
          %s6038 = int_to_ptr.vmem [resolvable:$true] %s6037
          %6040 = dma.vmem_to_hbm [thread:$0]  %s6038, 16, %s6035, %s6025
        $region116: #{mnist_net_forward.1} parent=95 // pred_fallthru
          _
      $region96: #{mnist_net_forward.1} parent=5 // pred_fallthru
        _
      %p6041 = scmp.le.s32.totalorder 2, %s31
      // Predicated region
      $region117: #{mnist_net_forward.1} parent=5 // pred_check
        %p6042 = pneg %p6041
      $region118: #{mnist_net_forward.1} parent=5 // pred_check_branch
        %6044 = sbr.rel (%p6042) target = $region120
      $region119: #{mnist_net_forward.1} parent=5 // pred_region
        %s6045 = ssub.s32 %s31, 2
        // Predicated region
        $region121: #{mnist_net_forward.1} parent=119 // pred_check
          %p6046 = pneg %p464
        $region122: #{mnist_net_forward.1} parent=119 // pred_check_branch
          %6048 = sbr.rel (%p6046) target = $region124
        $region123: #{mnist_net_forward.1} parent=119 // pred_region
          %s6049 = sand.u32 %s449, 1
          %s6050 = scalar_lea.sflag [#allocation4], %s6049
          %s6051 = sand.u32 %s449, 1
          %s6052 = scalar_lea.vmem [#allocation10], %s6051
          %6053 = dma.done %s6050, 16
        $region124: #{mnist_net_forward.1} parent=119 // pred_fallthru
          _
      $region120: #{mnist_net_forward.1} parent=5 // pred_fallthru
        _
    $region6: #{mnist_net_forward.1} parent=1 // loop_footer
      %s35 = sadd.s32 1, %s31
    $region7: #{mnist_net_forward.1} parent=1 // loop_footer_branch
      %30 = sbr.rel target = $region3
    $region8: #{mnist_net_forward.1} parent=1 // loop_exit
      _
    %6054 = vsyncpa [#allocation3], 1
    %s6055 = scalar_lea.sflag [#allocation3], 1
    %6056 = vsyncpa %s6055, 1
    %6057 = vsyncpa [#allocation6], 1
    %6058 = vsyncpa [#allocation9], 1
    %6059 = vsyncpa [#allocation4], 1
    %s6060 = scalar_lea.sflag [#allocation4], 1
    %6061 = vsyncpa %s6060, 1

</llo_original>
